<compile_context>
chip_gen: v7x
topology: tpu7x:2x2x1
jax: 0.10.0
libtpu: 0.0.40
codegen_flags: <defaults>
</compile_context>

<pallas_src>
import jax
import jax.numpy as jnp
from jax import lax
from jax.experimental import pallas as pl
from jax.experimental.pallas import tpu as pltpu

BETA = 10.0
INV_BETA = 1.0 / BETA
THRESHOLD = 20.0  # torch.nn.Softplus default threshold (applied to beta*x)

# True layer widths of RosenbaumNN and lane-dense (128-aligned) padded widths used
# internally for the chained matmuls.
DIMS = (784, 170, 130, 100, 70, 47)
PAD_DIMS = (784, 256, 256, 128, 128, 128)

TM_MAX = 512  # largest batch tile; total VMEM at tm=512 is ~10 MiB (well under 32 MiB)


def _softplus(z):
    # torch.nn.Softplus(beta=10): (1/beta) * log1p(exp(beta*z)); linear above threshold.
    bz = BETA * z
    safe = jnp.minimum(bz, THRESHOLD)  # avoid overflow in the untaken branch
    return jnp.where(bz > THRESHOLD, z, jnp.log1p(jnp.exp(safe)) * INV_BETA)


def _dot_split(x_f32, wh_ref, wl_ref):
    """f32-accurate matmul from 3 bf16 MXU passes with f32 accumulation."""
    xh = x_f32.astype(jnp.bfloat16)
    xl = (x_f32 - xh.astype(jnp.float32)).astype(jnp.bfloat16)
    wh = wh_ref[...]
    wl = wl_ref[...]
    acc = jnp.dot(xh, wh, preferred_element_type=jnp.float32)
    acc = acc + jnp.dot(xl, wh, preferred_element_type=jnp.float32)
    acc = acc + jnp.dot(xh, wl, preferred_element_type=jnp.float32)
    return acc


def rosenbaum_kernel(x_ref,
                     w1h, w1l, w2h, w2l, w3h, w3l, w4h, w4l, w5h, w5l,
                     y1_ref, y2_ref, y3_ref, y4_ref, y5_ref):
    # One batch tile: 5 chained matmuls on lane-dense padded widths; Softplus on VPU/EUP.
    # Outputs are stored at the TRUE layer widths (padded lanes never leave the kernel).
    y0 = x_ref[...]
    y1 = _softplus(_dot_split(y0, w1h, w1l))
    y1_ref[...] = y1[:, :y1_ref.shape[1]]
    y2 = _softplus(_dot_split(y1, w2h, w2l))
    y2_ref[...] = y2[:, :y2_ref.shape[1]]
    y3 = _softplus(_dot_split(y2, w3h, w3l))
    y3_ref[...] = y3[:, :y3_ref.shape[1]]
    y4 = _softplus(_dot_split(y3, w4h, w4l))
    y4_ref[...] = y4[:, :y4_ref.shape[1]]
    y5 = _dot_split(y4, w5h, w5l)
    y5_ref[...] = y5[:, :y5_ref.shape[1]]


def prepare_weights(weights):
    """One-time glue outside the jitted step:
    PyTorch (out,in) f32 -> transposed, zero-padded, split-bf16 (hi, lo) pairs."""
    out = []
    for l, w in enumerate(weights):
        in_p, out_p = PAD_DIMS[l], PAD_DIMS[l + 1]
        wt = jnp.asarray(w, jnp.float32).T  # (in, out)
        wt = jnp.pad(wt, ((0, in_p - wt.shape[0]), (0, out_p - wt.shape[1])))
        hi = wt.astype(jnp.bfloat16)
        lo = (wt - hi.astype(jnp.float32)).astype(jnp.bfloat16)
        out.extend([hi, lo])
    return tuple(out)


def _choose_tile(B):
    """Pick a batch tile (multiple of 8).  >=2 (even) tiles for moderate/large batches so
    the DMA pipeline has >=2 steps and v7x's two TensorCores both get work."""
    Bq = ((B + 7) // 8) * 8
    if Bq < 64:
        return Bq  # tiny batch: one tile; splitting would only add per-step overhead
    n = max(2, -(-Bq // TM_MAX))
    if n % 2:
        n += 1  # even tile count balances the two v7x TensorCores
    tm = -(-Bq // n)
    return ((tm + 7) // 8) * 8


@jax.jit
def rosenbaum_forward(x, split_weights):
    """x: (B, 1, 784) float32.  split_weights: output of prepare_weights()."""
    y0 = jnp.squeeze(x, axis=1)  # glue: x.squeeze(1)
    B = y0.shape[0]
    tm = _choose_tile(B)
    n_tiles = pl.cdiv(B, tm)  # partial last block is masked by Pallas; no jnp.pad of x

    in_specs = [pl.BlockSpec((tm, DIMS[0]), lambda i: (i, 0))]
    for l in range(5):
        # Constant index_map -> weight blocks fetched once, VMEM-resident across tiles.
        w_spec = pl.BlockSpec((PAD_DIMS[l], PAD_DIMS[l + 1]), lambda i: (0, 0))
        in_specs += [w_spec, w_spec]
    out_specs = tuple(
        pl.BlockSpec((tm, DIMS[l + 1]), lambda i: (i, 0)) for l in range(5)
    )
    out_shape = tuple(
        jax.ShapeDtypeStruct((B, DIMS[l + 1]), jnp.float32) for l in range(5)
    )

    w_elems = sum(PAD_DIMS[l] * PAD_DIMS[l + 1] for l in range(5))
    flops = 3 * 2 * B * w_elems                    # 3 bf16 MXU passes per layer
    transcendentals = 2 * B * sum(PAD_DIMS[1:5])   # exp AND log1p per softplus element
    bytes_accessed = 4 * B * DIMS[0] + 4 * w_elems + 4 * B * sum(DIMS[1:])

    outs = pl.pallas_call(
        rosenbaum_kernel,
        out_shape=out_shape,
        grid_spec=pl.GridSpec(
            grid=(n_tiles,),
            in_specs=in_specs,
            out_specs=out_specs,
        ),
        compiler_params=pltpu.CompilerParams(
            dimension_semantics=("parallel",),
            vmem_limit_bytes=32 * 1024 * 1024,
        ),
        cost_estimate=pl.CostEstimate(
            flops=flops,
            transcendentals=transcendentals,
            bytes_accessed=bytes_accessed,
        ),
    )(y0, *split_weights)

    y1, y2, y3, y4, y5 = outs
    return (y0, y1, y2, y3, y4), y5


def init_weights(key):
    """Deterministic init mimicking nn.Linear's U(-1/sqrt(fan_in), 1/sqrt(fan_in))."""
    ws = []
    for l in range(5):
        fan_in, fan_out = DIMS[l], DIMS[l + 1]
        key, sub = jax.random.split(key)
        bound = 1.0 / jnp.sqrt(jnp.float32(fan_in))
        # PyTorch Linear weight layout: (out_features, in_features)
        ws.append(jax.random.uniform(sub, (fan_out, fan_in), jnp.float32,
                                     minval=-bound, maxval=bound))
    return ws


def reference_forward(x, weights):
    """Pure-JAX reference matching the PyTorch forward (exact f32 matmuls)."""
    hp = lax.Precision.HIGHEST
    y0 = jnp.squeeze(x, axis=1)
    y1 = _softplus(jnp.dot(y0, weights[0].T, precision=hp))
    y2 = _softplus(jnp.dot(y1, weights[1].T, precision=hp))
    y3 = _softplus(jnp.dot(y2, weights[2].T, precision=hp))
    y4 = _softplus(jnp.dot(y3, weights[3].T, precision=hp))
    y5 = jnp.dot(y4, weights[4].T, precision=hp)
    return (y0, y1, y2, y3, y4), y5


if __name__ == "__main__":
    key = jax.random.PRNGKey(0)
    key, kx = jax.random.split(key)
    B = 8
    x = jax.random.normal(kx, (B, 1, 784), dtype=jnp.float32)
    weights = init_weights(key)

    # TODO(synk): the module's feedback1..feedback5 layers are unused in forward(); not ported.
    split_weights = prepare_weights(weights)  # one-time, outside the jitted step

    (y0, y1, y2, y3, y4), y5 = rosenbaum_forward(x, split_weights)
    jax.block_until_ready(y5)

    # sanity check against exact-f32 pure-JAX reference
    (r0, r1, r2, r3, r4), r5 = reference_forward(x, weights)
    for got, ref in ((y0, r0), (y1, r1), (y2, r2), (y3, r3), (y4, r4), (y5, r5)):
        assert got.shape == ref.shape and got.dtype == ref.dtype
        assert jnp.max(jnp.abs(got - ref)) < 1e-4, jnp.max(jnp.abs(got - ref))

    print("KERNEL_OK")
</pallas_src>

<mosaic_0001>
module attributes {stable_mosaic.version = 11 : i64} {
  func.func @rosenbaum_kernel(%arg0: i32, %arg1: memref<8x784xf32, #tpu.memory_space<vmem>>, %arg2: memref<784x256xbf16, #tpu.memory_space<vmem>>, %arg3: memref<784x256xbf16, #tpu.memory_space<vmem>>, %arg4: memref<256x256xbf16, #tpu.memory_space<vmem>>, %arg5: memref<256x256xbf16, #tpu.memory_space<vmem>>, %arg6: memref<256x128xbf16, #tpu.memory_space<vmem>>, %arg7: memref<256x128xbf16, #tpu.memory_space<vmem>>, %arg8: memref<128x128xbf16, #tpu.memory_space<vmem>>, %arg9: memref<128x128xbf16, #tpu.memory_space<vmem>>, %arg10: memref<128x128xbf16, #tpu.memory_space<vmem>>, %arg11: memref<128x128xbf16, #tpu.memory_space<vmem>>, %arg12: memref<8x170xf32, #tpu.memory_space<vmem>>, %arg13: memref<8x130xf32, #tpu.memory_space<vmem>>, %arg14: memref<8x100xf32, #tpu.memory_space<vmem>>, %arg15: memref<8x70xf32, #tpu.memory_space<vmem>>, %arg16: memref<8x47xf32, #tpu.memory_space<vmem>>) attributes {dimension_semantics = [#tpu.dimension_semantics<parallel>], iteration_bounds = array<i64: 1>, scalar_prefetch = 0 : i64, scratch_operands = 0 : i64, tpu.core_type = #tpu.core_type<tc>, window_params = [{transform_indices = @transform_0, window_bounds = array<i64: 8, 784>}, {pipeline_mode = #tpu.pipeline_mode<synchronous>, transform_indices = @transform_1, window_bounds = array<i64: 784, 256>}, {pipeline_mode = #tpu.pipeline_mode<synchronous>, transform_indices = @transform_2, window_bounds = array<i64: 784, 256>}, {pipeline_mode = #tpu.pipeline_mode<synchronous>, transform_indices = @transform_3, window_bounds = array<i64: 256, 256>}, {pipeline_mode = #tpu.pipeline_mode<synchronous>, transform_indices = @transform_4, window_bounds = array<i64: 256, 256>}, {pipeline_mode = #tpu.pipeline_mode<synchronous>, transform_indices = @transform_5, window_bounds = array<i64: 256, 128>}, {pipeline_mode = #tpu.pipeline_mode<synchronous>, transform_indices = @transform_6, window_bounds = array<i64: 256, 128>}, {pipeline_mode = #tpu.pipeline_mode<synchronous>, transform_indices = @transform_7, window_bounds = array<i64: 128, 128>}, {pipeline_mode = #tpu.pipeline_mode<synchronous>, transform_indices = @transform_8, window_bounds = array<i64: 128, 128>}, {pipeline_mode = #tpu.pipeline_mode<synchronous>, transform_indices = @transform_9, window_bounds = array<i64: 128, 128>}, {pipeline_mode = #tpu.pipeline_mode<synchronous>, transform_indices = @transform_10, window_bounds = array<i64: 128, 128>}, {transform_indices = @transform_11, window_bounds = array<i64: 8, 170>}, {transform_indices = @transform_12, window_bounds = array<i64: 8, 130>}, {transform_indices = @transform_13, window_bounds = array<i64: 8, 100>}, {transform_indices = @transform_14, window_bounds = array<i64: 8, 70>}, {transform_indices = @transform_15, window_bounds = array<i64: 8, 47>}]} {
    %c0 = arith.constant 0 : index
    %c0_0 = arith.constant 0 : index
    %0 = vector.load %arg1[%c0, %c0_0] : memref<8x784xf32, #tpu.memory_space<vmem>>, vector<8x784xf32>
    %1 = arith.truncf %0 : vector<8x784xf32> to vector<8x784xbf16>
    %2 = arith.extf %1 : vector<8x784xbf16> to vector<8x784xf32>
    %3 = arith.subf %0, %2 : vector<8x784xf32>
    %4 = arith.truncf %3 : vector<8x784xf32> to vector<8x784xbf16>
    %c0_1 = arith.constant 0 : index
    %c0_2 = arith.constant 0 : index
    %5 = vector.load %arg2[%c0_1, %c0_2] : memref<784x256xbf16, #tpu.memory_space<vmem>>, vector<784x256xbf16>
    %c0_3 = arith.constant 0 : index
    %c0_4 = arith.constant 0 : index
    %6 = vector.load %arg3[%c0_3, %c0_4] : memref<784x256xbf16, #tpu.memory_space<vmem>>, vector<784x256xbf16>
    %cst = arith.constant dense<0.000000e+00> : vector<8x256xf32>
    %7 = tpu.matmul %1, %5, %cst {dimension_numbers = #tpu.dot_dimension_numbers<[1], [0], [0], [1], [0, 0, 1, 1], [], []>} : vector<8x784xbf16>, vector<784x256xbf16>, vector<8x256xf32> -> vector<8x256xf32>
    %cst_5 = arith.constant dense<0.000000e+00> : vector<8x256xf32>
    %8 = tpu.matmul %4, %5, %cst_5 {dimension_numbers = #tpu.dot_dimension_numbers<[1], [0], [0], [1], [0, 0, 1, 1], [], []>} : vector<8x784xbf16>, vector<784x256xbf16>, vector<8x256xf32> -> vector<8x256xf32>
    %9 = arith.addf %7, %8 : vector<8x256xf32>
    %cst_6 = arith.constant dense<0.000000e+00> : vector<8x256xf32>
    %10 = tpu.matmul %1, %6, %cst_6 {dimension_numbers = #tpu.dot_dimension_numbers<[1], [0], [0], [1], [0, 0, 1, 1], [], []>} : vector<8x784xbf16>, vector<784x256xbf16>, vector<8x256xf32> -> vector<8x256xf32>
    %11 = arith.addf %9, %10 : vector<8x256xf32>
    %cst_7 = arith.constant 1.000000e+01 : f32
    %12 = vector.broadcast %cst_7 : f32 to vector<8x256xf32>
    %13 = arith.mulf %12, %11 : vector<8x256xf32>
    %cst_8 = arith.constant 2.000000e+01 : f32
    %14 = vector.broadcast %cst_8 : f32 to vector<8x256xf32>
    %15 = arith.minimumf %13, %14 : vector<8x256xf32>
    %cst_9 = arith.constant 2.000000e+01 : f32
    %16 = vector.broadcast %cst_9 : f32 to vector<8x256xf32>
    %17 = arith.cmpf ogt, %13, %16 : vector<8x256xf32>
    %18 = math.exp %15 : vector<8x256xf32>
    %19 = math.log1p %18 : vector<8x256xf32>
    %cst_10 = arith.constant 1.000000e-01 : f32
    %20 = vector.broadcast %cst_10 : f32 to vector<8x256xf32>
    %21 = arith.mulf %19, %20 : vector<8x256xf32>
    %22 = arith.select %17, %11, %21 : vector<8x256xi1>, vector<8x256xf32>
    %23 = vector.extract_strided_slice %22 {offsets = [0, 0], sizes = [8, 170], strides = [1, 1]} : vector<8x256xf32> to vector<8x170xf32>
    %c0_11 = arith.constant 0 : index
    %c0_12 = arith.constant 0 : index
    %24 = vector.load %arg12[%c0_11, %c0_12] : memref<8x170xf32, #tpu.memory_space<vmem>>, vector<8x170xf32>
    tpu.vector_store %arg12[%c0_11, %c0_12], %23 {strides = array<i32>} : memref<8x170xf32, #tpu.memory_space<vmem>>, vector<8x170xf32>,
    %25 = arith.truncf %22 : vector<8x256xf32> to vector<8x256xbf16>
    %26 = arith.extf %25 : vector<8x256xbf16> to vector<8x256xf32>
    %27 = arith.subf %22, %26 : vector<8x256xf32>
    %28 = arith.truncf %27 : vector<8x256xf32> to vector<8x256xbf16>
    %c0_13 = arith.constant 0 : index
    %c0_14 = arith.constant 0 : index
    %29 = vector.load %arg4[%c0_13, %c0_14] : memref<256x256xbf16, #tpu.memory_space<vmem>>, vector<256x256xbf16>
    %c0_15 = arith.constant 0 : index
    %c0_16 = arith.constant 0 : index
    %30 = vector.load %arg5[%c0_15, %c0_16] : memref<256x256xbf16, #tpu.memory_space<vmem>>, vector<256x256xbf16>
    %cst_17 = arith.constant dense<0.000000e+00> : vector<8x256xf32>
    %31 = tpu.matmul %25, %29, %cst_17 {dimension_numbers = #tpu.dot_dimension_numbers<[1], [0], [0], [1], [0, 0, 1, 1], [], []>} : vector<8x256xbf16>, vector<256x256xbf16>, vector<8x256xf32> -> vector<8x256xf32>
    %cst_18 = arith.constant dense<0.000000e+00> : vector<8x256xf32>
    %32 = tpu.matmul %28, %29, %cst_18 {dimension_numbers = #tpu.dot_dimension_numbers<[1], [0], [0], [1], [0, 0, 1, 1], [], []>} : vector<8x256xbf16>, vector<256x256xbf16>, vector<8x256xf32> -> vector<8x256xf32>
    %33 = arith.addf %31, %32 : vector<8x256xf32>
    %cst_19 = arith.constant dense<0.000000e+00> : vector<8x256xf32>
    %34 = tpu.matmul %25, %30, %cst_19 {dimension_numbers = #tpu.dot_dimension_numbers<[1], [0], [0], [1], [0, 0, 1, 1], [], []>} : vector<8x256xbf16>, vector<256x256xbf16>, vector<8x256xf32> -> vector<8x256xf32>
    %35 = arith.addf %33, %34 : vector<8x256xf32>
    %cst_20 = arith.constant 1.000000e+01 : f32
    %36 = vector.broadcast %cst_20 : f32 to vector<8x256xf32>
    %37 = arith.mulf %36, %35 : vector<8x256xf32>
    %cst_21 = arith.constant 2.000000e+01 : f32
    %38 = vector.broadcast %cst_21 : f32 to vector<8x256xf32>
    %39 = arith.minimumf %37, %38 : vector<8x256xf32>
    %cst_22 = arith.constant 2.000000e+01 : f32
    %40 = vector.broadcast %cst_22 : f32 to vector<8x256xf32>
    %41 = arith.cmpf ogt, %37, %40 : vector<8x256xf32>
    %42 = math.exp %39 : vector<8x256xf32>
    %43 = math.log1p %42 : vector<8x256xf32>
    %cst_23 = arith.constant 1.000000e-01 : f32
    %44 = vector.broadcast %cst_23 : f32 to vector<8x256xf32>
    %45 = arith.mulf %43, %44 : vector<8x256xf32>
    %46 = arith.select %41, %35, %45 : vector<8x256xi1>, vector<8x256xf32>
    %47 = vector.extract_strided_slice %46 {offsets = [0, 0], sizes = [8, 130], strides = [1, 1]} : vector<8x256xf32> to vector<8x130xf32>
    %c0_24 = arith.constant 0 : index
    %c0_25 = arith.constant 0 : index
    %48 = vector.load %arg13[%c0_24, %c0_25] : memref<8x130xf32, #tpu.memory_space<vmem>>, vector<8x130xf32>
    tpu.vector_store %arg13[%c0_24, %c0_25], %47 {strides = array<i32>} : memref<8x130xf32, #tpu.memory_space<vmem>>, vector<8x130xf32>,
    %49 = arith.truncf %46 : vector<8x256xf32> to vector<8x256xbf16>
    %50 = arith.extf %49 : vector<8x256xbf16> to vector<8x256xf32>
    %51 = arith.subf %46, %50 : vector<8x256xf32>
    %52 = arith.truncf %51 : vector<8x256xf32> to vector<8x256xbf16>
    %c0_26 = arith.constant 0 : index
    %c0_27 = arith.constant 0 : index
    %53 = vector.load %arg6[%c0_26, %c0_27] : memref<256x128xbf16, #tpu.memory_space<vmem>>, vector<256x128xbf16>
    %c0_28 = arith.constant 0 : index
    %c0_29 = arith.constant 0 : index
    %54 = vector.load %arg7[%c0_28, %c0_29] : memref<256x128xbf16, #tpu.memory_space<vmem>>, vector<256x128xbf16>
    %cst_30 = arith.constant dense<0.000000e+00> : vector<8x128xf32>
    %55 = tpu.matmul %49, %53, %cst_30 {dimension_numbers = #tpu.dot_dimension_numbers<[1], [0], [0], [1], [0, 0, 1, 1], [], []>} : vector<8x256xbf16>, vector<256x128xbf16>, vector<8x128xf32> -> vector<8x128xf32>
    %cst_31 = arith.constant dense<0.000000e+00> : vector<8x128xf32>
    %56 = tpu.matmul %52, %53, %cst_31 {dimension_numbers = #tpu.dot_dimension_numbers<[1], [0], [0], [1], [0, 0, 1, 1], [], []>} : vector<8x256xbf16>, vector<256x128xbf16>, vector<8x128xf32> -> vector<8x128xf32>
    %57 = arith.addf %55, %56 : vector<8x128xf32>
    %cst_32 = arith.constant dense<0.000000e+00> : vector<8x128xf32>
    %58 = tpu.matmul %49, %54, %cst_32 {dimension_numbers = #tpu.dot_dimension_numbers<[1], [0], [0], [1], [0, 0, 1, 1], [], []>} : vector<8x256xbf16>, vector<256x128xbf16>, vector<8x128xf32> -> vector<8x128xf32>
    %59 = arith.addf %57, %58 : vector<8x128xf32>
    %cst_33 = arith.constant 1.000000e+01 : f32
    %60 = vector.broadcast %cst_33 : f32 to vector<8x128xf32>
    %61 = arith.mulf %60, %59 : vector<8x128xf32>
    %cst_34 = arith.constant 2.000000e+01 : f32
    %62 = vector.broadcast %cst_34 : f32 to vector<8x128xf32>
    %63 = arith.minimumf %61, %62 : vector<8x128xf32>
    %cst_35 = arith.constant 2.000000e+01 : f32
    %64 = vector.broadcast %cst_35 : f32 to vector<8x128xf32>
    %65 = arith.cmpf ogt, %61, %64 : vector<8x128xf32>
    %66 = math.exp %63 : vector<8x128xf32>
    %67 = math.log1p %66 : vector<8x128xf32>
    %cst_36 = arith.constant 1.000000e-01 : f32
    %68 = vector.broadcast %cst_36 : f32 to vector<8x128xf32>
    %69 = arith.mulf %67, %68 : vector<8x128xf32>
    %70 = arith.select %65, %59, %69 : vector<8x128xi1>, vector<8x128xf32>
    %71 = vector.extract_strided_slice %70 {offsets = [0, 0], sizes = [8, 100], strides = [1, 1]} : vector<8x128xf32> to vector<8x100xf32>
    %c0_37 = arith.constant 0 : index
    %c0_38 = arith.constant 0 : index
    %72 = vector.load %arg14[%c0_37, %c0_38] : memref<8x100xf32, #tpu.memory_space<vmem>>, vector<8x100xf32>
    tpu.vector_store %arg14[%c0_37, %c0_38], %71 {strides = array<i32>} : memref<8x100xf32, #tpu.memory_space<vmem>>, vector<8x100xf32>,
    %73 = arith.truncf %70 : vector<8x128xf32> to vector<8x128xbf16>
    %74 = arith.extf %73 : vector<8x128xbf16> to vector<8x128xf32>
    %75 = arith.subf %70, %74 : vector<8x128xf32>
    %76 = arith.truncf %75 : vector<8x128xf32> to vector<8x128xbf16>
    %c0_39 = arith.constant 0 : index
    %c0_40 = arith.constant 0 : index
    %77 = vector.load %arg8[%c0_39, %c0_40] : memref<128x128xbf16, #tpu.memory_space<vmem>>, vector<128x128xbf16>
    %c0_41 = arith.constant 0 : index
    %c0_42 = arith.constant 0 : index
    %78 = vector.load %arg9[%c0_41, %c0_42] : memref<128x128xbf16, #tpu.memory_space<vmem>>, vector<128x128xbf16>
    %cst_43 = arith.constant dense<0.000000e+00> : vector<8x128xf32>
    %79 = tpu.matmul %73, %77, %cst_43 {dimension_numbers = #tpu.dot_dimension_numbers<[1], [0], [0], [1], [0, 0, 1, 1], [], []>} : vector<8x128xbf16>, vector<128x128xbf16>, vector<8x128xf32> -> vector<8x128xf32>
    %cst_44 = arith.constant dense<0.000000e+00> : vector<8x128xf32>
    %80 = tpu.matmul %76, %77, %cst_44 {dimension_numbers = #tpu.dot_dimension_numbers<[1], [0], [0], [1], [0, 0, 1, 1], [], []>} : vector<8x128xbf16>, vector<128x128xbf16>, vector<8x128xf32> -> vector<8x128xf32>
    %81 = arith.addf %79, %80 : vector<8x128xf32>
    %cst_45 = arith.constant dense<0.000000e+00> : vector<8x128xf32>
    %82 = tpu.matmul %73, %78, %cst_45 {dimension_numbers = #tpu.dot_dimension_numbers<[1], [0], [0], [1], [0, 0, 1, 1], [], []>} : vector<8x128xbf16>, vector<128x128xbf16>, vector<8x128xf32> -> vector<8x128xf32>
    %83 = arith.addf %81, %82 : vector<8x128xf32>
    %cst_46 = arith.constant 1.000000e+01 : f32
    %84 = vector.broadcast %cst_46 : f32 to vector<8x128xf32>
    %85 = arith.mulf %84, %83 : vector<8x128xf32>
    %cst_47 = arith.constant 2.000000e+01 : f32
    %86 = vector.broadcast %cst_47 : f32 to vector<8x128xf32>
    %87 = arith.minimumf %85, %86 : vector<8x128xf32>
    %cst_48 = arith.constant 2.000000e+01 : f32
    %88 = vector.broadcast %cst_48 : f32 to vector<8x128xf32>
    %89 = arith.cmpf ogt, %85, %88 : vector<8x128xf32>
    %90 = math.exp %87 : vector<8x128xf32>
    %91 = math.log1p %90 : vector<8x128xf32>
    %cst_49 = arith.constant 1.000000e-01 : f32
    %92 = vector.broadcast %cst_49 : f32 to vector<8x128xf32>
    %93 = arith.mulf %91, %92 : vector<8x128xf32>
    %94 = arith.select %89, %83, %93 : vector<8x128xi1>, vector<8x128xf32>
    %95 = vector.extract_strided_slice %94 {offsets = [0, 0], sizes = [8, 70], strides = [1, 1]} : vector<8x128xf32> to vector<8x70xf32>
    %c0_50 = arith.constant 0 : index
    %c0_51 = arith.constant 0 : index
    %96 = vector.load %arg15[%c0_50, %c0_51] : memref<8x70xf32, #tpu.memory_space<vmem>>, vector<8x70xf32>
    tpu.vector_store %arg15[%c0_50, %c0_51], %95 {strides = array<i32>} : memref<8x70xf32, #tpu.memory_space<vmem>>, vector<8x70xf32>,
    %97 = arith.truncf %94 : vector<8x128xf32> to vector<8x128xbf16>
    %98 = arith.extf %97 : vector<8x128xbf16> to vector<8x128xf32>
    %99 = arith.subf %94, %98 : vector<8x128xf32>
    %100 = arith.truncf %99 : vector<8x128xf32> to vector<8x128xbf16>
    %c0_52 = arith.constant 0 : index
    %c0_53 = arith.constant 0 : index
    %101 = vector.load %arg10[%c0_52, %c0_53] : memref<128x128xbf16, #tpu.memory_space<vmem>>, vector<128x128xbf16>
    %c0_54 = arith.constant 0 : index
    %c0_55 = arith.constant 0 : index
    %102 = vector.load %arg11[%c0_54, %c0_55] : memref<128x128xbf16, #tpu.memory_space<vmem>>, vector<128x128xbf16>
    %cst_56 = arith.constant dense<0.000000e+00> : vector<8x128xf32>
    %103 = tpu.matmul %97, %101, %cst_56 {dimension_numbers = #tpu.dot_dimension_numbers<[1], [0], [0], [1], [0, 0, 1, 1], [], []>} : vector<8x128xbf16>, vector<128x128xbf16>, vector<8x128xf32> -> vector<8x128xf32>
    %cst_57 = arith.constant dense<0.000000e+00> : vector<8x128xf32>
    %104 = tpu.matmul %100, %101, %cst_57 {dimension_numbers = #tpu.dot_dimension_numbers<[1], [0], [0], [1], [0, 0, 1, 1], [], []>} : vector<8x128xbf16>, vector<128x128xbf16>, vector<8x128xf32> -> vector<8x128xf32>
    %105 = arith.addf %103, %104 : vector<8x128xf32>
    %cst_58 = arith.constant dense<0.000000e+00> : vector<8x128xf32>
    %106 = tpu.matmul %97, %102, %cst_58 {dimension_numbers = #tpu.dot_dimension_numbers<[1], [0], [0], [1], [0, 0, 1, 1], [], []>} : vector<8x128xbf16>, vector<128x128xbf16>, vector<8x128xf32> -> vector<8x128xf32>
    %107 = arith.addf %105, %106 : vector<8x128xf32>
    %108 = vector.extract_strided_slice %107 {offsets = [0, 0], sizes = [8, 47], strides = [1, 1]} : vector<8x128xf32> to vector<8x47xf32>
    %c0_59 = arith.constant 0 : index
    %c0_60 = arith.constant 0 : index
    %109 = vector.load %arg16[%c0_59, %c0_60] : memref<8x47xf32, #tpu.memory_space<vmem>>, vector<8x47xf32>
    tpu.vector_store %arg16[%c0_59, %c0_60], %108 {strides = array<i32>} : memref<8x47xf32, #tpu.memory_space<vmem>>, vector<8x47xf32>,
    return
  }
  func.func @transform_0(%arg0: i32) -> (i32, i32) {
    %c0_i32 = arith.constant 0 : i32
    %c0_i32_0 = arith.constant 0 : i32
    return %arg0, %c0_i32 : i32, i32
  }
  func.func @transform_1(%arg0: i32) -> (i32, i32) {
    %c0_i32 = arith.constant 0 : i32
    %c0_i32_0 = arith.constant 0 : i32
    %c0_i32_1 = arith.constant 0 : i32
    return %c0_i32, %c0_i32_0 : i32, i32
  }
  func.func @transform_2(%arg0: i32) -> (i32, i32) {
    %c0_i32 = arith.constant 0 : i32
    %c0_i32_0 = arith.constant 0 : i32
    %c0_i32_1 = arith.constant 0 : i32
    return %c0_i32, %c0_i32_0 : i32, i32
  }
  func.func @transform_3(%arg0: i32) -> (i32, i32) {
    %c0_i32 = arith.constant 0 : i32
    %c0_i32_0 = arith.constant 0 : i32
    %c0_i32_1 = arith.constant 0 : i32
    return %c0_i32, %c0_i32_0 : i32, i32
  }
  func.func @transform_4(%arg0: i32) -> (i32, i32) {
    %c0_i32 = arith.constant 0 : i32
    %c0_i32_0 = arith.constant 0 : i32
    %c0_i32_1 = arith.constant 0 : i32
    return %c0_i32, %c0_i32_0 : i32, i32
  }
  func.func @transform_5(%arg0: i32) -> (i32, i32) {
    %c0_i32 = arith.constant 0 : i32
    %c0_i32_0 = arith.constant 0 : i32
    %c0_i32_1 = arith.constant 0 : i32
    return %c0_i32, %c0_i32_0 : i32, i32
  }
  func.func @transform_6(%arg0: i32) -> (i32, i32) {
    %c0_i32 = arith.constant 0 : i32
    %c0_i32_0 = arith.constant 0 : i32
    %c0_i32_1 = arith.constant 0 : i32
    return %c0_i32, %c0_i32_0 : i32, i32
  }
  func.func @transform_7(%arg0: i32) -> (i32, i32) {
    %c0_i32 = arith.constant 0 : i32
    %c0_i32_0 = arith.constant 0 : i32
    %c0_i32_1 = arith.constant 0 : i32
    return %c0_i32, %c0_i32_0 : i32, i32
  }
  func.func @transform_8(%arg0: i32) -> (i32, i32) {
    %c0_i32 = arith.constant 0 : i32
    %c0_i32_0 = arith.constant 0 : i32
    %c0_i32_1 = arith.constant 0 : i32
    return %c0_i32, %c0_i32_0 : i32, i32
  }
  func.func @transform_9(%arg0: i32) -> (i32, i32) {
    %c0_i32 = arith.constant 0 : i32
    %c0_i32_0 = arith.constant 0 : i32
    %c0_i32_1 = arith.constant 0 : i32
    return %c0_i32, %c0_i32_0 : i32, i32
  }
  func.func @transform_10(%arg0: i32) -> (i32, i32) {
    %c0_i32 = arith.constant 0 : i32
    %c0_i32_0 = arith.constant 0 : i32
    %c0_i32_1 = arith.constant 0 : i32
    return %c0_i32, %c0_i32_0 : i32, i32
  }
  func.func @transform_11(%arg0: i32) -> (i32, i32) {
    %c0_i32 = arith.constant 0 : i32
    %c0_i32_0 = arith.constant 0 : i32
    return %arg0, %c0_i32 : i32, i32
  }
  func.func @transform_12(%arg0: i32) -> (i32, i32) {
    %c0_i32 = arith.constant 0 : i32
    %c0_i32_0 = arith.constant 0 : i32
    return %arg0, %c0_i32 : i32, i32
  }
  func.func @transform_13(%arg0: i32) -> (i32, i32) {
    %c0_i32 = arith.constant 0 : i32
    %c0_i32_0 = arith.constant 0 : i32
    return %arg0, %c0_i32 : i32, i32
  }
  func.func @transform_14(%arg0: i32) -> (i32, i32) {
    %c0_i32 = arith.constant 0 : i32
    %c0_i32_0 = arith.constant 0 : i32
    return %arg0, %c0_i32 : i32, i32
  }
  func.func @transform_15(%arg0: i32) -> (i32, i32) {
    %c0_i32 = arith.constant 0 : i32
    %c0_i32_0 = arith.constant 0 : i32
    return %arg0, %c0_i32 : i32, i32
  }
}

</mosaic_0001>

<llo_original>
// kernel: rosenbaum_forward.1
$region0: #{rosenbaum_forward.1}
  #allocation0 [shape = 'u32[]', space=smem, size = 0x4, offset = 0x4, fixed_abs, tag = 'smem constant byte address 0x4 - core index']
  #allocation1 [shape = 'u32[144,128]{1,0:T(1,128)}', space=vmem, size = 0x12000, scoped, tag = 'internal scratch']
  %s0 = inlined_call_operand.vmem [shape: f32[8,784], index: 0, kind: input, shape index: {}]
  %s1 = inlined_call_operand.hbm [shape: bf16[784,256], index: 1, kind: input, shape index: {}]
  %s2 = inlined_call_operand.hbm [shape: bf16[784,256], index: 2, kind: input, shape index: {}]
  %s3 = inlined_call_operand.hbm [shape: bf16[256,256], index: 3, kind: input, shape index: {}]
  %s4 = inlined_call_operand.hbm [shape: bf16[256,256], index: 4, kind: input, shape index: {}]
  %s5 = inlined_call_operand.vmem [shape: bf16[256,128], index: 5, kind: input, shape index: {}]
  %s6 = inlined_call_operand.hbm [shape: bf16[256,128], index: 6, kind: input, shape index: {}]
  %s7 = inlined_call_operand.hbm [shape: bf16[128,128], index: 7, kind: input, shape index: {}]
  %s8 = inlined_call_operand.hbm [shape: bf16[128,128], index: 8, kind: input, shape index: {}]
  %s9 = inlined_call_operand.hbm [shape: bf16[128,128], index: 9, kind: input, shape index: {}]
  %s10 = inlined_call_operand.hbm [shape: bf16[128,128], index: 10, kind: input, shape index: {}]
  %s11 = inlined_call_operand.hbm [shape: f32[8,170], index: 11, kind: output, shape index: {0}]
  %s12 = inlined_call_operand.hbm [shape: f32[8,130], index: 12, kind: output, shape index: {1}]
  %s13 = inlined_call_operand.hbm [shape: f32[8,100], index: 13, kind: output, shape index: {2}]
  %s14 = inlined_call_operand.hbm [shape: f32[8,70], index: 14, kind: output, shape index: {3}]
  %s15 = inlined_call_operand.hbm [shape: f32[8,47], index: 15, kind: output, shape index: {4}]
  %16 = xla_tuple %s11, %s12, %s13, %s14, %s15
  %s17 = sld [smem:[#allocation0]]
  $region122: #{rosenbaum_forward.1} parent=0
    _
  %s19 = ssub.s32 1, %s17
  %s20 = scalar_select 0, %s19, %s17
  $region1: #{rosenbaum_forward.1} parent=0
    #allocation2 [shape = 'u8[401408]{0}', space=vmem, size = 0x62000, scoped, tag = 'input window, operand 1, single buffered']
    #allocation3 [shape = 's32[1]{0}', space=sflag, size = 0x4, scoped, tag = 'scoped memory for rosenbaum_forward.1']
    #allocation4 [shape = 's32[1]{0}', space=sflag, size = 0x4, scoped, tag = 'scoped memory for rosenbaum_forward.1']
    #allocation5 [shape = 'u8[401408]{0}', space=vmem, size = 0x62000, scoped, tag = 'input window, operand 2, single buffered']
    #allocation6 [shape = 's32[1]{0}', space=sflag, size = 0x4, scoped, tag = 'scoped memory for rosenbaum_forward.1']
    #allocation7 [shape = 'u8[131072]{0}', space=vmem, size = 0x20000, scoped, tag = 'input window, operand 3, single buffered']
    #allocation8 [shape = 'u8[131072]{0}', space=vmem, size = 0x20000, scoped, tag = 'input window, operand 4, single buffered']
    #allocation9 [shape = 's32[1]{0}', space=sflag, size = 0x4, scoped, tag = 'scoped memory for rosenbaum_forward.1']
    #allocation10 [shape = 'u8[65536]{0}', space=vmem, size = 0x10000, scoped, tag = 'input window, operand 6, single buffered']
    #allocation11 [shape = 'u8[32768]{0}', space=vmem, size = 0x8000, scoped, tag = 'input window, operand 7, single buffered']
    #allocation12 [shape = 's32[1]{0}', space=sflag, size = 0x4, scoped, tag = 'scoped memory for rosenbaum_forward.1']
    #allocation13 [shape = 'u8[32768]{0}', space=vmem, size = 0x8000, scoped, tag = 'input window, operand 8, single buffered']
    #allocation14 [shape = 'u8[32768]{0}', space=vmem, size = 0x8000, scoped, tag = 'input window, operand 9, single buffered']
    #allocation15 [shape = 's32[1]{0}', space=sflag, size = 0x4, scoped, tag = 'scoped memory for rosenbaum_forward.1']
    #allocation16 [shape = 'u8[32768]{0}', space=vmem, size = 0x8000, scoped, tag = 'input window, operand 10, single buffered']
    #allocation17 [shape = 'u8[8192]{0}', space=vmem, size = 0x2000, scoped, tag = 'output window, operand 0, single buffered']
    #allocation18 [shape = 'u8[8192]{0}', space=vmem, size = 0x2000, scoped, tag = 'output window, operand 1, single buffered']
    #allocation19 [shape = 's32[1]{0}', space=sflag, size = 0x4, scoped, tag = 'scoped memory for rosenbaum_forward.1']
    #allocation20 [shape = 'u8[4096]{0}', space=vmem, size = 0x1000, scoped, tag = 'output window, operand 2, single buffered']
    #allocation21 [shape = 'u8[4096]{0}', space=vmem, size = 0x1000, scoped, tag = 'output window, operand 3, single buffered']
    #allocation22 [shape = 's32[1]{0}', space=sflag, size = 0x4, scoped, tag = 'scoped memory for rosenbaum_forward.1']
    #allocation23 [shape = 'u8[4096]{0}', space=vmem, size = 0x1000, scoped, tag = 'output window, operand 4, single buffered']
    %21 = vsyncpa [#allocation3], 0
    %22 = vsyncpa [#allocation6], 0
    %23 = vsyncpa [#allocation9], 0
    %24 = vsyncpa [#allocation12], 0
    %25 = vsyncpa [#allocation15], 0
    %26 = vsyncpa [#allocation4], 0
    %27 = vsyncpa [#allocation19], 0
    %28 = vsyncpa [#allocation22], 0
    // Predicated region
    $region2: #{rosenbaum_forward.1} parent=1 // pred_check
      _
    $region3: #{rosenbaum_forward.1} parent=1 // pred_check_branch
      %30 = sbr.rel (0) target = $region5
    $region4: #{rosenbaum_forward.1} parent=1 // pred_region
      _
    $region5: #{rosenbaum_forward.1} parent=1 // pred_fallthru
      _
    // Predicated region
    $region6: #{rosenbaum_forward.1} parent=1 // pred_check
      _
    $region7: #{rosenbaum_forward.1} parent=1 // pred_check_branch
      %32 = sbr.rel (0) target = $region9
    $region8: #{rosenbaum_forward.1} parent=1 // pred_region
      %s34 = ssub.s32 12544, 12544
      %35 = vsyncadd [#allocation3], %s34
      %s36 = sshll.u32 [#allocation2], 4
      %s37 = int_to_ptr.vmem [resolvable:$true] %s36
      %42 = dma.hbm_to_vmem [thread:$0]  %s1, 12544, %s37, [#allocation3], 128, 128, 8
    $region9: #{rosenbaum_forward.1} parent=1 // pred_fallthru
      _
    // Predicated region
    $region10: #{rosenbaum_forward.1} parent=1 // pred_check
      _
    $region11: #{rosenbaum_forward.1} parent=1 // pred_check_branch
      %44 = sbr.rel (0) target = $region13
    $region12: #{rosenbaum_forward.1} parent=1 // pred_region
      %s46 = ssub.s32 12544, 12544
      %47 = vsyncadd [#allocation6], %s46
      %s48 = sshll.u32 [#allocation5], 4
      %s49 = int_to_ptr.vmem [resolvable:$true] %s48
      %54 = dma.hbm_to_vmem [thread:$0]  %s2, 12544, %s49, [#allocation6], 128, 128, 8
    $region13: #{rosenbaum_forward.1} parent=1 // pred_fallthru
      _
    // Predicated region
    $region14: #{rosenbaum_forward.1} parent=1 // pred_check
      _
    $region15: #{rosenbaum_forward.1} parent=1 // pred_check_branch
      %56 = sbr.rel (0) target = $region17
    $region16: #{rosenbaum_forward.1} parent=1 // pred_region
      %s58 = ssub.s32 4096, 4096
      %59 = vsyncadd [#allocation6], %s58
      %s60 = sshll.u32 [#allocation7], 4
      %s61 = int_to_ptr.vmem [resolvable:$true] %s60
      %66 = dma.hbm_to_vmem [thread:$0]  %s3, 4096, %s61, [#allocation6], 128, 128, 8
    $region17: #{rosenbaum_forward.1} parent=1 // pred_fallthru
      _
    // Predicated region
    $region18: #{rosenbaum_forward.1} parent=1 // pred_check
      _
    $region19: #{rosenbaum_forward.1} parent=1 // pred_check_branch
      %68 = sbr.rel (0) target = $region21
    $region20: #{rosenbaum_forward.1} parent=1 // pred_region
      %s70 = ssub.s32 4096, 4096
      %71 = vsyncadd [#allocation9], %s70
      %s72 = sshll.u32 [#allocation8], 4
      %s73 = int_to_ptr.vmem [resolvable:$true] %s72
      %78 = dma.hbm_to_vmem [thread:$0]  %s4, 4096, %s73, [#allocation9], 128, 128, 8
    $region21: #{rosenbaum_forward.1} parent=1 // pred_fallthru
      _
    // Predicated region
    $region22: #{rosenbaum_forward.1} parent=1 // pred_check
      _
    $region23: #{rosenbaum_forward.1} parent=1 // pred_check_branch
      %80 = sbr.rel (0) target = $region25
    $region24: #{rosenbaum_forward.1} parent=1 // pred_region
      _
    $region25: #{rosenbaum_forward.1} parent=1 // pred_fallthru
      _
    // Predicated region
    $region26: #{rosenbaum_forward.1} parent=1 // pred_check
      _
    $region27: #{rosenbaum_forward.1} parent=1 // pred_check_branch
      %82 = sbr.rel (0) target = $region29
    $region28: #{rosenbaum_forward.1} parent=1 // pred_region
      %s84 = ssub.s32 2048, 2048
      %85 = vsyncadd [#allocation9], %s84
      %s86 = sshll.u32 [#allocation10], 4
      %s87 = int_to_ptr.vmem [resolvable:$true] %s86
      %92 = dma.hbm_to_vmem [thread:$0]  %s6, 2048, %s87, [#allocation9], 64, 64, 4
    $region29: #{rosenbaum_forward.1} parent=1 // pred_fallthru
      _
    // Predicated region
    $region30: #{rosenbaum_forward.1} parent=1 // pred_check
      _
    $region31: #{rosenbaum_forward.1} parent=1 // pred_check_branch
      %94 = sbr.rel (0) target = $region33
    $region32: #{rosenbaum_forward.1} parent=1 // pred_region
      %s96 = ssub.s32 1024, 1024
      %97 = vsyncadd [#allocation12], %s96
      %s98 = sshll.u32 [#allocation11], 4
      %s99 = int_to_ptr.vmem [resolvable:$true] %s98
      %104 = dma.hbm_to_vmem [thread:$0]  %s7, 1024, %s99, [#allocation12], 64, 64, 4
    $region33: #{rosenbaum_forward.1} parent=1 // pred_fallthru
      _
    // Predicated region
    $region34: #{rosenbaum_forward.1} parent=1 // pred_check
      _
    $region35: #{rosenbaum_forward.1} parent=1 // pred_check_branch
      %106 = sbr.rel (0) target = $region37
    $region36: #{rosenbaum_forward.1} parent=1 // pred_region
      %s108 = ssub.s32 1024, 1024
      %109 = vsyncadd [#allocation12], %s108
      %s110 = sshll.u32 [#allocation13], 4
      %s111 = int_to_ptr.vmem [resolvable:$true] %s110
      %116 = dma.hbm_to_vmem [thread:$0]  %s8, 1024, %s111, [#allocation12], 64, 64, 4
    $region37: #{rosenbaum_forward.1} parent=1 // pred_fallthru
      _
    // Predicated region
    $region38: #{rosenbaum_forward.1} parent=1 // pred_check
      _
    $region39: #{rosenbaum_forward.1} parent=1 // pred_check_branch
      %118 = sbr.rel (0) target = $region41
    $region40: #{rosenbaum_forward.1} parent=1 // pred_region
      %s120 = ssub.s32 1024, 1024
      %121 = vsyncadd [#allocation15], %s120
      %s122 = sshll.u32 [#allocation14], 4
      %s123 = int_to_ptr.vmem [resolvable:$true] %s122
      %128 = dma.hbm_to_vmem [thread:$0]  %s9, 1024, %s123, [#allocation15], 64, 64, 4
    $region41: #{rosenbaum_forward.1} parent=1 // pred_fallthru
      _
    // Predicated region
    $region42: #{rosenbaum_forward.1} parent=1 // pred_check
      _
    $region43: #{rosenbaum_forward.1} parent=1 // pred_check_branch
      %130 = sbr.rel (0) target = $region45
    $region44: #{rosenbaum_forward.1} parent=1 // pred_region
      %s132 = ssub.s32 1024, 1024
      %133 = vsyncadd [#allocation15], %s132
      %s134 = sshll.u32 [#allocation16], 4
      %s135 = int_to_ptr.vmem [resolvable:$true] %s134
      %140 = dma.hbm_to_vmem [thread:$0]  %s10, 1024, %s135, [#allocation15], 64, 64, 4
    $region45: #{rosenbaum_forward.1} parent=1 // pred_fallthru
      _
    // Predicated region
    $region46: #{rosenbaum_forward.1} parent=1 // pred_check
      _
    $region47: #{rosenbaum_forward.1} parent=1 // pred_check_branch
      %142 = sbr.rel (0) target = $region49
    $region48: #{rosenbaum_forward.1} parent=1 // pred_region
      %143 = dma.done [#allocation3], 12544
    $region49: #{rosenbaum_forward.1} parent=1 // pred_fallthru
      _
    // Predicated region
    $region50: #{rosenbaum_forward.1} parent=1 // pred_check
      _
    $region51: #{rosenbaum_forward.1} parent=1 // pred_check_branch
      %145 = sbr.rel (0) target = $region53
    $region52: #{rosenbaum_forward.1} parent=1 // pred_region
      %146 = dma.done [#allocation6], 12544
    $region53: #{rosenbaum_forward.1} parent=1 // pred_fallthru
      _
    // Predicated region
    $region54: #{rosenbaum_forward.1} parent=1 // pred_check
      _
    $region55: #{rosenbaum_forward.1} parent=1 // pred_check_branch
      %148 = sbr.rel (0) target = $region57
    $region56: #{rosenbaum_forward.1} parent=1 // pred_region
      %149 = dma.done [#allocation6], 4096
    $region57: #{rosenbaum_forward.1} parent=1 // pred_fallthru
      _
    // Predicated region
    $region58: #{rosenbaum_forward.1} parent=1 // pred_check
      _
    $region59: #{rosenbaum_forward.1} parent=1 // pred_check_branch
      %151 = sbr.rel (0) target = $region61
    $region60: #{rosenbaum_forward.1} parent=1 // pred_region
      %152 = dma.done [#allocation9], 4096
    $region61: #{rosenbaum_forward.1} parent=1 // pred_fallthru
      _
    // Predicated region
    $region62: #{rosenbaum_forward.1} parent=1 // pred_check
      _
    $region63: #{rosenbaum_forward.1} parent=1 // pred_check_branch
      %154 = sbr.rel (0) target = $region65
    $region64: #{rosenbaum_forward.1} parent=1 // pred_region
      %155 = dma.done [#allocation9], 2048
    $region65: #{rosenbaum_forward.1} parent=1 // pred_fallthru
      _
    // Predicated region
    $region66: #{rosenbaum_forward.1} parent=1 // pred_check
      _
    $region67: #{rosenbaum_forward.1} parent=1 // pred_check_branch
      %157 = sbr.rel (0) target = $region69
    $region68: #{rosenbaum_forward.1} parent=1 // pred_region
      %158 = dma.done [#allocation12], 1024
    $region69: #{rosenbaum_forward.1} parent=1 // pred_fallthru
      _
    // Predicated region
    $region70: #{rosenbaum_forward.1} parent=1 // pred_check
      _
    $region71: #{rosenbaum_forward.1} parent=1 // pred_check_branch
      %160 = sbr.rel (0) target = $region73
    $region72: #{rosenbaum_forward.1} parent=1 // pred_region
      %161 = dma.done [#allocation12], 1024
    $region73: #{rosenbaum_forward.1} parent=1 // pred_fallthru
      _
    // Predicated region
    $region74: #{rosenbaum_forward.1} parent=1 // pred_check
      _
    $region75: #{rosenbaum_forward.1} parent=1 // pred_check_branch
      %163 = sbr.rel (0) target = $region77
    $region76: #{rosenbaum_forward.1} parent=1 // pred_region
      %164 = dma.done [#allocation15], 1024
    $region77: #{rosenbaum_forward.1} parent=1 // pred_fallthru
      _
    // Predicated region
    $region78: #{rosenbaum_forward.1} parent=1 // pred_check
      _
    $region79: #{rosenbaum_forward.1} parent=1 // pred_check_branch
      %166 = sbr.rel (0) target = $region81
    $region80: #{rosenbaum_forward.1} parent=1 // pred_region
      %167 = dma.done [#allocation15], 1024
    $region81: #{rosenbaum_forward.1} parent=1 // pred_fallthru
      _
    %v169 = vld [vmem:[%s0] sm:$0xff]
    %v170 = vld [vmem:[%s0 + $0x8] sm:$0xff]
    %v171 = vld [vmem:[%s0 + $0x10] sm:$0xff]
    %v172 = vld [vmem:[%s0 + $0x18] sm:$0xff]
    %v173 = vld [vmem:[%s0 + $0x20] sm:$0xff]
    %v174 = vld [vmem:[%s0 + $0x28] sm:$0xff]
    %v175 = vld [vmem:[%s0 + $0x30] sm:$0xff]
    %v176 = vpack.c.bf16 %v169, %v169
    %v177 = vpack.c.bf16 %v170, %v170
    %v178 = vpack.c.bf16 %v171, %v171
    %v179 = vpack.c.bf16 %v172, %v172
    %v180 = vpack.c.bf16 %v173, %v173
    %v181 = vpack.c.bf16 %v174, %v174
    %v182 = vpack.c.bf16 %v175, %v175
    %v183 = vunpack.c.l.bf16 %v176
    %v184 = vunpack.c.l.bf16 %v177
    %v185 = vunpack.c.l.bf16 %v178
    %v186 = vunpack.c.l.bf16 %v179
    %v187 = vunpack.c.l.bf16 %v180
    %v188 = vunpack.c.l.bf16 %v181
    %v189 = vunpack.c.l.bf16 %v182
    %v190 = vsub.f32 %v169, %v183
    %v191 = vsub.f32 %v170, %v184
    %v192 = vsub.f32 %v171, %v185
    %v193 = vsub.f32 %v172, %v186
    %v194 = vsub.f32 %v173, %v187
    %v195 = vsub.f32 %v174, %v188
    %v196 = vsub.f32 %v175, %v189
    %v197 = vpack.c.bf16 %v190, %v190
    %v198 = vpack.c.bf16 %v191, %v191
    %v199 = vpack.c.bf16 %v192, %v192
    %v200 = vpack.c.bf16 %v193, %v193
    %v201 = vpack.c.bf16 %v194, %v194
    %v202 = vpack.c.bf16 %v195, %v195
    %v203 = vpack.c.bf16 %v196, %v196
    %v204 = vld [vmem:[#allocation2] sm:$0xff]
    %v205 = vld [vmem:[#allocation2 + $0x8] sm:$0xff]
    %v206 = vld [vmem:[#allocation2 + $0x10] sm:$0xff]
    %v207 = vld [vmem:[#allocation2 + $0x18] sm:$0xff]
    %v208 = vld [vmem:[#allocation2 + $0x20] sm:$0xff]
    %v209 = vld [vmem:[#allocation2 + $0x28] sm:$0xff]
    %v210 = vld [vmem:[#allocation2 + $0x30] sm:$0xff]
    %v211 = vld [vmem:[#allocation2 + $0x38] sm:$0xff]
    %v212 = vld [vmem:[#allocation2 + $0x40] sm:$0xff]
    %v213 = vld [vmem:[#allocation2 + $0x48] sm:$0xff]
    %v214 = vld [vmem:[#allocation2 + $0x50] sm:$0xff]
    %v215 = vld [vmem:[#allocation2 + $0x58] sm:$0xff]
    %v216 = vld [vmem:[#allocation2 + $0x60] sm:$0xff]
    %v217 = vld [vmem:[#allocation2 + $0x68] sm:$0xff]
    %v218 = vld [vmem:[#allocation2 + $0x70] sm:$0xff]
    %v219 = vld [vmem:[#allocation2 + $0x78] sm:$0xff]
    %v220 = vld [vmem:[#allocation2 + $0x80] sm:$0xff]
    %v221 = vld [vmem:[#allocation2 + $0x88] sm:$0xff]
    %v222 = vld [vmem:[#allocation2 + $0x90] sm:$0xff]
    %v223 = vld [vmem:[#allocation2 + $0x98] sm:$0xff]
    %v224 = vld [vmem:[#allocation2 + $0xa0] sm:$0xff]
    %v225 = vld [vmem:[#allocation2 + $0xa8] sm:$0xff]
    %v226 = vld [vmem:[#allocation2 + $0xb0] sm:$0xff]
    %v227 = vld [vmem:[#allocation2 + $0xb8] sm:$0xff]
    %v228 = vld [vmem:[#allocation2 + $0xc0] sm:$0xff]
    %v229 = vld [vmem:[#allocation2 + $0xc8] sm:$0xff]
    %v230 = vld [vmem:[#allocation2 + $0xd0] sm:$0xff]
    %v231 = vld [vmem:[#allocation2 + $0xd8] sm:$0xff]
    %v232 = vld [vmem:[#allocation2 + $0xe0] sm:$0xff]
    %v233 = vld [vmem:[#allocation2 + $0xe8] sm:$0xff]
    %v234 = vld [vmem:[#allocation2 + $0xf0] sm:$0xff]
    %v235 = vld [vmem:[#allocation2 + $0xf8] sm:$0xff]
    %v236 = vld [vmem:[#allocation2 + $0x100] sm:$0xff]
    %v237 = vld [vmem:[#allocation2 + $0x108] sm:$0xff]
    %v238 = vld [vmem:[#allocation2 + $0x110] sm:$0xff]
    %v239 = vld [vmem:[#allocation2 + $0x118] sm:$0xff]
    %v240 = vld [vmem:[#allocation2 + $0x120] sm:$0xff]
    %v241 = vld [vmem:[#allocation2 + $0x128] sm:$0xff]
    %v242 = vld [vmem:[#allocation2 + $0x130] sm:$0xff]
    %v243 = vld [vmem:[#allocation2 + $0x138] sm:$0xff]
    %v244 = vld [vmem:[#allocation2 + $0x140] sm:$0xff]
    %v245 = vld [vmem:[#allocation2 + $0x148] sm:$0xff]
    %v246 = vld [vmem:[#allocation2 + $0x150] sm:$0xff]
    %v247 = vld [vmem:[#allocation2 + $0x158] sm:$0xff]
    %v248 = vld [vmem:[#allocation2 + $0x160] sm:$0xff]
    %v249 = vld [vmem:[#allocation2 + $0x168] sm:$0xff]
    %v250 = vld [vmem:[#allocation2 + $0x170] sm:$0xff]
    %v251 = vld [vmem:[#allocation2 + $0x178] sm:$0xff]
    %v252 = vld [vmem:[#allocation2 + $0x180] sm:$0xff]
    %v253 = vld [vmem:[#allocation2 + $0x188] sm:$0xff]
    %v254 = vld [vmem:[#allocation2 + $0x190] sm:$0xff]
    %v255 = vld [vmem:[#allocation2 + $0x198] sm:$0xff]
    %v256 = vld [vmem:[#allocation2 + $0x1a0] sm:$0xff]
    %v257 = vld [vmem:[#allocation2 + $0x1a8] sm:$0xff]
    %v258 = vld [vmem:[#allocation2 + $0x1b0] sm:$0xff]
    %v259 = vld [vmem:[#allocation2 + $0x1b8] sm:$0xff]
    %v260 = vld [vmem:[#allocation2 + $0x1c0] sm:$0xff]
    %v261 = vld [vmem:[#allocation2 + $0x1c8] sm:$0xff]
    %v262 = vld [vmem:[#allocation2 + $0x1d0] sm:$0xff]
    %v263 = vld [vmem:[#allocation2 + $0x1d8] sm:$0xff]
    %v264 = vld [vmem:[#allocation2 + $0x1e0] sm:$0xff]
    %v265 = vld [vmem:[#allocation2 + $0x1e8] sm:$0xff]
    %v266 = vld [vmem:[#allocation2 + $0x1f0] sm:$0xff]
    %v267 = vld [vmem:[#allocation2 + $0x1f8] sm:$0xff]
    %v268 = vld [vmem:[#allocation2 + $0x200] sm:$0xff]
    %v269 = vld [vmem:[#allocation2 + $0x208] sm:$0xff]
    %v270 = vld [vmem:[#allocation2 + $0x210] sm:$0xff]
    %v271 = vld [vmem:[#allocation2 + $0x218] sm:$0xff]
    %v272 = vld [vmem:[#allocation2 + $0x220] sm:$0xff]
    %v273 = vld [vmem:[#allocation2 + $0x228] sm:$0xff]
    %v274 = vld [vmem:[#allocation2 + $0x230] sm:$0xff]
    %v275 = vld [vmem:[#allocation2 + $0x238] sm:$0xff]
    %v276 = vld [vmem:[#allocation2 + $0x240] sm:$0xff]
    %v277 = vld [vmem:[#allocation2 + $0x248] sm:$0xff]
    %v278 = vld [vmem:[#allocation2 + $0x250] sm:$0xff]
    %v279 = vld [vmem:[#allocation2 + $0x258] sm:$0xff]
    %v280 = vld [vmem:[#allocation2 + $0x260] sm:$0xff]
    %v281 = vld [vmem:[#allocation2 + $0x268] sm:$0xff]
    %v282 = vld [vmem:[#allocation2 + $0x270] sm:$0xff]
    %v283 = vld [vmem:[#allocation2 + $0x278] sm:$0xff]
    %v284 = vld [vmem:[#allocation2 + $0x280] sm:$0xff]
    %v285 = vld [vmem:[#allocation2 + $0x288] sm:$0xff]
    %v286 = vld [vmem:[#allocation2 + $0x290] sm:$0xff]
    %v287 = vld [vmem:[#allocation2 + $0x298] sm:$0xff]
    %v288 = vld [vmem:[#allocation2 + $0x2a0] sm:$0xff]
    %v289 = vld [vmem:[#allocation2 + $0x2a8] sm:$0xff]
    %v290 = vld [vmem:[#allocation2 + $0x2b0] sm:$0xff]
    %v291 = vld [vmem:[#allocation2 + $0x2b8] sm:$0xff]
    %v292 = vld [vmem:[#allocation2 + $0x2c0] sm:$0xff]
    %v293 = vld [vmem:[#allocation2 + $0x2c8] sm:$0xff]
    %v294 = vld [vmem:[#allocation2 + $0x2d0] sm:$0xff]
    %v295 = vld [vmem:[#allocation2 + $0x2d8] sm:$0xff]
    %v296 = vld [vmem:[#allocation2 + $0x2e0] sm:$0xff]
    %v297 = vld [vmem:[#allocation2 + $0x2e8] sm:$0xff]
    %v298 = vld [vmem:[#allocation2 + $0x2f0] sm:$0xff]
    %v299 = vld [vmem:[#allocation2 + $0x2f8] sm:$0xff]
    %v300 = vld [vmem:[#allocation2 + $0x300] sm:$0xff]
    %v301 = vld [vmem:[#allocation2 + $0x308] sm:$0xff]
    %v302 = vld [vmem:[#allocation5] sm:$0xff]
    %v303 = vld [vmem:[#allocation5 + $0x8] sm:$0xff]
    %v304 = vld [vmem:[#allocation5 + $0x10] sm:$0xff]
    %v305 = vld [vmem:[#allocation5 + $0x18] sm:$0xff]
    %v306 = vld [vmem:[#allocation5 + $0x20] sm:$0xff]
    %v307 = vld [vmem:[#allocation5 + $0x28] sm:$0xff]
    %v308 = vld [vmem:[#allocation5 + $0x30] sm:$0xff]
    %v309 = vld [vmem:[#allocation5 + $0x38] sm:$0xff]
    %v310 = vld [vmem:[#allocation5 + $0x40] sm:$0xff]
    %v311 = vld [vmem:[#allocation5 + $0x48] sm:$0xff]
    %v312 = vld [vmem:[#allocation5 + $0x50] sm:$0xff]
    %v313 = vld [vmem:[#allocation5 + $0x58] sm:$0xff]
    %v314 = vld [vmem:[#allocation5 + $0x60] sm:$0xff]
    %v315 = vld [vmem:[#allocation5 + $0x68] sm:$0xff]
    %v316 = vld [vmem:[#allocation5 + $0x70] sm:$0xff]
    %v317 = vld [vmem:[#allocation5 + $0x78] sm:$0xff]
    %v318 = vld [vmem:[#allocation5 + $0x80] sm:$0xff]
    %v319 = vld [vmem:[#allocation5 + $0x88] sm:$0xff]
    %v320 = vld [vmem:[#allocation5 + $0x90] sm:$0xff]
    %v321 = vld [vmem:[#allocation5 + $0x98] sm:$0xff]
    %v322 = vld [vmem:[#allocation5 + $0xa0] sm:$0xff]
    %v323 = vld [vmem:[#allocation5 + $0xa8] sm:$0xff]
    %v324 = vld [vmem:[#allocation5 + $0xb0] sm:$0xff]
    %v325 = vld [vmem:[#allocation5 + $0xb8] sm:$0xff]
    %v326 = vld [vmem:[#allocation5 + $0xc0] sm:$0xff]
    %v327 = vld [vmem:[#allocation5 + $0xc8] sm:$0xff]
    %v328 = vld [vmem:[#allocation5 + $0xd0] sm:$0xff]
    %v329 = vld [vmem:[#allocation5 + $0xd8] sm:$0xff]
    %v330 = vld [vmem:[#allocation5 + $0xe0] sm:$0xff]
    %v331 = vld [vmem:[#allocation5 + $0xe8] sm:$0xff]
    %v332 = vld [vmem:[#allocation5 + $0xf0] sm:$0xff]
    %v333 = vld [vmem:[#allocation5 + $0xf8] sm:$0xff]
    %v334 = vld [vmem:[#allocation5 + $0x100] sm:$0xff]
    %v335 = vld [vmem:[#allocation5 + $0x108] sm:$0xff]
    %v336 = vld [vmem:[#allocation5 + $0x110] sm:$0xff]
    %v337 = vld [vmem:[#allocation5 + $0x118] sm:$0xff]
    %v338 = vld [vmem:[#allocation5 + $0x120] sm:$0xff]
    %v339 = vld [vmem:[#allocation5 + $0x128] sm:$0xff]
    %v340 = vld [vmem:[#allocation5 + $0x130] sm:$0xff]
    %v341 = vld [vmem:[#allocation5 + $0x138] sm:$0xff]
    %v342 = vld [vmem:[#allocation5 + $0x140] sm:$0xff]
    %v343 = vld [vmem:[#allocation5 + $0x148] sm:$0xff]
    %v344 = vld [vmem:[#allocation5 + $0x150] sm:$0xff]
    %v345 = vld [vmem:[#allocation5 + $0x158] sm:$0xff]
    %v346 = vld [vmem:[#allocation5 + $0x160] sm:$0xff]
    %v347 = vld [vmem:[#allocation5 + $0x168] sm:$0xff]
    %v348 = vld [vmem:[#allocation5 + $0x170] sm:$0xff]
    %v349 = vld [vmem:[#allocation5 + $0x178] sm:$0xff]
    %v350 = vld [vmem:[#allocation5 + $0x180] sm:$0xff]
    %v351 = vld [vmem:[#allocation5 + $0x188] sm:$0xff]
    %v352 = vld [vmem:[#allocation5 + $0x190] sm:$0xff]
    %v353 = vld [vmem:[#allocation5 + $0x198] sm:$0xff]
    %v354 = vld [vmem:[#allocation5 + $0x1a0] sm:$0xff]
    %v355 = vld [vmem:[#allocation5 + $0x1a8] sm:$0xff]
    %v356 = vld [vmem:[#allocation5 + $0x1b0] sm:$0xff]
    %v357 = vld [vmem:[#allocation5 + $0x1b8] sm:$0xff]
    %v358 = vld [vmem:[#allocation5 + $0x1c0] sm:$0xff]
    %v359 = vld [vmem:[#allocation5 + $0x1c8] sm:$0xff]
    %v360 = vld [vmem:[#allocation5 + $0x1d0] sm:$0xff]
    %v361 = vld [vmem:[#allocation5 + $0x1d8] sm:$0xff]
    %v362 = vld [vmem:[#allocation5 + $0x1e0] sm:$0xff]
    %v363 = vld [vmem:[#allocation5 + $0x1e8] sm:$0xff]
    %v364 = vld [vmem:[#allocation5 + $0x1f0] sm:$0xff]
    %v365 = vld [vmem:[#allocation5 + $0x1f8] sm:$0xff]
    %v366 = vld [vmem:[#allocation5 + $0x200] sm:$0xff]
    %v367 = vld [vmem:[#allocation5 + $0x208] sm:$0xff]
    %v368 = vld [vmem:[#allocation5 + $0x210] sm:$0xff]
    %v369 = vld [vmem:[#allocation5 + $0x218] sm:$0xff]
    %v370 = vld [vmem:[#allocation5 + $0x220] sm:$0xff]
    %v371 = vld [vmem:[#allocation5 + $0x228] sm:$0xff]
    %v372 = vld [vmem:[#allocation5 + $0x230] sm:$0xff]
    %v373 = vld [vmem:[#allocation5 + $0x238] sm:$0xff]
    %v374 = vld [vmem:[#allocation5 + $0x240] sm:$0xff]
    %v375 = vld [vmem:[#allocation5 + $0x248] sm:$0xff]
    %v376 = vld [vmem:[#allocation5 + $0x250] sm:$0xff]
    %v377 = vld [vmem:[#allocation5 + $0x258] sm:$0xff]
    %v378 = vld [vmem:[#allocation5 + $0x260] sm:$0xff]
    %v379 = vld [vmem:[#allocation5 + $0x268] sm:$0xff]
    %v380 = vld [vmem:[#allocation5 + $0x270] sm:$0xff]
    %v381 = vld [vmem:[#allocation5 + $0x278] sm:$0xff]
    %v382 = vld [vmem:[#allocation5 + $0x280] sm:$0xff]
    %v383 = vld [vmem:[#allocation5 + $0x288] sm:$0xff]
    %v384 = vld [vmem:[#allocation5 + $0x290] sm:$0xff]
    %v385 = vld [vmem:[#allocation5 + $0x298] sm:$0xff]
    %v386 = vld [vmem:[#allocation5 + $0x2a0] sm:$0xff]
    %v387 = vld [vmem:[#allocation5 + $0x2a8] sm:$0xff]
    %v388 = vld [vmem:[#allocation5 + $0x2b0] sm:$0xff]
    %v389 = vld [vmem:[#allocation5 + $0x2b8] sm:$0xff]
    %v390 = vld [vmem:[#allocation5 + $0x2c0] sm:$0xff]
    %v391 = vld [vmem:[#allocation5 + $0x2c8] sm:$0xff]
    %v392 = vld [vmem:[#allocation5 + $0x2d0] sm:$0xff]
    %v393 = vld [vmem:[#allocation5 + $0x2d8] sm:$0xff]
    %v394 = vld [vmem:[#allocation5 + $0x2e0] sm:$0xff]
    %v395 = vld [vmem:[#allocation5 + $0x2e8] sm:$0xff]
    %v396 = vld [vmem:[#allocation5 + $0x2f0] sm:$0xff]
    %v397 = vld [vmem:[#allocation5 + $0x2f8] sm:$0xff]
    %v398 = vld [vmem:[#allocation5 + $0x300] sm:$0xff]
    %v399 = vld [vmem:[#allocation5 + $0x308] sm:$0xff]
    %v498 = vunpack.c.l.b16 %v204
    %v499 = vunpack.c.h.b16 %v204
    %v500 = vunpack.c.l.b16 %v205
    %v501 = vunpack.c.h.b16 %v205
    %v502 = vunpack.c.l.b16 %v206
    %v503 = vunpack.c.h.b16 %v206
    %v504 = vunpack.c.l.b16 %v207
    %v505 = vunpack.c.h.b16 %v207
    %v506 = vunpack.c.l.b16 %v208
    %v507 = vunpack.c.h.b16 %v208
    %v508 = vunpack.c.l.b16 %v209
    %v509 = vunpack.c.h.b16 %v209
    %v510 = vunpack.c.l.b16 %v210
    %v511 = vunpack.c.h.b16 %v210
    %v512 = vunpack.c.l.b16 %v211
    %v513 = vunpack.c.h.b16 %v211
    %v514 = vunpack.c.l.b16 %v212
    %v515 = vunpack.c.h.b16 %v212
    %v516 = vunpack.c.l.b16 %v213
    %v517 = vunpack.c.h.b16 %v213
    %v518 = vunpack.c.l.b16 %v214
    %v519 = vunpack.c.h.b16 %v214
    %v520 = vunpack.c.l.b16 %v215
    %v521 = vunpack.c.h.b16 %v215
    %v522 = vunpack.c.l.b16 %v216
    %v523 = vunpack.c.h.b16 %v216
    %v524 = vunpack.c.l.b16 %v217
    %v525 = vunpack.c.h.b16 %v217
    %v526 = vunpack.c.l.b16 %v218
    %v527 = vunpack.c.h.b16 %v218
    %v528 = vunpack.c.l.b16 %v219
    %v529 = vunpack.c.h.b16 %v219
    %v530 = vunpack.c.l.b16 %v220
    %v531 = vunpack.c.h.b16 %v220
    %v532 = vunpack.c.l.b16 %v221
    %v533 = vunpack.c.h.b16 %v221
    %v534 = vunpack.c.l.b16 %v222
    %v535 = vunpack.c.h.b16 %v222
    %v536 = vunpack.c.l.b16 %v223
    %v537 = vunpack.c.h.b16 %v223
    %v538 = vunpack.c.l.b16 %v224
    %v539 = vunpack.c.h.b16 %v224
    %v540 = vunpack.c.l.b16 %v225
    %v541 = vunpack.c.h.b16 %v225
    %v542 = vunpack.c.l.b16 %v226
    %v543 = vunpack.c.h.b16 %v226
    %v544 = vunpack.c.l.b16 %v227
    %v545 = vunpack.c.h.b16 %v227
    %v546 = vunpack.c.l.b16 %v228
    %v547 = vunpack.c.h.b16 %v228
    %v548 = vunpack.c.l.b16 %v229
    %v549 = vunpack.c.h.b16 %v229
    %v550 = vunpack.c.l.b16 %v230
    %v551 = vunpack.c.h.b16 %v230
    %v552 = vunpack.c.l.b16 %v231
    %v553 = vunpack.c.h.b16 %v231
    %v554 = vunpack.c.l.b16 %v232
    %v555 = vunpack.c.h.b16 %v232
    %v556 = vunpack.c.l.b16 %v233
    %v557 = vunpack.c.h.b16 %v233
    %v558 = vunpack.c.l.b16 %v234
    %v559 = vunpack.c.h.b16 %v234
    %v560 = vunpack.c.l.b16 %v235
    %v561 = vunpack.c.h.b16 %v235
    %v562 = vunpack.c.l.b16 %v236
    %v563 = vunpack.c.h.b16 %v236
    %v564 = vunpack.c.l.b16 %v237
    %v565 = vunpack.c.h.b16 %v237
    %v566 = vunpack.c.l.b16 %v238
    %v567 = vunpack.c.h.b16 %v238
    %v568 = vunpack.c.l.b16 %v239
    %v569 = vunpack.c.h.b16 %v239
    %v570 = vunpack.c.l.b16 %v240
    %v571 = vunpack.c.h.b16 %v240
    %v572 = vunpack.c.l.b16 %v241
    %v573 = vunpack.c.h.b16 %v241
    %v574 = vunpack.c.l.b16 %v242
    %v575 = vunpack.c.h.b16 %v242
    %v576 = vunpack.c.l.b16 %v243
    %v577 = vunpack.c.h.b16 %v243
    %v578 = vunpack.c.l.b16 %v244
    %v579 = vunpack.c.h.b16 %v244
    %v580 = vunpack.c.l.b16 %v245
    %v581 = vunpack.c.h.b16 %v245
    %v582 = vunpack.c.l.b16 %v246
    %v583 = vunpack.c.h.b16 %v246
    %v584 = vunpack.c.l.b16 %v247
    %v585 = vunpack.c.h.b16 %v247
    %v586 = vunpack.c.l.b16 %v248
    %v587 = vunpack.c.h.b16 %v248
    %v588 = vunpack.c.l.b16 %v249
    %v589 = vunpack.c.h.b16 %v249
    %v590 = vunpack.c.l.b16 %v250
    %v591 = vunpack.c.h.b16 %v250
    %v592 = vunpack.c.l.b16 %v251
    %v593 = vunpack.c.h.b16 %v251
    %v594 = vunpack.c.l.b16 %v252
    %v595 = vunpack.c.h.b16 %v252
    %v596 = vunpack.c.l.b16 %v253
    %v597 = vunpack.c.h.b16 %v253
    %v598 = vunpack.c.l.b16 %v254
    %v599 = vunpack.c.h.b16 %v254
    %v600 = vunpack.c.l.b16 %v255
    %v601 = vunpack.c.h.b16 %v255
    %v602 = vunpack.c.l.b16 %v256
    %v603 = vunpack.c.h.b16 %v256
    %v604 = vunpack.c.l.b16 %v257
    %v605 = vunpack.c.h.b16 %v257
    %v606 = vunpack.c.l.b16 %v258
    %v607 = vunpack.c.h.b16 %v258
    %v608 = vunpack.c.l.b16 %v259
    %v609 = vunpack.c.h.b16 %v259
    %v610 = vunpack.c.l.b16 %v260
    %v611 = vunpack.c.h.b16 %v260
    %v612 = vunpack.c.l.b16 %v261
    %v613 = vunpack.c.h.b16 %v261
    %v614 = vunpack.c.l.b16 %v262
    %v615 = vunpack.c.h.b16 %v262
    %v616 = vunpack.c.l.b16 %v263
    %v617 = vunpack.c.h.b16 %v263
    %v618 = vunpack.c.l.b16 %v264
    %v619 = vunpack.c.h.b16 %v264
    %v620 = vunpack.c.l.b16 %v265
    %v621 = vunpack.c.h.b16 %v265
    %v622 = vunpack.c.l.b16 %v266
    %v623 = vunpack.c.h.b16 %v266
    %v624 = vunpack.c.l.b16 %v267
    %v625 = vunpack.c.h.b16 %v267
    %v626 = vunpack.c.l.b16 %v268
    %v627 = vunpack.c.h.b16 %v268
    %v628 = vunpack.c.l.b16 %v269
    %v629 = vunpack.c.h.b16 %v269
    %v630 = vunpack.c.l.b16 %v270
    %v631 = vunpack.c.h.b16 %v270
    %v632 = vunpack.c.l.b16 %v271
    %v633 = vunpack.c.h.b16 %v271
    %v634 = vunpack.c.l.b16 %v272
    %v635 = vunpack.c.h.b16 %v272
    %v636 = vunpack.c.l.b16 %v273
    %v637 = vunpack.c.h.b16 %v273
    %v638 = vunpack.c.l.b16 %v274
    %v639 = vunpack.c.h.b16 %v274
    %v640 = vunpack.c.l.b16 %v275
    %v641 = vunpack.c.h.b16 %v275
    %v642 = vunpack.c.l.b16 %v276
    %v643 = vunpack.c.h.b16 %v276
    %v644 = vunpack.c.l.b16 %v277
    %v645 = vunpack.c.h.b16 %v277
    %v646 = vunpack.c.l.b16 %v278
    %v647 = vunpack.c.h.b16 %v278
    %v648 = vunpack.c.l.b16 %v279
    %v649 = vunpack.c.h.b16 %v279
    %v650 = vunpack.c.l.b16 %v280
    %v651 = vunpack.c.h.b16 %v280
    %v652 = vunpack.c.l.b16 %v281
    %v653 = vunpack.c.h.b16 %v281
    %v654 = vunpack.c.l.b16 %v282
    %v655 = vunpack.c.h.b16 %v282
    %v656 = vunpack.c.l.b16 %v283
    %v657 = vunpack.c.h.b16 %v283
    %v658 = vunpack.c.l.b16 %v284
    %v659 = vunpack.c.h.b16 %v284
    %v660 = vunpack.c.l.b16 %v285
    %v661 = vunpack.c.h.b16 %v285
    %v662 = vunpack.c.l.b16 %v286
    %v663 = vunpack.c.h.b16 %v286
    %v664 = vunpack.c.l.b16 %v287
    %v665 = vunpack.c.h.b16 %v287
    %v666 = vunpack.c.l.b16 %v288
    %v667 = vunpack.c.h.b16 %v288
    %v668 = vunpack.c.l.b16 %v289
    %v669 = vunpack.c.h.b16 %v289
    %v670 = vunpack.c.l.b16 %v290
    %v671 = vunpack.c.h.b16 %v290
    %v672 = vunpack.c.l.b16 %v291
    %v673 = vunpack.c.h.b16 %v291
    %v674 = vunpack.c.l.b16 %v292
    %v675 = vunpack.c.h.b16 %v292
    %v676 = vunpack.c.l.b16 %v293
    %v677 = vunpack.c.h.b16 %v293
    %v678 = vunpack.c.l.b16 %v294
    %v679 = vunpack.c.h.b16 %v294
    %v680 = vunpack.c.l.b16 %v295
    %v681 = vunpack.c.h.b16 %v295
    %v682 = vunpack.c.l.b16 %v296
    %v683 = vunpack.c.h.b16 %v296
    %v684 = vunpack.c.l.b16 %v297
    %v685 = vunpack.c.h.b16 %v297
    %v686 = vunpack.c.l.b16 %v298
    %v687 = vunpack.c.h.b16 %v298
    %v688 = vunpack.c.l.b16 %v299
    %v689 = vunpack.c.h.b16 %v299
    %v690 = vunpack.c.l.b16 %v300
    %v691 = vunpack.c.h.b16 %v300
    %v692 = vunpack.c.l.b16 %v301
    %v693 = vunpack.c.h.b16 %v301
    %v694 = vpack.c.b16 %v500, %v498
    %v695 = vpack.c.b16 %v501, %v499
    %v696 = vpack.c.b16 %v504, %v502
    %v697 = vpack.c.b16 %v505, %v503
    %v698 = vpack.c.b16 %v508, %v506
    %v699 = vpack.c.b16 %v509, %v507
    %v700 = vpack.c.b16 %v512, %v510
    %v701 = vpack.c.b16 %v513, %v511
    %v702 = vpack.c.b16 %v516, %v514
    %v703 = vpack.c.b16 %v517, %v515
    %v704 = vpack.c.b16 %v520, %v518
    %v705 = vpack.c.b16 %v521, %v519
    %v706 = vpack.c.b16 %v524, %v522
    %v707 = vpack.c.b16 %v525, %v523
    %v708 = vpack.c.b16 %v528, %v526
    %v709 = vpack.c.b16 %v529, %v527
    %v710 = vpack.c.b16 %v532, %v530
    %v711 = vpack.c.b16 %v533, %v531
    %v712 = vpack.c.b16 %v536, %v534
    %v713 = vpack.c.b16 %v537, %v535
    %v714 = vpack.c.b16 %v540, %v538
    %v715 = vpack.c.b16 %v541, %v539
    %v716 = vpack.c.b16 %v544, %v542
    %v717 = vpack.c.b16 %v545, %v543
    %v718 = vpack.c.b16 %v548, %v546
    %v719 = vpack.c.b16 %v549, %v547
    %v720 = vpack.c.b16 %v552, %v550
    %v721 = vpack.c.b16 %v553, %v551
    %v722 = vpack.c.b16 %v556, %v554
    %v723 = vpack.c.b16 %v557, %v555
    %v724 = vpack.c.b16 %v560, %v558
    %v725 = vpack.c.b16 %v561, %v559
    %v726 = vpack.c.b16 %v564, %v562
    %v727 = vpack.c.b16 %v565, %v563
    %v728 = vpack.c.b16 %v568, %v566
    %v729 = vpack.c.b16 %v569, %v567
    %v730 = vpack.c.b16 %v572, %v570
    %v731 = vpack.c.b16 %v573, %v571
    %v732 = vpack.c.b16 %v576, %v574
    %v733 = vpack.c.b16 %v577, %v575
    %v734 = vpack.c.b16 %v580, %v578
    %v735 = vpack.c.b16 %v581, %v579
    %v736 = vpack.c.b16 %v584, %v582
    %v737 = vpack.c.b16 %v585, %v583
    %v738 = vpack.c.b16 %v588, %v586
    %v739 = vpack.c.b16 %v589, %v587
    %v740 = vpack.c.b16 %v592, %v590
    %v741 = vpack.c.b16 %v593, %v591
    %v742 = vpack.c.b16 %v596, %v594
    %v743 = vpack.c.b16 %v597, %v595
    %v744 = vpack.c.b16 %v600, %v598
    %v745 = vpack.c.b16 %v601, %v599
    %v746 = vpack.c.b16 %v604, %v602
    %v747 = vpack.c.b16 %v605, %v603
    %v748 = vpack.c.b16 %v608, %v606
    %v749 = vpack.c.b16 %v609, %v607
    %v750 = vpack.c.b16 %v612, %v610
    %v751 = vpack.c.b16 %v613, %v611
    %v752 = vpack.c.b16 %v616, %v614
    %v753 = vpack.c.b16 %v617, %v615
    %v754 = vpack.c.b16 %v620, %v618
    %v755 = vpack.c.b16 %v621, %v619
    %v756 = vpack.c.b16 %v624, %v622
    %v757 = vpack.c.b16 %v625, %v623
    %v758 = vpack.c.b16 %v628, %v626
    %v759 = vpack.c.b16 %v629, %v627
    %v760 = vpack.c.b16 %v632, %v630
    %v761 = vpack.c.b16 %v633, %v631
    %v762 = vpack.c.b16 %v636, %v634
    %v763 = vpack.c.b16 %v637, %v635
    %v764 = vpack.c.b16 %v640, %v638
    %v765 = vpack.c.b16 %v641, %v639
    %v766 = vpack.c.b16 %v644, %v642
    %v767 = vpack.c.b16 %v645, %v643
    %v768 = vpack.c.b16 %v648, %v646
    %v769 = vpack.c.b16 %v649, %v647
    %v770 = vpack.c.b16 %v652, %v650
    %v771 = vpack.c.b16 %v653, %v651
    %v772 = vpack.c.b16 %v656, %v654
    %v773 = vpack.c.b16 %v657, %v655
    %v774 = vpack.c.b16 %v660, %v658
    %v775 = vpack.c.b16 %v661, %v659
    %v776 = vpack.c.b16 %v664, %v662
    %v777 = vpack.c.b16 %v665, %v663
    %v778 = vpack.c.b16 %v668, %v666
    %v779 = vpack.c.b16 %v669, %v667
    %v780 = vpack.c.b16 %v672, %v670
    %v781 = vpack.c.b16 %v673, %v671
    %v782 = vpack.c.b16 %v676, %v674
    %v783 = vpack.c.b16 %v677, %v675
    %v784 = vpack.c.b16 %v680, %v678
    %v785 = vpack.c.b16 %v681, %v679
    %v786 = vpack.c.b16 %v684, %v682
    %v787 = vpack.c.b16 %v685, %v683
    %v788 = vpack.c.b16 %v688, %v686
    %v789 = vpack.c.b16 %v689, %v687
    %v790 = vpack.c.b16 %v692, %v690
    %v791 = vpack.c.b16 %v693, %v691
    %vm890 = vcmask 130048
    %v892 = vsel %vm890, %v203, 0
    %894 = vmatprep.subr.bf16.mxu0 %v695
    %895 = vmatpush1.bf16.msra.mxu0 %v694
    %896 = vmatprep.subr.bf16.mxu0 %v697
    %897 = vmatpush1.bf16.msra.mxu0 %v696
    %898 = vmatprep.subr.bf16.mxu0 %v699
    %899 = vmatpush1.bf16.msra.mxu0 %v698
    %900 = vmatprep.subr.bf16.mxu0 %v701
    %901 = vmatpush1.bf16.msra.mxu0 %v700
    %902 = vmatprep.subr.bf16.mxu0 %v703
    %903 = vmatpush1.bf16.msra.mxu0 %v702
    %904 = vmatprep.subr.bf16.mxu0 %v705
    %905 = vmatpush1.bf16.msra.mxu0 %v704
    %906 = vmatprep.subr.bf16.mxu0 %v707
    %907 = vmatpush1.bf16.msra.mxu0 %v706
    %908 = vmatprep.subr.bf16.mxu0 %v709
    %909 = vmatpush1.bf16.msra.mxu0 %v708
    %910 = vmatprep.subr.bf16.mxu0 %v711
    %911 = vmatpush1.bf16.msra.mxu0 %v710
    %912 = vmatprep.subr.bf16.mxu0 %v713
    %913 = vmatpush1.bf16.msra.mxu0 %v712
    %914 = vmatprep.subr.bf16.mxu0 %v715
    %915 = vmatpush1.bf16.msra.mxu0 %v714
    %916 = vmatprep.subr.bf16.mxu0 %v717
    %917 = vmatpush1.bf16.msra.mxu0 %v716
    %918 = vmatprep.subr.bf16.mxu0 %v719
    %919 = vmatpush1.bf16.msra.mxu0 %v718
    %920 = vmatprep.subr.bf16.mxu0 %v721
    %921 = vmatpush1.bf16.msra.mxu0 %v720
    %922 = vmatprep.subr.bf16.mxu0 %v723
    %923 = vmatpush1.bf16.msra.mxu0 %v722
    %924 = vmatprep.subr.bf16.mxu0 %v725
    %925 = vmatpush1.bf16.msra.mxu0 %v724
    %926 = vmatprep.mubr.bf16.mxu0 %v198
    %927 = vmatmul.mubr.bf16.gmra.mrb[0].mxu0 %v197
    %v928 = vpop.f32.mrb[0].mxu0
    %v929 = vadd.f32 0.0, %v928
    %v930 = vpop.f32.mrb[0].mxu0
    %v931 = vadd.f32 0.0, %v930
    %v932 = vpop.f32.mrb[0].mxu0
    %v933 = vpop.f32.mrb[0].mxu0
    %934 = vdwg.mxu0
    %935 = vmatprep.subr.bf16.mxu0 %v727
    %936 = vmatpush1.bf16.msra.mxu0 %v726
    %937 = vmatprep.subr.bf16.mxu0 %v729
    %938 = vmatpush1.bf16.msra.mxu0 %v728
    %939 = vmatprep.subr.bf16.mxu0 %v731
    %940 = vmatpush1.bf16.msra.mxu0 %v730
    %941 = vmatprep.subr.bf16.mxu0 %v733
    %942 = vmatpush1.bf16.msra.mxu0 %v732
    %943 = vmatprep.subr.bf16.mxu0 %v735
    %944 = vmatpush1.bf16.msra.mxu0 %v734
    %945 = vmatprep.subr.bf16.mxu0 %v737
    %946 = vmatpush1.bf16.msra.mxu0 %v736
    %947 = vmatprep.subr.bf16.mxu0 %v739
    %948 = vmatpush1.bf16.msra.mxu0 %v738
    %949 = vmatprep.subr.bf16.mxu0 %v741
    %950 = vmatpush1.bf16.msra.mxu0 %v740
    %951 = vmatprep.subr.bf16.mxu0 %v743
    %952 = vmatpush1.bf16.msra.mxu0 %v742
    %953 = vmatprep.subr.bf16.mxu0 %v745
    %954 = vmatpush1.bf16.msra.mxu0 %v744
    %955 = vmatprep.subr.bf16.mxu0 %v747
    %956 = vmatpush1.bf16.msra.mxu0 %v746
    %957 = vmatprep.subr.bf16.mxu0 %v749
    %958 = vmatpush1.bf16.msra.mxu0 %v748
    %959 = vmatprep.subr.bf16.mxu0 %v751
    %960 = vmatpush1.bf16.msra.mxu0 %v750
    %961 = vmatprep.subr.bf16.mxu0 %v753
    %962 = vmatpush1.bf16.msra.mxu0 %v752
    %963 = vmatprep.subr.bf16.mxu0 %v755
    %964 = vmatpush1.bf16.msra.mxu0 %v754
    %965 = vmatprep.subr.bf16.mxu0 %v757
    %966 = vmatpush1.bf16.msra.mxu0 %v756
    %967 = vmatprep.mubr.bf16.mxu0 %v200
    %968 = vmatmul.mubr.bf16.gmra.mrb[0].mxu0 %v199
    %v969 = vpop.f32.mrb[0].mxu0
    %v970 = vadd.f32 %v929, %v969
    %v971 = vpop.f32.mrb[0].mxu0
    %v972 = vadd.f32 %v931, %v971
    %v973 = vpop.f32.mrb[0].mxu0
    %v974 = vpop.f32.mrb[0].mxu0
    %975 = vdwg.mxu0
    %976 = vmatprep.subr.bf16.mxu0 %v759
    %977 = vmatpush1.bf16.msra.mxu0 %v758
    %978 = vmatprep.subr.bf16.mxu0 %v761
    %979 = vmatpush1.bf16.msra.mxu0 %v760
    %980 = vmatprep.subr.bf16.mxu0 %v763
    %981 = vmatpush1.bf16.msra.mxu0 %v762
    %982 = vmatprep.subr.bf16.mxu0 %v765
    %983 = vmatpush1.bf16.msra.mxu0 %v764
    %984 = vmatprep.subr.bf16.mxu0 %v767
    %985 = vmatpush1.bf16.msra.mxu0 %v766
    %986 = vmatprep.subr.bf16.mxu0 %v769
    %987 = vmatpush1.bf16.msra.mxu0 %v768
    %988 = vmatprep.subr.bf16.mxu0 %v771
    %989 = vmatpush1.bf16.msra.mxu0 %v770
    %990 = vmatprep.subr.bf16.mxu0 %v773
    %991 = vmatpush1.bf16.msra.mxu0 %v772
    %992 = vmatprep.subr.bf16.mxu0 %v775
    %993 = vmatpush1.bf16.msra.mxu0 %v774
    %994 = vmatprep.subr.bf16.mxu0 %v777
    %995 = vmatpush1.bf16.msra.mxu0 %v776
    %996 = vmatprep.subr.bf16.mxu0 %v779
    %997 = vmatpush1.bf16.msra.mxu0 %v778
    %998 = vmatprep.subr.bf16.mxu0 %v781
    %999 = vmatpush1.bf16.msra.mxu0 %v780
    %1000 = vmatprep.subr.bf16.mxu0 %v783
    %1001 = vmatpush1.bf16.msra.mxu0 %v782
    %1002 = vmatprep.subr.bf16.mxu0 %v785
    %1003 = vmatpush1.bf16.msra.mxu0 %v784
    %1004 = vmatprep.subr.bf16.mxu0 %v787
    %1005 = vmatpush1.bf16.msra.mxu0 %v786
    %1006 = vmatprep.subr.bf16.mxu0 %v789
    %1007 = vmatpush1.bf16.msra.mxu0 %v788
    %1008 = vmatprep.mubr.bf16.mxu0 %v202
    %1009 = vmatmul.mubr.bf16.gmra.mrb[0].mxu0 %v201
    %v1010 = vpop.f32.mrb[0].mxu0
    %v1011 = vadd.f32 %v970, %v1010
    %v1012 = vpop.f32.mrb[0].mxu0
    %v1013 = vadd.f32 %v972, %v1012
    %v1014 = vpop.f32.mrb[0].mxu0
    %v1015 = vpop.f32.mrb[0].mxu0
    %1016 = vdwg.mxu0
    %1017 = vmatprep.subr.bf16.mxu0 %v791
    %1018 = vmatpush1.bf16.msra.mxu0 %v790
    %1019 = vmatprep.subr.bf16.mxu0 0
    %1020 = vmatpush1.bf16.msra.mxu0 0
    %1021 = vmatprep.subr.bf16.mxu0 0
    %1022 = vmatpush1.bf16.msra.mxu0 0
    %1023 = vmatprep.subr.bf16.mxu0 0
    %1024 = vmatpush1.bf16.msra.mxu0 0
    %1025 = vmatprep.subr.bf16.mxu0 0
    %1026 = vmatpush1.bf16.msra.mxu0 0
    %1027 = vmatprep.subr.bf16.mxu0 0
    %1028 = vmatpush1.bf16.msra.mxu0 0
    %1029 = vmatprep.subr.bf16.mxu0 0
    %1030 = vmatpush1.bf16.msra.mxu0 0
    %1031 = vmatprep.subr.bf16.mxu0 0
    %1032 = vmatpush1.bf16.msra.mxu0 0
    %1033 = vmatprep.subr.bf16.mxu0 0
    %1034 = vmatpush1.bf16.msra.mxu0 0
    %1035 = vmatprep.subr.bf16.mxu0 0
    %1036 = vmatpush1.bf16.msra.mxu0 0
    %1037 = vmatprep.subr.bf16.mxu0 0
    %1038 = vmatpush1.bf16.msra.mxu0 0
    %1039 = vmatprep.subr.bf16.mxu0 0
    %1040 = vmatpush1.bf16.msra.mxu0 0
    %1041 = vmatprep.subr.bf16.mxu0 0
    %1042 = vmatpush1.bf16.msra.mxu0 0
    %1043 = vmatprep.subr.bf16.mxu0 0
    %1044 = vmatpush1.bf16.msra.mxu0 0
    %1045 = vmatprep.subr.bf16.mxu0 0
    %1046 = vmatpush1.bf16.msra.mxu0 0
    %1047 = vmatprep.subr.bf16.mxu0 0
    %1048 = vmatpush1.bf16.msra.mxu0 0
    %1049 = vmatprep.mubr.bf16.mxu0 0
    %1050 = vmatmul.mubr.bf16.gmra.mrb[0].mxu0 %v892
    %v1051 = vpop.f32.mrb[0].mxu0
    %v1052 = vadd.f32 %v1011, %v1051
    %v1053 = vpop.f32.mrb[0].mxu0
    %v1054 = vadd.f32 %v1013, %v1053
    %v1055 = vpop.f32.mrb[0].mxu0
    %v1056 = vpop.f32.mrb[0].mxu0
    %1057 = vdwg.mxu0
    %v1059 = vsel %vm890, %v182, 0
    %1061 = vmatprep.subr.bf16.mxu0 %v695
    %1062 = vmatpush1.bf16.msra.mxu0 %v694
    %1063 = vmatprep.subr.bf16.mxu0 %v697
    %1064 = vmatpush1.bf16.msra.mxu0 %v696
    %1065 = vmatprep.subr.bf16.mxu0 %v699
    %1066 = vmatpush1.bf16.msra.mxu0 %v698
    %1067 = vmatprep.subr.bf16.mxu0 %v701
    %1068 = vmatpush1.bf16.msra.mxu0 %v700
    %1069 = vmatprep.subr.bf16.mxu0 %v703
    %1070 = vmatpush1.bf16.msra.mxu0 %v702
    %1071 = vmatprep.subr.bf16.mxu0 %v705
    %1072 = vmatpush1.bf16.msra.mxu0 %v704
    %1073 = vmatprep.subr.bf16.mxu0 %v707
    %1074 = vmatpush1.bf16.msra.mxu0 %v706
    %1075 = vmatprep.subr.bf16.mxu0 %v709
    %1076 = vmatpush1.bf16.msra.mxu0 %v708
    %1077 = vmatprep.subr.bf16.mxu0 %v711
    %1078 = vmatpush1.bf16.msra.mxu0 %v710
    %1079 = vmatprep.subr.bf16.mxu0 %v713
    %1080 = vmatpush1.bf16.msra.mxu0 %v712
    %1081 = vmatprep.subr.bf16.mxu0 %v715
    %1082 = vmatpush1.bf16.msra.mxu0 %v714
    %1083 = vmatprep.subr.bf16.mxu0 %v717
    %1084 = vmatpush1.bf16.msra.mxu0 %v716
    %1085 = vmatprep.subr.bf16.mxu0 %v719
    %1086 = vmatpush1.bf16.msra.mxu0 %v718
    %1087 = vmatprep.subr.bf16.mxu0 %v721
    %1088 = vmatpush1.bf16.msra.mxu0 %v720
    %1089 = vmatprep.subr.bf16.mxu0 %v723
    %1090 = vmatpush1.bf16.msra.mxu0 %v722
    %1091 = vmatprep.subr.bf16.mxu0 %v725
    %1092 = vmatpush1.bf16.msra.mxu0 %v724
    %1093 = vmatprep.mubr.bf16.mxu0 %v177
    %1094 = vmatmul.mubr.bf16.gmra.mrb[0].mxu0 %v176
    %v1095 = vpop.f32.mrb[0].mxu0
    %v1096 = vadd.f32 %v1052, %v1095
    %v1097 = vpop.f32.mrb[0].mxu0
    %v1098 = vadd.f32 %v1054, %v1097
    %v1099 = vpop.f32.mrb[0].mxu0
    %v1100 = vpop.f32.mrb[0].mxu0
    %1101 = vdwg.mxu0
    %1102 = vmatprep.subr.bf16.mxu0 %v727
    %1103 = vmatpush1.bf16.msra.mxu0 %v726
    %1104 = vmatprep.subr.bf16.mxu0 %v729
    %1105 = vmatpush1.bf16.msra.mxu0 %v728
    %1106 = vmatprep.subr.bf16.mxu0 %v731
    %1107 = vmatpush1.bf16.msra.mxu0 %v730
    %1108 = vmatprep.subr.bf16.mxu0 %v733
    %1109 = vmatpush1.bf16.msra.mxu0 %v732
    %1110 = vmatprep.subr.bf16.mxu0 %v735
    %1111 = vmatpush1.bf16.msra.mxu0 %v734
    %1112 = vmatprep.subr.bf16.mxu0 %v737
    %1113 = vmatpush1.bf16.msra.mxu0 %v736
    %1114 = vmatprep.subr.bf16.mxu0 %v739
    %1115 = vmatpush1.bf16.msra.mxu0 %v738
    %1116 = vmatprep.subr.bf16.mxu0 %v741
    %1117 = vmatpush1.bf16.msra.mxu0 %v740
    %1118 = vmatprep.subr.bf16.mxu0 %v743
    %1119 = vmatpush1.bf16.msra.mxu0 %v742
    %1120 = vmatprep.subr.bf16.mxu0 %v745
    %1121 = vmatpush1.bf16.msra.mxu0 %v744
    %1122 = vmatprep.subr.bf16.mxu0 %v747
    %1123 = vmatpush1.bf16.msra.mxu0 %v746
    %1124 = vmatprep.subr.bf16.mxu0 %v749
    %1125 = vmatpush1.bf16.msra.mxu0 %v748
    %1126 = vmatprep.subr.bf16.mxu0 %v751
    %1127 = vmatpush1.bf16.msra.mxu0 %v750
    %1128 = vmatprep.subr.bf16.mxu0 %v753
    %1129 = vmatpush1.bf16.msra.mxu0 %v752
    %1130 = vmatprep.subr.bf16.mxu0 %v755
    %1131 = vmatpush1.bf16.msra.mxu0 %v754
    %1132 = vmatprep.subr.bf16.mxu0 %v757
    %1133 = vmatpush1.bf16.msra.mxu0 %v756
    %1134 = vmatprep.mubr.bf16.mxu0 %v179
    %1135 = vmatmul.mubr.bf16.gmra.mrb[0].mxu0 %v178
    %v1136 = vpop.f32.mrb[0].mxu0
    %v1137 = vadd.f32 %v1096, %v1136
    %v1138 = vpop.f32.mrb[0].mxu0
    %v1139 = vadd.f32 %v1098, %v1138
    %v1140 = vpop.f32.mrb[0].mxu0
    %v1141 = vpop.f32.mrb[0].mxu0
    %1142 = vdwg.mxu0
    %1143 = vmatprep.subr.bf16.mxu0 %v759
    %1144 = vmatpush1.bf16.msra.mxu0 %v758
    %1145 = vmatprep.subr.bf16.mxu0 %v761
    %1146 = vmatpush1.bf16.msra.mxu0 %v760
    %1147 = vmatprep.subr.bf16.mxu0 %v763
    %1148 = vmatpush1.bf16.msra.mxu0 %v762
    %1149 = vmatprep.subr.bf16.mxu0 %v765
    %1150 = vmatpush1.bf16.msra.mxu0 %v764
    %1151 = vmatprep.subr.bf16.mxu0 %v767
    %1152 = vmatpush1.bf16.msra.mxu0 %v766
    %1153 = vmatprep.subr.bf16.mxu0 %v769
    %1154 = vmatpush1.bf16.msra.mxu0 %v768
    %1155 = vmatprep.subr.bf16.mxu0 %v771
    %1156 = vmatpush1.bf16.msra.mxu0 %v770
    %1157 = vmatprep.subr.bf16.mxu0 %v773
    %1158 = vmatpush1.bf16.msra.mxu0 %v772
    %1159 = vmatprep.subr.bf16.mxu0 %v775
    %1160 = vmatpush1.bf16.msra.mxu0 %v774
    %1161 = vmatprep.subr.bf16.mxu0 %v777
    %1162 = vmatpush1.bf16.msra.mxu0 %v776
    %1163 = vmatprep.subr.bf16.mxu0 %v779
    %1164 = vmatpush1.bf16.msra.mxu0 %v778
    %1165 = vmatprep.subr.bf16.mxu0 %v781
    %1166 = vmatpush1.bf16.msra.mxu0 %v780
    %1167 = vmatprep.subr.bf16.mxu0 %v783
    %1168 = vmatpush1.bf16.msra.mxu0 %v782
    %1169 = vmatprep.subr.bf16.mxu0 %v785
    %1170 = vmatpush1.bf16.msra.mxu0 %v784
    %1171 = vmatprep.subr.bf16.mxu0 %v787
    %1172 = vmatpush1.bf16.msra.mxu0 %v786
    %1173 = vmatprep.subr.bf16.mxu0 %v789
    %1174 = vmatpush1.bf16.msra.mxu0 %v788
    %1175 = vmatprep.mubr.bf16.mxu0 %v181
    %1176 = vmatmul.mubr.bf16.gmra.mrb[0].mxu0 %v180
    %v1177 = vpop.f32.mrb[0].mxu0
    %v1178 = vadd.f32 %v1137, %v1177
    %v1179 = vpop.f32.mrb[0].mxu0
    %v1180 = vadd.f32 %v1139, %v1179
    %v1181 = vpop.f32.mrb[0].mxu0
    %v1182 = vpop.f32.mrb[0].mxu0
    %1183 = vdwg.mxu0
    %1184 = vmatprep.subr.bf16.mxu0 %v791
    %1185 = vmatpush1.bf16.msra.mxu0 %v790
    %1186 = vmatprep.subr.bf16.mxu0 0
    %1187 = vmatpush1.bf16.msra.mxu0 0
    %1188 = vmatprep.subr.bf16.mxu0 0
    %1189 = vmatpush1.bf16.msra.mxu0 0
    %1190 = vmatprep.subr.bf16.mxu0 0
    %1191 = vmatpush1.bf16.msra.mxu0 0
    %1192 = vmatprep.subr.bf16.mxu0 0
    %1193 = vmatpush1.bf16.msra.mxu0 0
    %1194 = vmatprep.subr.bf16.mxu0 0
    %1195 = vmatpush1.bf16.msra.mxu0 0
    %1196 = vmatprep.subr.bf16.mxu0 0
    %1197 = vmatpush1.bf16.msra.mxu0 0
    %1198 = vmatprep.subr.bf16.mxu0 0
    %1199 = vmatpush1.bf16.msra.mxu0 0
    %1200 = vmatprep.subr.bf16.mxu0 0
    %1201 = vmatpush1.bf16.msra.mxu0 0
    %1202 = vmatprep.subr.bf16.mxu0 0
    %1203 = vmatpush1.bf16.msra.mxu0 0
    %1204 = vmatprep.subr.bf16.mxu0 0
    %1205 = vmatpush1.bf16.msra.mxu0 0
    %1206 = vmatprep.subr.bf16.mxu0 0
    %1207 = vmatpush1.bf16.msra.mxu0 0
    %1208 = vmatprep.subr.bf16.mxu0 0
    %1209 = vmatpush1.bf16.msra.mxu0 0
    %1210 = vmatprep.subr.bf16.mxu0 0
    %1211 = vmatpush1.bf16.msra.mxu0 0
    %1212 = vmatprep.subr.bf16.mxu0 0
    %1213 = vmatpush1.bf16.msra.mxu0 0
    %1214 = vmatprep.subr.bf16.mxu0 0
    %1215 = vmatpush1.bf16.msra.mxu0 0
    %1216 = vmatprep.mubr.bf16.mxu0 0
    %1217 = vmatmul.mubr.bf16.gmra.mrb[0].mxu0 %v1059
    %v1218 = vpop.f32.mrb[0].mxu0
    %v1219 = vadd.f32 %v1178, %v1218
    %v1220 = vpop.f32.mrb[0].mxu0
    %v1221 = vadd.f32 %v1180, %v1220
    %v1222 = vpop.f32.mrb[0].mxu0
    %v1223 = vpop.f32.mrb[0].mxu0
    %1224 = vdwg.mxu0
    %v1323 = vunpack.c.l.b16 %v302
    %v1324 = vunpack.c.h.b16 %v302
    %v1325 = vunpack.c.l.b16 %v303
    %v1326 = vunpack.c.h.b16 %v303
    %v1327 = vunpack.c.l.b16 %v304
    %v1328 = vunpack.c.h.b16 %v304
    %v1329 = vunpack.c.l.b16 %v305
    %v1330 = vunpack.c.h.b16 %v305
    %v1331 = vunpack.c.l.b16 %v306
    %v1332 = vunpack.c.h.b16 %v306
    %v1333 = vunpack.c.l.b16 %v307
    %v1334 = vunpack.c.h.b16 %v307
    %v1335 = vunpack.c.l.b16 %v308
    %v1336 = vunpack.c.h.b16 %v308
    %v1337 = vunpack.c.l.b16 %v309
    %v1338 = vunpack.c.h.b16 %v309
    %v1339 = vunpack.c.l.b16 %v310
    %v1340 = vunpack.c.h.b16 %v310
    %v1341 = vunpack.c.l.b16 %v311
    %v1342 = vunpack.c.h.b16 %v311
    %v1343 = vunpack.c.l.b16 %v312
    %v1344 = vunpack.c.h.b16 %v312
    %v1345 = vunpack.c.l.b16 %v313
    %v1346 = vunpack.c.h.b16 %v313
    %v1347 = vunpack.c.l.b16 %v314
    %v1348 = vunpack.c.h.b16 %v314
    %v1349 = vunpack.c.l.b16 %v315
    %v1350 = vunpack.c.h.b16 %v315
    %v1351 = vunpack.c.l.b16 %v316
    %v1352 = vunpack.c.h.b16 %v316
    %v1353 = vunpack.c.l.b16 %v317
    %v1354 = vunpack.c.h.b16 %v317
    %v1355 = vunpack.c.l.b16 %v318
    %v1356 = vunpack.c.h.b16 %v318
    %v1357 = vunpack.c.l.b16 %v319
    %v1358 = vunpack.c.h.b16 %v319
    %v1359 = vunpack.c.l.b16 %v320
    %v1360 = vunpack.c.h.b16 %v320
    %v1361 = vunpack.c.l.b16 %v321
    %v1362 = vunpack.c.h.b16 %v321
    %v1363 = vunpack.c.l.b16 %v322
    %v1364 = vunpack.c.h.b16 %v322
    %v1365 = vunpack.c.l.b16 %v323
    %v1366 = vunpack.c.h.b16 %v323
    %v1367 = vunpack.c.l.b16 %v324
    %v1368 = vunpack.c.h.b16 %v324
    %v1369 = vunpack.c.l.b16 %v325
    %v1370 = vunpack.c.h.b16 %v325
    %v1371 = vunpack.c.l.b16 %v326
    %v1372 = vunpack.c.h.b16 %v326
    %v1373 = vunpack.c.l.b16 %v327
    %v1374 = vunpack.c.h.b16 %v327
    %v1375 = vunpack.c.l.b16 %v328
    %v1376 = vunpack.c.h.b16 %v328
    %v1377 = vunpack.c.l.b16 %v329
    %v1378 = vunpack.c.h.b16 %v329
    %v1379 = vunpack.c.l.b16 %v330
    %v1380 = vunpack.c.h.b16 %v330
    %v1381 = vunpack.c.l.b16 %v331
    %v1382 = vunpack.c.h.b16 %v331
    %v1383 = vunpack.c.l.b16 %v332
    %v1384 = vunpack.c.h.b16 %v332
    %v1385 = vunpack.c.l.b16 %v333
    %v1386 = vunpack.c.h.b16 %v333
    %v1387 = vunpack.c.l.b16 %v334
    %v1388 = vunpack.c.h.b16 %v334
    %v1389 = vunpack.c.l.b16 %v335
    %v1390 = vunpack.c.h.b16 %v335
    %v1391 = vunpack.c.l.b16 %v336
    %v1392 = vunpack.c.h.b16 %v336
    %v1393 = vunpack.c.l.b16 %v337
    %v1394 = vunpack.c.h.b16 %v337
    %v1395 = vunpack.c.l.b16 %v338
    %v1396 = vunpack.c.h.b16 %v338
    %v1397 = vunpack.c.l.b16 %v339
    %v1398 = vunpack.c.h.b16 %v339
    %v1399 = vunpack.c.l.b16 %v340
    %v1400 = vunpack.c.h.b16 %v340
    %v1401 = vunpack.c.l.b16 %v341
    %v1402 = vunpack.c.h.b16 %v341
    %v1403 = vunpack.c.l.b16 %v342
    %v1404 = vunpack.c.h.b16 %v342
    %v1405 = vunpack.c.l.b16 %v343
    %v1406 = vunpack.c.h.b16 %v343
    %v1407 = vunpack.c.l.b16 %v344
    %v1408 = vunpack.c.h.b16 %v344
    %v1409 = vunpack.c.l.b16 %v345
    %v1410 = vunpack.c.h.b16 %v345
    %v1411 = vunpack.c.l.b16 %v346
    %v1412 = vunpack.c.h.b16 %v346
    %v1413 = vunpack.c.l.b16 %v347
    %v1414 = vunpack.c.h.b16 %v347
    %v1415 = vunpack.c.l.b16 %v348
    %v1416 = vunpack.c.h.b16 %v348
    %v1417 = vunpack.c.l.b16 %v349
    %v1418 = vunpack.c.h.b16 %v349
    %v1419 = vunpack.c.l.b16 %v350
    %v1420 = vunpack.c.h.b16 %v350
    %v1421 = vunpack.c.l.b16 %v351
    %v1422 = vunpack.c.h.b16 %v351
    %v1423 = vunpack.c.l.b16 %v352
    %v1424 = vunpack.c.h.b16 %v352
    %v1425 = vunpack.c.l.b16 %v353
    %v1426 = vunpack.c.h.b16 %v353
    %v1427 = vunpack.c.l.b16 %v354
    %v1428 = vunpack.c.h.b16 %v354
    %v1429 = vunpack.c.l.b16 %v355
    %v1430 = vunpack.c.h.b16 %v355
    %v1431 = vunpack.c.l.b16 %v356
    %v1432 = vunpack.c.h.b16 %v356
    %v1433 = vunpack.c.l.b16 %v357
    %v1434 = vunpack.c.h.b16 %v357
    %v1435 = vunpack.c.l.b16 %v358
    %v1436 = vunpack.c.h.b16 %v358
    %v1437 = vunpack.c.l.b16 %v359
    %v1438 = vunpack.c.h.b16 %v359
    %v1439 = vunpack.c.l.b16 %v360
    %v1440 = vunpack.c.h.b16 %v360
    %v1441 = vunpack.c.l.b16 %v361
    %v1442 = vunpack.c.h.b16 %v361
    %v1443 = vunpack.c.l.b16 %v362
    %v1444 = vunpack.c.h.b16 %v362
    %v1445 = vunpack.c.l.b16 %v363
    %v1446 = vunpack.c.h.b16 %v363
    %v1447 = vunpack.c.l.b16 %v364
    %v1448 = vunpack.c.h.b16 %v364
    %v1449 = vunpack.c.l.b16 %v365
    %v1450 = vunpack.c.h.b16 %v365
    %v1451 = vunpack.c.l.b16 %v366
    %v1452 = vunpack.c.h.b16 %v366
    %v1453 = vunpack.c.l.b16 %v367
    %v1454 = vunpack.c.h.b16 %v367
    %v1455 = vunpack.c.l.b16 %v368
    %v1456 = vunpack.c.h.b16 %v368
    %v1457 = vunpack.c.l.b16 %v369
    %v1458 = vunpack.c.h.b16 %v369
    %v1459 = vunpack.c.l.b16 %v370
    %v1460 = vunpack.c.h.b16 %v370
    %v1461 = vunpack.c.l.b16 %v371
    %v1462 = vunpack.c.h.b16 %v371
    %v1463 = vunpack.c.l.b16 %v372
    %v1464 = vunpack.c.h.b16 %v372
    %v1465 = vunpack.c.l.b16 %v373
    %v1466 = vunpack.c.h.b16 %v373
    %v1467 = vunpack.c.l.b16 %v374
    %v1468 = vunpack.c.h.b16 %v374
    %v1469 = vunpack.c.l.b16 %v375
    %v1470 = vunpack.c.h.b16 %v375
    %v1471 = vunpack.c.l.b16 %v376
    %v1472 = vunpack.c.h.b16 %v376
    %v1473 = vunpack.c.l.b16 %v377
    %v1474 = vunpack.c.h.b16 %v377
    %v1475 = vunpack.c.l.b16 %v378
    %v1476 = vunpack.c.h.b16 %v378
    %v1477 = vunpack.c.l.b16 %v379
    %v1478 = vunpack.c.h.b16 %v379
    %v1479 = vunpack.c.l.b16 %v380
    %v1480 = vunpack.c.h.b16 %v380
    %v1481 = vunpack.c.l.b16 %v381
    %v1482 = vunpack.c.h.b16 %v381
    %v1483 = vunpack.c.l.b16 %v382
    %v1484 = vunpack.c.h.b16 %v382
    %v1485 = vunpack.c.l.b16 %v383
    %v1486 = vunpack.c.h.b16 %v383
    %v1487 = vunpack.c.l.b16 %v384
    %v1488 = vunpack.c.h.b16 %v384
    %v1489 = vunpack.c.l.b16 %v385
    %v1490 = vunpack.c.h.b16 %v385
    %v1491 = vunpack.c.l.b16 %v386
    %v1492 = vunpack.c.h.b16 %v386
    %v1493 = vunpack.c.l.b16 %v387
    %v1494 = vunpack.c.h.b16 %v387
    %v1495 = vunpack.c.l.b16 %v388
    %v1496 = vunpack.c.h.b16 %v388
    %v1497 = vunpack.c.l.b16 %v389
    %v1498 = vunpack.c.h.b16 %v389
    %v1499 = vunpack.c.l.b16 %v390
    %v1500 = vunpack.c.h.b16 %v390
    %v1501 = vunpack.c.l.b16 %v391
    %v1502 = vunpack.c.h.b16 %v391
    %v1503 = vunpack.c.l.b16 %v392
    %v1504 = vunpack.c.h.b16 %v392
    %v1505 = vunpack.c.l.b16 %v393
    %v1506 = vunpack.c.h.b16 %v393
    %v1507 = vunpack.c.l.b16 %v394
    %v1508 = vunpack.c.h.b16 %v394
    %v1509 = vunpack.c.l.b16 %v395
    %v1510 = vunpack.c.h.b16 %v395
    %v1511 = vunpack.c.l.b16 %v396
    %v1512 = vunpack.c.h.b16 %v396
    %v1513 = vunpack.c.l.b16 %v397
    %v1514 = vunpack.c.h.b16 %v397
    %v1515 = vunpack.c.l.b16 %v398
    %v1516 = vunpack.c.h.b16 %v398
    %v1517 = vunpack.c.l.b16 %v399
    %v1518 = vunpack.c.h.b16 %v399
    %v1519 = vpack.c.b16 %v1325, %v1323
    %v1520 = vpack.c.b16 %v1326, %v1324
    %v1521 = vpack.c.b16 %v1329, %v1327
    %v1522 = vpack.c.b16 %v1330, %v1328
    %v1523 = vpack.c.b16 %v1333, %v1331
    %v1524 = vpack.c.b16 %v1334, %v1332
    %v1525 = vpack.c.b16 %v1337, %v1335
    %v1526 = vpack.c.b16 %v1338, %v1336
    %v1527 = vpack.c.b16 %v1341, %v1339
    %v1528 = vpack.c.b16 %v1342, %v1340
    %v1529 = vpack.c.b16 %v1345, %v1343
    %v1530 = vpack.c.b16 %v1346, %v1344
    %v1531 = vpack.c.b16 %v1349, %v1347
    %v1532 = vpack.c.b16 %v1350, %v1348
    %v1533 = vpack.c.b16 %v1353, %v1351
    %v1534 = vpack.c.b16 %v1354, %v1352
    %v1535 = vpack.c.b16 %v1357, %v1355
    %v1536 = vpack.c.b16 %v1358, %v1356
    %v1537 = vpack.c.b16 %v1361, %v1359
    %v1538 = vpack.c.b16 %v1362, %v1360
    %v1539 = vpack.c.b16 %v1365, %v1363
    %v1540 = vpack.c.b16 %v1366, %v1364
    %v1541 = vpack.c.b16 %v1369, %v1367
    %v1542 = vpack.c.b16 %v1370, %v1368
    %v1543 = vpack.c.b16 %v1373, %v1371
    %v1544 = vpack.c.b16 %v1374, %v1372
    %v1545 = vpack.c.b16 %v1377, %v1375
    %v1546 = vpack.c.b16 %v1378, %v1376
    %v1547 = vpack.c.b16 %v1381, %v1379
    %v1548 = vpack.c.b16 %v1382, %v1380
    %v1549 = vpack.c.b16 %v1385, %v1383
    %v1550 = vpack.c.b16 %v1386, %v1384
    %v1551 = vpack.c.b16 %v1389, %v1387
    %v1552 = vpack.c.b16 %v1390, %v1388
    %v1553 = vpack.c.b16 %v1393, %v1391
    %v1554 = vpack.c.b16 %v1394, %v1392
    %v1555 = vpack.c.b16 %v1397, %v1395
    %v1556 = vpack.c.b16 %v1398, %v1396
    %v1557 = vpack.c.b16 %v1401, %v1399
    %v1558 = vpack.c.b16 %v1402, %v1400
    %v1559 = vpack.c.b16 %v1405, %v1403
    %v1560 = vpack.c.b16 %v1406, %v1404
    %v1561 = vpack.c.b16 %v1409, %v1407
    %v1562 = vpack.c.b16 %v1410, %v1408
    %v1563 = vpack.c.b16 %v1413, %v1411
    %v1564 = vpack.c.b16 %v1414, %v1412
    %v1565 = vpack.c.b16 %v1417, %v1415
    %v1566 = vpack.c.b16 %v1418, %v1416
    %v1567 = vpack.c.b16 %v1421, %v1419
    %v1568 = vpack.c.b16 %v1422, %v1420
    %v1569 = vpack.c.b16 %v1425, %v1423
    %v1570 = vpack.c.b16 %v1426, %v1424
    %v1571 = vpack.c.b16 %v1429, %v1427
    %v1572 = vpack.c.b16 %v1430, %v1428
    %v1573 = vpack.c.b16 %v1433, %v1431
    %v1574 = vpack.c.b16 %v1434, %v1432
    %v1575 = vpack.c.b16 %v1437, %v1435
    %v1576 = vpack.c.b16 %v1438, %v1436
    %v1577 = vpack.c.b16 %v1441, %v1439
    %v1578 = vpack.c.b16 %v1442, %v1440
    %v1579 = vpack.c.b16 %v1445, %v1443
    %v1580 = vpack.c.b16 %v1446, %v1444
    %v1581 = vpack.c.b16 %v1449, %v1447
    %v1582 = vpack.c.b16 %v1450, %v1448
    %v1583 = vpack.c.b16 %v1453, %v1451
    %v1584 = vpack.c.b16 %v1454, %v1452
    %v1585 = vpack.c.b16 %v1457, %v1455
    %v1586 = vpack.c.b16 %v1458, %v1456
    %v1587 = vpack.c.b16 %v1461, %v1459
    %v1588 = vpack.c.b16 %v1462, %v1460
    %v1589 = vpack.c.b16 %v1465, %v1463
    %v1590 = vpack.c.b16 %v1466, %v1464
    %v1591 = vpack.c.b16 %v1469, %v1467
    %v1592 = vpack.c.b16 %v1470, %v1468
    %v1593 = vpack.c.b16 %v1473, %v1471
    %v1594 = vpack.c.b16 %v1474, %v1472
    %v1595 = vpack.c.b16 %v1477, %v1475
    %v1596 = vpack.c.b16 %v1478, %v1476
    %v1597 = vpack.c.b16 %v1481, %v1479
    %v1598 = vpack.c.b16 %v1482, %v1480
    %v1599 = vpack.c.b16 %v1485, %v1483
    %v1600 = vpack.c.b16 %v1486, %v1484
    %v1601 = vpack.c.b16 %v1489, %v1487
    %v1602 = vpack.c.b16 %v1490, %v1488
    %v1603 = vpack.c.b16 %v1493, %v1491
    %v1604 = vpack.c.b16 %v1494, %v1492
    %v1605 = vpack.c.b16 %v1497, %v1495
    %v1606 = vpack.c.b16 %v1498, %v1496
    %v1607 = vpack.c.b16 %v1501, %v1499
    %v1608 = vpack.c.b16 %v1502, %v1500
    %v1609 = vpack.c.b16 %v1505, %v1503
    %v1610 = vpack.c.b16 %v1506, %v1504
    %v1611 = vpack.c.b16 %v1509, %v1507
    %v1612 = vpack.c.b16 %v1510, %v1508
    %v1613 = vpack.c.b16 %v1513, %v1511
    %v1614 = vpack.c.b16 %v1514, %v1512
    %v1615 = vpack.c.b16 %v1517, %v1515
    %v1616 = vpack.c.b16 %v1518, %v1516
    %1715 = vmatprep.subr.bf16.mxu0 %v1520
    %1716 = vmatpush1.bf16.msra.mxu0 %v1519
    %1717 = vmatprep.subr.bf16.mxu0 %v1522
    %1718 = vmatpush1.bf16.msra.mxu0 %v1521
    %1719 = vmatprep.subr.bf16.mxu0 %v1524
    %1720 = vmatpush1.bf16.msra.mxu0 %v1523
    %1721 = vmatprep.subr.bf16.mxu0 %v1526
    %1722 = vmatpush1.bf16.msra.mxu0 %v1525
    %1723 = vmatprep.subr.bf16.mxu0 %v1528
    %1724 = vmatpush1.bf16.msra.mxu0 %v1527
    %1725 = vmatprep.subr.bf16.mxu0 %v1530
    %1726 = vmatpush1.bf16.msra.mxu0 %v1529
    %1727 = vmatprep.subr.bf16.mxu0 %v1532
    %1728 = vmatpush1.bf16.msra.mxu0 %v1531
    %1729 = vmatprep.subr.bf16.mxu0 %v1534
    %1730 = vmatpush1.bf16.msra.mxu0 %v1533
    %1731 = vmatprep.subr.bf16.mxu0 %v1536
    %1732 = vmatpush1.bf16.msra.mxu0 %v1535
    %1733 = vmatprep.subr.bf16.mxu0 %v1538
    %1734 = vmatpush1.bf16.msra.mxu0 %v1537
    %1735 = vmatprep.subr.bf16.mxu0 %v1540
    %1736 = vmatpush1.bf16.msra.mxu0 %v1539
    %1737 = vmatprep.subr.bf16.mxu0 %v1542
    %1738 = vmatpush1.bf16.msra.mxu0 %v1541
    %1739 = vmatprep.subr.bf16.mxu0 %v1544
    %1740 = vmatpush1.bf16.msra.mxu0 %v1543
    %1741 = vmatprep.subr.bf16.mxu0 %v1546
    %1742 = vmatpush1.bf16.msra.mxu0 %v1545
    %1743 = vmatprep.subr.bf16.mxu0 %v1548
    %1744 = vmatpush1.bf16.msra.mxu0 %v1547
    %1745 = vmatprep.subr.bf16.mxu0 %v1550
    %1746 = vmatpush1.bf16.msra.mxu0 %v1549
    %1747 = vmatprep.mubr.bf16.mxu0 %v177
    %1748 = vmatmul.mubr.bf16.gmra.mrb[0].mxu0 %v176
    %v1749 = vpop.f32.mrb[0].mxu0
    %v1750 = vadd.f32 0.0, %v1749
    %v1751 = vpop.f32.mrb[0].mxu0
    %v1752 = vadd.f32 0.0, %v1751
    %v1753 = vpop.f32.mrb[0].mxu0
    %v1754 = vpop.f32.mrb[0].mxu0
    %1755 = vdwg.mxu0
    %1756 = vmatprep.subr.bf16.mxu0 %v1552
    %1757 = vmatpush1.bf16.msra.mxu0 %v1551
    %1758 = vmatprep.subr.bf16.mxu0 %v1554
    %1759 = vmatpush1.bf16.msra.mxu0 %v1553
    %1760 = vmatprep.subr.bf16.mxu0 %v1556
    %1761 = vmatpush1.bf16.msra.mxu0 %v1555
    %1762 = vmatprep.subr.bf16.mxu0 %v1558
    %1763 = vmatpush1.bf16.msra.mxu0 %v1557
    %1764 = vmatprep.subr.bf16.mxu0 %v1560
    %1765 = vmatpush1.bf16.msra.mxu0 %v1559
    %1766 = vmatprep.subr.bf16.mxu0 %v1562
    %1767 = vmatpush1.bf16.msra.mxu0 %v1561
    %1768 = vmatprep.subr.bf16.mxu0 %v1564
    %1769 = vmatpush1.bf16.msra.mxu0 %v1563
    %1770 = vmatprep.subr.bf16.mxu0 %v1566
    %1771 = vmatpush1.bf16.msra.mxu0 %v1565
    %1772 = vmatprep.subr.bf16.mxu0 %v1568
    %1773 = vmatpush1.bf16.msra.mxu0 %v1567
    %1774 = vmatprep.subr.bf16.mxu0 %v1570
    %1775 = vmatpush1.bf16.msra.mxu0 %v1569
    %1776 = vmatprep.subr.bf16.mxu0 %v1572
    %1777 = vmatpush1.bf16.msra.mxu0 %v1571
    %1778 = vmatprep.subr.bf16.mxu0 %v1574
    %1779 = vmatpush1.bf16.msra.mxu0 %v1573
    %1780 = vmatprep.subr.bf16.mxu0 %v1576
    %1781 = vmatpush1.bf16.msra.mxu0 %v1575
    %1782 = vmatprep.subr.bf16.mxu0 %v1578
    %1783 = vmatpush1.bf16.msra.mxu0 %v1577
    %1784 = vmatprep.subr.bf16.mxu0 %v1580
    %1785 = vmatpush1.bf16.msra.mxu0 %v1579
    %1786 = vmatprep.subr.bf16.mxu0 %v1582
    %1787 = vmatpush1.bf16.msra.mxu0 %v1581
    %1788 = vmatprep.mubr.bf16.mxu0 %v179
    %1789 = vmatmul.mubr.bf16.gmra.mrb[0].mxu0 %v178
    %v1790 = vpop.f32.mrb[0].mxu0
    %v1791 = vadd.f32 %v1750, %v1790
    %v1792 = vpop.f32.mrb[0].mxu0
    %v1793 = vadd.f32 %v1752, %v1792
    %v1794 = vpop.f32.mrb[0].mxu0
    %v1795 = vpop.f32.mrb[0].mxu0
    %1796 = vdwg.mxu0
    %1797 = vmatprep.subr.bf16.mxu0 %v1584
    %1798 = vmatpush1.bf16.msra.mxu0 %v1583
    %1799 = vmatprep.subr.bf16.mxu0 %v1586
    %1800 = vmatpush1.bf16.msra.mxu0 %v1585
    %1801 = vmatprep.subr.bf16.mxu0 %v1588
    %1802 = vmatpush1.bf16.msra.mxu0 %v1587
    %1803 = vmatprep.subr.bf16.mxu0 %v1590
    %1804 = vmatpush1.bf16.msra.mxu0 %v1589
    %1805 = vmatprep.subr.bf16.mxu0 %v1592
    %1806 = vmatpush1.bf16.msra.mxu0 %v1591
    %1807 = vmatprep.subr.bf16.mxu0 %v1594
    %1808 = vmatpush1.bf16.msra.mxu0 %v1593
    %1809 = vmatprep.subr.bf16.mxu0 %v1596
    %1810 = vmatpush1.bf16.msra.mxu0 %v1595
    %1811 = vmatprep.subr.bf16.mxu0 %v1598
    %1812 = vmatpush1.bf16.msra.mxu0 %v1597
    %1813 = vmatprep.subr.bf16.mxu0 %v1600
    %1814 = vmatpush1.bf16.msra.mxu0 %v1599
    %1815 = vmatprep.subr.bf16.mxu0 %v1602
    %1816 = vmatpush1.bf16.msra.mxu0 %v1601
    %1817 = vmatprep.subr.bf16.mxu0 %v1604
    %1818 = vmatpush1.bf16.msra.mxu0 %v1603
    %1819 = vmatprep.subr.bf16.mxu0 %v1606
    %1820 = vmatpush1.bf16.msra.mxu0 %v1605
    %1821 = vmatprep.subr.bf16.mxu0 %v1608
    %1822 = vmatpush1.bf16.msra.mxu0 %v1607
    %1823 = vmatprep.subr.bf16.mxu0 %v1610
    %1824 = vmatpush1.bf16.msra.mxu0 %v1609
    %1825 = vmatprep.subr.bf16.mxu0 %v1612
    %1826 = vmatpush1.bf16.msra.mxu0 %v1611
    %1827 = vmatprep.subr.bf16.mxu0 %v1614
    %1828 = vmatpush1.bf16.msra.mxu0 %v1613
    %1829 = vmatprep.mubr.bf16.mxu0 %v181
    %1830 = vmatmul.mubr.bf16.gmra.mrb[0].mxu0 %v180
    %v1831 = vpop.f32.mrb[0].mxu0
    %v1832 = vadd.f32 %v1791, %v1831
    %v1833 = vpop.f32.mrb[0].mxu0
    %v1834 = vadd.f32 %v1793, %v1833
    %v1835 = vpop.f32.mrb[0].mxu0
    %v1836 = vpop.f32.mrb[0].mxu0
    %1837 = vdwg.mxu0
    %1838 = vmatprep.subr.bf16.mxu0 %v1616
    %1839 = vmatpush1.bf16.msra.mxu0 %v1615
    %1840 = vmatprep.subr.bf16.mxu0 0
    %1841 = vmatpush1.bf16.msra.mxu0 0
    %1842 = vmatprep.subr.bf16.mxu0 0
    %1843 = vmatpush1.bf16.msra.mxu0 0
    %1844 = vmatprep.subr.bf16.mxu0 0
    %1845 = vmatpush1.bf16.msra.mxu0 0
    %1846 = vmatprep.subr.bf16.mxu0 0
    %1847 = vmatpush1.bf16.msra.mxu0 0
    %1848 = vmatprep.subr.bf16.mxu0 0
    %1849 = vmatpush1.bf16.msra.mxu0 0
    %1850 = vmatprep.subr.bf16.mxu0 0
    %1851 = vmatpush1.bf16.msra.mxu0 0
    %1852 = vmatprep.subr.bf16.mxu0 0
    %1853 = vmatpush1.bf16.msra.mxu0 0
    %1854 = vmatprep.subr.bf16.mxu0 0
    %1855 = vmatpush1.bf16.msra.mxu0 0
    %1856 = vmatprep.subr.bf16.mxu0 0
    %1857 = vmatpush1.bf16.msra.mxu0 0
    %1858 = vmatprep.subr.bf16.mxu0 0
    %1859 = vmatpush1.bf16.msra.mxu0 0
    %1860 = vmatprep.subr.bf16.mxu0 0
    %1861 = vmatpush1.bf16.msra.mxu0 0
    %1862 = vmatprep.subr.bf16.mxu0 0
    %1863 = vmatpush1.bf16.msra.mxu0 0
    %1864 = vmatprep.subr.bf16.mxu0 0
    %1865 = vmatpush1.bf16.msra.mxu0 0
    %1866 = vmatprep.subr.bf16.mxu0 0
    %1867 = vmatpush1.bf16.msra.mxu0 0
    %1868 = vmatprep.subr.bf16.mxu0 0
    %1869 = vmatpush1.bf16.msra.mxu0 0
    %1870 = vmatprep.mubr.bf16.mxu0 0
    %1871 = vmatmul.mubr.bf16.gmra.mrb[0].mxu0 %v1059
    %v1872 = vpop.f32.mrb[0].mxu0
    %v1873 = vadd.f32 %v1832, %v1872
    %v1874 = vpop.f32.mrb[0].mxu0
    %v1875 = vadd.f32 %v1834, %v1874
    %v1876 = vpop.f32.mrb[0].mxu0
    %v1877 = vpop.f32.mrb[0].mxu0
    %1878 = vdwg.mxu0
    %v1879 = vadd.f32 %v1219, %v1873
    %v1880 = vadd.f32 %v1221, %v1875
    %v1881 = vmul.f32 %v1879, 10.0
    %v1882 = vmul.f32 %v1880, 10.0
    %v1883 = vmin.f32 %v1881, 20.0
    %v1884 = vmin.f32 %v1882, 20.0
    %vm1885 = vcmp.gt.f32.partialorder %v1881, 20.0
    %vm1886 = vcmp.gt.f32.partialorder %v1882, 20.0
    %v1887 = vmul.f32 %v1883, 1.442695
    %v1888 = vpow.pop %v1887
    %v1889 = vmul.f32 %v1884, 1.442695
    %v1890 = vpow.pop %v1889
    %v1891 = vadd.f32 %v1888, 1.0
    %v1892 = vlog2.pop %v1891
    %v1893 = vmul.f32 %v1892, 0.6931472
    %v1894 = vmul.f32 -0.5, %v1888
    %v1895 = vadd.f32 %v1894, 1.0
    %v1896 = vmul.f32 %v1895, %v1888
    %v1897 = vand.u32 2147483647, %v1888
    %vm1898 = vcmp.lt.f32.partialorder %v1897, 0.0004427343
    %v1899 = vsel %vm1898, %v1896, %v1893
    %v1900 = vadd.f32 %v1890, 1.0
    %v1901 = vlog2.pop %v1900
    %v1902 = vmul.f32 %v1901, 0.6931472
    %v1903 = vmul.f32 -0.5, %v1890
    %v1904 = vadd.f32 %v1903, 1.0
    %v1905 = vmul.f32 %v1904, %v1890
    %v1906 = vand.u32 2147483647, %v1890
    %vm1907 = vcmp.lt.f32.partialorder %v1906, 0.0004427343
    %v1908 = vsel %vm1907, %v1905, %v1902
    %v1909 = vmul.f32 %v1899, 0.1
    %v1910 = vmul.f32 %v1908, 0.1
    %v1911 = vsel %vm1885, %v1879, %v1909
    %v1912 = vsel %vm1886, %v1880, %v1910
    %1913 = vst [vmem:[#allocation17] sm:$0xff] %v1911
    %vm1914 = vcmask 343040
    %1915 = vst.msk [vmem:[#allocation17 + $0x8] sm:$0xff] %vm1914, %v1912
    %v1916 = vpack.c.bf16 %v1911, %v1911
    %v1917 = vpack.c.bf16 %v1912, %v1912
    %v1918 = vunpack.c.l.bf16 %v1916
    %v1919 = vunpack.c.l.bf16 %v1917
    %v1920 = vsub.f32 %v1911, %v1918
    %v1921 = vsub.f32 %v1912, %v1919
    %v1922 = vpack.c.bf16 %v1920, %v1920
    %v1923 = vpack.c.bf16 %v1921, %v1921
    %v1924 = vld [vmem:[#allocation7] sm:$0xff]
    %v1925 = vld [vmem:[#allocation7 + $0x8] sm:$0xff]
    %v1926 = vld [vmem:[#allocation7 + $0x10] sm:$0xff]
    %v1927 = vld [vmem:[#allocation7 + $0x18] sm:$0xff]
    %v1928 = vld [vmem:[#allocation7 + $0x20] sm:$0xff]
    %v1929 = vld [vmem:[#allocation7 + $0x28] sm:$0xff]
    %v1930 = vld [vmem:[#allocation7 + $0x30] sm:$0xff]
    %v1931 = vld [vmem:[#allocation7 + $0x38] sm:$0xff]
    %v1932 = vld [vmem:[#allocation7 + $0x40] sm:$0xff]
    %v1933 = vld [vmem:[#allocation7 + $0x48] sm:$0xff]
    %v1934 = vld [vmem:[#allocation7 + $0x50] sm:$0xff]
    %v1935 = vld [vmem:[#allocation7 + $0x58] sm:$0xff]
    %v1936 = vld [vmem:[#allocation7 + $0x60] sm:$0xff]
    %v1937 = vld [vmem:[#allocation7 + $0x68] sm:$0xff]
    %v1938 = vld [vmem:[#allocation7 + $0x70] sm:$0xff]
    %v1939 = vld [vmem:[#allocation7 + $0x78] sm:$0xff]
    %v1940 = vld [vmem:[#allocation7 + $0x80] sm:$0xff]
    %v1941 = vld [vmem:[#allocation7 + $0x88] sm:$0xff]
    %v1942 = vld [vmem:[#allocation7 + $0x90] sm:$0xff]
    %v1943 = vld [vmem:[#allocation7 + $0x98] sm:$0xff]
    %v1944 = vld [vmem:[#allocation7 + $0xa0] sm:$0xff]
    %v1945 = vld [vmem:[#allocation7 + $0xa8] sm:$0xff]
    %v1946 = vld [vmem:[#allocation7 + $0xb0] sm:$0xff]
    %v1947 = vld [vmem:[#allocation7 + $0xb8] sm:$0xff]
    %v1948 = vld [vmem:[#allocation7 + $0xc0] sm:$0xff]
    %v1949 = vld [vmem:[#allocation7 + $0xc8] sm:$0xff]
    %v1950 = vld [vmem:[#allocation7 + $0xd0] sm:$0xff]
    %v1951 = vld [vmem:[#allocation7 + $0xd8] sm:$0xff]
    %v1952 = vld [vmem:[#allocation7 + $0xe0] sm:$0xff]
    %v1953 = vld [vmem:[#allocation7 + $0xe8] sm:$0xff]
    %v1954 = vld [vmem:[#allocation7 + $0xf0] sm:$0xff]
    %v1955 = vld [vmem:[#allocation7 + $0xf8] sm:$0xff]
    %v1956 = vld [vmem:[#allocation8] sm:$0xff]
    %v1957 = vld [vmem:[#allocation8 + $0x8] sm:$0xff]
    %v1958 = vld [vmem:[#allocation8 + $0x10] sm:$0xff]
    %v1959 = vld [vmem:[#allocation8 + $0x18] sm:$0xff]
    %v1960 = vld [vmem:[#allocation8 + $0x20] sm:$0xff]
    %v1961 = vld [vmem:[#allocation8 + $0x28] sm:$0xff]
    %v1962 = vld [vmem:[#allocation8 + $0x30] sm:$0xff]
    %v1963 = vld [vmem:[#allocation8 + $0x38] sm:$0xff]
    %v1964 = vld [vmem:[#allocation8 + $0x40] sm:$0xff]
    %v1965 = vld [vmem:[#allocation8 + $0x48] sm:$0xff]
    %v1966 = vld [vmem:[#allocation8 + $0x50] sm:$0xff]
    %v1967 = vld [vmem:[#allocation8 + $0x58] sm:$0xff]
    %v1968 = vld [vmem:[#allocation8 + $0x60] sm:$0xff]
    %v1969 = vld [vmem:[#allocation8 + $0x68] sm:$0xff]
    %v1970 = vld [vmem:[#allocation8 + $0x70] sm:$0xff]
    %v1971 = vld [vmem:[#allocation8 + $0x78] sm:$0xff]
    %v1972 = vld [vmem:[#allocation8 + $0x80] sm:$0xff]
    %v1973 = vld [vmem:[#allocation8 + $0x88] sm:$0xff]
    %v1974 = vld [vmem:[#allocation8 + $0x90] sm:$0xff]
    %v1975 = vld [vmem:[#allocation8 + $0x98] sm:$0xff]
    %v1976 = vld [vmem:[#allocation8 + $0xa0] sm:$0xff]
    %v1977 = vld [vmem:[#allocation8 + $0xa8] sm:$0xff]
    %v1978 = vld [vmem:[#allocation8 + $0xb0] sm:$0xff]
    %v1979 = vld [vmem:[#allocation8 + $0xb8] sm:$0xff]
    %v1980 = vld [vmem:[#allocation8 + $0xc0] sm:$0xff]
    %v1981 = vld [vmem:[#allocation8 + $0xc8] sm:$0xff]
    %v1982 = vld [vmem:[#allocation8 + $0xd0] sm:$0xff]
    %v1983 = vld [vmem:[#allocation8 + $0xd8] sm:$0xff]
    %v1984 = vld [vmem:[#allocation8 + $0xe0] sm:$0xff]
    %v1985 = vld [vmem:[#allocation8 + $0xe8] sm:$0xff]
    %v1986 = vld [vmem:[#allocation8 + $0xf0] sm:$0xff]
    %v1987 = vld [vmem:[#allocation8 + $0xf8] sm:$0xff]
    %v2020 = vunpack.c.l.b16 %v1924
    %v2021 = vunpack.c.h.b16 %v1924
    %v2022 = vunpack.c.l.b16 %v1925
    %v2023 = vunpack.c.h.b16 %v1925
    %v2024 = vunpack.c.l.b16 %v1926
    %v2025 = vunpack.c.h.b16 %v1926
    %v2026 = vunpack.c.l.b16 %v1927
    %v2027 = vunpack.c.h.b16 %v1927
    %v2028 = vunpack.c.l.b16 %v1928
    %v2029 = vunpack.c.h.b16 %v1928
    %v2030 = vunpack.c.l.b16 %v1929
    %v2031 = vunpack.c.h.b16 %v1929
    %v2032 = vunpack.c.l.b16 %v1930
    %v2033 = vunpack.c.h.b16 %v1930
    %v2034 = vunpack.c.l.b16 %v1931
    %v2035 = vunpack.c.h.b16 %v1931
    %v2036 = vunpack.c.l.b16 %v1932
    %v2037 = vunpack.c.h.b16 %v1932
    %v2038 = vunpack.c.l.b16 %v1933
    %v2039 = vunpack.c.h.b16 %v1933
    %v2040 = vunpack.c.l.b16 %v1934
    %v2041 = vunpack.c.h.b16 %v1934
    %v2042 = vunpack.c.l.b16 %v1935
    %v2043 = vunpack.c.h.b16 %v1935
    %v2044 = vunpack.c.l.b16 %v1936
    %v2045 = vunpack.c.h.b16 %v1936
    %v2046 = vunpack.c.l.b16 %v1937
    %v2047 = vunpack.c.h.b16 %v1937
    %v2048 = vunpack.c.l.b16 %v1938
    %v2049 = vunpack.c.h.b16 %v1938
    %v2050 = vunpack.c.l.b16 %v1939
    %v2051 = vunpack.c.h.b16 %v1939
    %v2052 = vunpack.c.l.b16 %v1940
    %v2053 = vunpack.c.h.b16 %v1940
    %v2054 = vunpack.c.l.b16 %v1941
    %v2055 = vunpack.c.h.b16 %v1941
    %v2056 = vunpack.c.l.b16 %v1942
    %v2057 = vunpack.c.h.b16 %v1942
    %v2058 = vunpack.c.l.b16 %v1943
    %v2059 = vunpack.c.h.b16 %v1943
    %v2060 = vunpack.c.l.b16 %v1944
    %v2061 = vunpack.c.h.b16 %v1944
    %v2062 = vunpack.c.l.b16 %v1945
    %v2063 = vunpack.c.h.b16 %v1945
    %v2064 = vunpack.c.l.b16 %v1946
    %v2065 = vunpack.c.h.b16 %v1946
    %v2066 = vunpack.c.l.b16 %v1947
    %v2067 = vunpack.c.h.b16 %v1947
    %v2068 = vunpack.c.l.b16 %v1948
    %v2069 = vunpack.c.h.b16 %v1948
    %v2070 = vunpack.c.l.b16 %v1949
    %v2071 = vunpack.c.h.b16 %v1949
    %v2072 = vunpack.c.l.b16 %v1950
    %v2073 = vunpack.c.h.b16 %v1950
    %v2074 = vunpack.c.l.b16 %v1951
    %v2075 = vunpack.c.h.b16 %v1951
    %v2076 = vunpack.c.l.b16 %v1952
    %v2077 = vunpack.c.h.b16 %v1952
    %v2078 = vunpack.c.l.b16 %v1953
    %v2079 = vunpack.c.h.b16 %v1953
    %v2080 = vunpack.c.l.b16 %v1954
    %v2081 = vunpack.c.h.b16 %v1954
    %v2082 = vunpack.c.l.b16 %v1955
    %v2083 = vunpack.c.h.b16 %v1955
    %v2084 = vpack.c.b16 %v2022, %v2020
    %v2085 = vpack.c.b16 %v2023, %v2021
    %v2086 = vpack.c.b16 %v2026, %v2024
    %v2087 = vpack.c.b16 %v2027, %v2025
    %v2088 = vpack.c.b16 %v2030, %v2028
    %v2089 = vpack.c.b16 %v2031, %v2029
    %v2090 = vpack.c.b16 %v2034, %v2032
    %v2091 = vpack.c.b16 %v2035, %v2033
    %v2092 = vpack.c.b16 %v2038, %v2036
    %v2093 = vpack.c.b16 %v2039, %v2037
    %v2094 = vpack.c.b16 %v2042, %v2040
    %v2095 = vpack.c.b16 %v2043, %v2041
    %v2096 = vpack.c.b16 %v2046, %v2044
    %v2097 = vpack.c.b16 %v2047, %v2045
    %v2098 = vpack.c.b16 %v2050, %v2048
    %v2099 = vpack.c.b16 %v2051, %v2049
    %v2100 = vpack.c.b16 %v2054, %v2052
    %v2101 = vpack.c.b16 %v2055, %v2053
    %v2102 = vpack.c.b16 %v2058, %v2056
    %v2103 = vpack.c.b16 %v2059, %v2057
    %v2104 = vpack.c.b16 %v2062, %v2060
    %v2105 = vpack.c.b16 %v2063, %v2061
    %v2106 = vpack.c.b16 %v2066, %v2064
    %v2107 = vpack.c.b16 %v2067, %v2065
    %v2108 = vpack.c.b16 %v2070, %v2068
    %v2109 = vpack.c.b16 %v2071, %v2069
    %v2110 = vpack.c.b16 %v2074, %v2072
    %v2111 = vpack.c.b16 %v2075, %v2073
    %v2112 = vpack.c.b16 %v2078, %v2076
    %v2113 = vpack.c.b16 %v2079, %v2077
    %v2114 = vpack.c.b16 %v2082, %v2080
    %v2115 = vpack.c.b16 %v2083, %v2081
    %2148 = vmatprep.subr.bf16.mxu0 %v2085
    %2149 = vmatpush1.bf16.msra.mxu0 %v2084
    %2150 = vmatprep.subr.bf16.mxu0 %v2087
    %2151 = vmatpush1.bf16.msra.mxu0 %v2086
    %2152 = vmatprep.subr.bf16.mxu0 %v2089
    %2153 = vmatpush1.bf16.msra.mxu0 %v2088
    %2154 = vmatprep.subr.bf16.mxu0 %v2091
    %2155 = vmatpush1.bf16.msra.mxu0 %v2090
    %2156 = vmatprep.subr.bf16.mxu0 %v2093
    %2157 = vmatpush1.bf16.msra.mxu0 %v2092
    %2158 = vmatprep.subr.bf16.mxu0 %v2095
    %2159 = vmatpush1.bf16.msra.mxu0 %v2094
    %2160 = vmatprep.subr.bf16.mxu0 %v2097
    %2161 = vmatpush1.bf16.msra.mxu0 %v2096
    %2162 = vmatprep.subr.bf16.mxu0 %v2099
    %2163 = vmatpush1.bf16.msra.mxu0 %v2098
    %2164 = vmatprep.subr.bf16.mxu0 %v2101
    %2165 = vmatpush1.bf16.msra.mxu0 %v2100
    %2166 = vmatprep.subr.bf16.mxu0 %v2103
    %2167 = vmatpush1.bf16.msra.mxu0 %v2102
    %2168 = vmatprep.subr.bf16.mxu0 %v2105
    %2169 = vmatpush1.bf16.msra.mxu0 %v2104
    %2170 = vmatprep.subr.bf16.mxu0 %v2107
    %2171 = vmatpush1.bf16.msra.mxu0 %v2106
    %2172 = vmatprep.subr.bf16.mxu0 %v2109
    %2173 = vmatpush1.bf16.msra.mxu0 %v2108
    %2174 = vmatprep.subr.bf16.mxu0 %v2111
    %2175 = vmatpush1.bf16.msra.mxu0 %v2110
    %2176 = vmatprep.subr.bf16.mxu0 %v2113
    %2177 = vmatpush1.bf16.msra.mxu0 %v2112
    %2178 = vmatprep.subr.bf16.mxu0 %v2115
    %2179 = vmatpush1.bf16.msra.mxu0 %v2114
    %2180 = vmatprep.mubr.bf16.mxu0 %v1923
    %2181 = vmatmul.mubr.bf16.gmra.mrb[0].mxu0 %v1922
    %v2182 = vpop.f32.mrb[0].mxu0
    %v2183 = vadd.f32 0.0, %v2182
    %v2184 = vpop.f32.mrb[0].mxu0
    %v2185 = vadd.f32 0.0, %v2184
    %v2186 = vpop.f32.mrb[0].mxu0
    %v2187 = vpop.f32.mrb[0].mxu0
    %2188 = vdwg.mxu0
    %2189 = vmatprep.subr.bf16.mxu0 %v2085
    %2190 = vmatpush1.bf16.msra.mxu0 %v2084
    %2191 = vmatprep.subr.bf16.mxu0 %v2087
    %2192 = vmatpush1.bf16.msra.mxu0 %v2086
    %2193 = vmatprep.subr.bf16.mxu0 %v2089
    %2194 = vmatpush1.bf16.msra.mxu0 %v2088
    %2195 = vmatprep.subr.bf16.mxu0 %v2091
    %2196 = vmatpush1.bf16.msra.mxu0 %v2090
    %2197 = vmatprep.subr.bf16.mxu0 %v2093
    %2198 = vmatpush1.bf16.msra.mxu0 %v2092
    %2199 = vmatprep.subr.bf16.mxu0 %v2095
    %2200 = vmatpush1.bf16.msra.mxu0 %v2094
    %2201 = vmatprep.subr.bf16.mxu0 %v2097
    %2202 = vmatpush1.bf16.msra.mxu0 %v2096
    %2203 = vmatprep.subr.bf16.mxu0 %v2099
    %2204 = vmatpush1.bf16.msra.mxu0 %v2098
    %2205 = vmatprep.subr.bf16.mxu0 %v2101
    %2206 = vmatpush1.bf16.msra.mxu0 %v2100
    %2207 = vmatprep.subr.bf16.mxu0 %v2103
    %2208 = vmatpush1.bf16.msra.mxu0 %v2102
    %2209 = vmatprep.subr.bf16.mxu0 %v2105
    %2210 = vmatpush1.bf16.msra.mxu0 %v2104
    %2211 = vmatprep.subr.bf16.mxu0 %v2107
    %2212 = vmatpush1.bf16.msra.mxu0 %v2106
    %2213 = vmatprep.subr.bf16.mxu0 %v2109
    %2214 = vmatpush1.bf16.msra.mxu0 %v2108
    %2215 = vmatprep.subr.bf16.mxu0 %v2111
    %2216 = vmatpush1.bf16.msra.mxu0 %v2110
    %2217 = vmatprep.subr.bf16.mxu0 %v2113
    %2218 = vmatpush1.bf16.msra.mxu0 %v2112
    %2219 = vmatprep.subr.bf16.mxu0 %v2115
    %2220 = vmatpush1.bf16.msra.mxu0 %v2114
    %2221 = vmatprep.mubr.bf16.mxu0 %v1917
    %2222 = vmatmul.mubr.bf16.gmra.mrb[0].mxu0 %v1916
    %v2223 = vpop.f32.mrb[0].mxu0
    %v2224 = vadd.f32 %v2183, %v2223
    %v2225 = vpop.f32.mrb[0].mxu0
    %v2226 = vadd.f32 %v2185, %v2225
    %v2227 = vpop.f32.mrb[0].mxu0
    %v2228 = vpop.f32.mrb[0].mxu0
    %2229 = vdwg.mxu0
    %v2262 = vunpack.c.l.b16 %v1956
    %v2263 = vunpack.c.h.b16 %v1956
    %v2264 = vunpack.c.l.b16 %v1957
    %v2265 = vunpack.c.h.b16 %v1957
    %v2266 = vunpack.c.l.b16 %v1958
    %v2267 = vunpack.c.h.b16 %v1958
    %v2268 = vunpack.c.l.b16 %v1959
    %v2269 = vunpack.c.h.b16 %v1959
    %v2270 = vunpack.c.l.b16 %v1960
    %v2271 = vunpack.c.h.b16 %v1960
    %v2272 = vunpack.c.l.b16 %v1961
    %v2273 = vunpack.c.h.b16 %v1961
    %v2274 = vunpack.c.l.b16 %v1962
    %v2275 = vunpack.c.h.b16 %v1962
    %v2276 = vunpack.c.l.b16 %v1963
    %v2277 = vunpack.c.h.b16 %v1963
    %v2278 = vunpack.c.l.b16 %v1964
    %v2279 = vunpack.c.h.b16 %v1964
    %v2280 = vunpack.c.l.b16 %v1965
    %v2281 = vunpack.c.h.b16 %v1965
    %v2282 = vunpack.c.l.b16 %v1966
    %v2283 = vunpack.c.h.b16 %v1966
    %v2284 = vunpack.c.l.b16 %v1967
    %v2285 = vunpack.c.h.b16 %v1967
    %v2286 = vunpack.c.l.b16 %v1968
    %v2287 = vunpack.c.h.b16 %v1968
    %v2288 = vunpack.c.l.b16 %v1969
    %v2289 = vunpack.c.h.b16 %v1969
    %v2290 = vunpack.c.l.b16 %v1970
    %v2291 = vunpack.c.h.b16 %v1970
    %v2292 = vunpack.c.l.b16 %v1971
    %v2293 = vunpack.c.h.b16 %v1971
    %v2294 = vunpack.c.l.b16 %v1972
    %v2295 = vunpack.c.h.b16 %v1972
    %v2296 = vunpack.c.l.b16 %v1973
    %v2297 = vunpack.c.h.b16 %v1973
    %v2298 = vunpack.c.l.b16 %v1974
    %v2299 = vunpack.c.h.b16 %v1974
    %v2300 = vunpack.c.l.b16 %v1975
    %v2301 = vunpack.c.h.b16 %v1975
    %v2302 = vunpack.c.l.b16 %v1976
    %v2303 = vunpack.c.h.b16 %v1976
    %v2304 = vunpack.c.l.b16 %v1977
    %v2305 = vunpack.c.h.b16 %v1977
    %v2306 = vunpack.c.l.b16 %v1978
    %v2307 = vunpack.c.h.b16 %v1978
    %v2308 = vunpack.c.l.b16 %v1979
    %v2309 = vunpack.c.h.b16 %v1979
    %v2310 = vunpack.c.l.b16 %v1980
    %v2311 = vunpack.c.h.b16 %v1980
    %v2312 = vunpack.c.l.b16 %v1981
    %v2313 = vunpack.c.h.b16 %v1981
    %v2314 = vunpack.c.l.b16 %v1982
    %v2315 = vunpack.c.h.b16 %v1982
    %v2316 = vunpack.c.l.b16 %v1983
    %v2317 = vunpack.c.h.b16 %v1983
    %v2318 = vunpack.c.l.b16 %v1984
    %v2319 = vunpack.c.h.b16 %v1984
    %v2320 = vunpack.c.l.b16 %v1985
    %v2321 = vunpack.c.h.b16 %v1985
    %v2322 = vunpack.c.l.b16 %v1986
    %v2323 = vunpack.c.h.b16 %v1986
    %v2324 = vunpack.c.l.b16 %v1987
    %v2325 = vunpack.c.h.b16 %v1987
    %v2326 = vpack.c.b16 %v2264, %v2262
    %v2327 = vpack.c.b16 %v2265, %v2263
    %v2328 = vpack.c.b16 %v2268, %v2266
    %v2329 = vpack.c.b16 %v2269, %v2267
    %v2330 = vpack.c.b16 %v2272, %v2270
    %v2331 = vpack.c.b16 %v2273, %v2271
    %v2332 = vpack.c.b16 %v2276, %v2274
    %v2333 = vpack.c.b16 %v2277, %v2275
    %v2334 = vpack.c.b16 %v2280, %v2278
    %v2335 = vpack.c.b16 %v2281, %v2279
    %v2336 = vpack.c.b16 %v2284, %v2282
    %v2337 = vpack.c.b16 %v2285, %v2283
    %v2338 = vpack.c.b16 %v2288, %v2286
    %v2339 = vpack.c.b16 %v2289, %v2287
    %v2340 = vpack.c.b16 %v2292, %v2290
    %v2341 = vpack.c.b16 %v2293, %v2291
    %v2342 = vpack.c.b16 %v2296, %v2294
    %v2343 = vpack.c.b16 %v2297, %v2295
    %v2344 = vpack.c.b16 %v2300, %v2298
    %v2345 = vpack.c.b16 %v2301, %v2299
    %v2346 = vpack.c.b16 %v2304, %v2302
    %v2347 = vpack.c.b16 %v2305, %v2303
    %v2348 = vpack.c.b16 %v2308, %v2306
    %v2349 = vpack.c.b16 %v2309, %v2307
    %v2350 = vpack.c.b16 %v2312, %v2310
    %v2351 = vpack.c.b16 %v2313, %v2311
    %v2352 = vpack.c.b16 %v2316, %v2314
    %v2353 = vpack.c.b16 %v2317, %v2315
    %v2354 = vpack.c.b16 %v2320, %v2318
    %v2355 = vpack.c.b16 %v2321, %v2319
    %v2356 = vpack.c.b16 %v2324, %v2322
    %v2357 = vpack.c.b16 %v2325, %v2323
    %2390 = vmatprep.subr.bf16.mxu0 %v2327
    %2391 = vmatpush1.bf16.msra.mxu0 %v2326
    %2392 = vmatprep.subr.bf16.mxu0 %v2329
    %2393 = vmatpush1.bf16.msra.mxu0 %v2328
    %2394 = vmatprep.subr.bf16.mxu0 %v2331
    %2395 = vmatpush1.bf16.msra.mxu0 %v2330
    %2396 = vmatprep.subr.bf16.mxu0 %v2333
    %2397 = vmatpush1.bf16.msra.mxu0 %v2332
    %2398 = vmatprep.subr.bf16.mxu0 %v2335
    %2399 = vmatpush1.bf16.msra.mxu0 %v2334
    %2400 = vmatprep.subr.bf16.mxu0 %v2337
    %2401 = vmatpush1.bf16.msra.mxu0 %v2336
    %2402 = vmatprep.subr.bf16.mxu0 %v2339
    %2403 = vmatpush1.bf16.msra.mxu0 %v2338
    %2404 = vmatprep.subr.bf16.mxu0 %v2341
    %2405 = vmatpush1.bf16.msra.mxu0 %v2340
    %2406 = vmatprep.subr.bf16.mxu0 %v2343
    %2407 = vmatpush1.bf16.msra.mxu0 %v2342
    %2408 = vmatprep.subr.bf16.mxu0 %v2345
    %2409 = vmatpush1.bf16.msra.mxu0 %v2344
    %2410 = vmatprep.subr.bf16.mxu0 %v2347
    %2411 = vmatpush1.bf16.msra.mxu0 %v2346
    %2412 = vmatprep.subr.bf16.mxu0 %v2349
    %2413 = vmatpush1.bf16.msra.mxu0 %v2348
    %2414 = vmatprep.subr.bf16.mxu0 %v2351
    %2415 = vmatpush1.bf16.msra.mxu0 %v2350
    %2416 = vmatprep.subr.bf16.mxu0 %v2353
    %2417 = vmatpush1.bf16.msra.mxu0 %v2352
    %2418 = vmatprep.subr.bf16.mxu0 %v2355
    %2419 = vmatpush1.bf16.msra.mxu0 %v2354
    %2420 = vmatprep.subr.bf16.mxu0 %v2357
    %2421 = vmatpush1.bf16.msra.mxu0 %v2356
    %2422 = vmatprep.mubr.bf16.mxu0 %v1917
    %2423 = vmatmul.mubr.bf16.gmra.mrb[0].mxu0 %v1916
    %v2424 = vpop.f32.mrb[0].mxu0
    %v2425 = vadd.f32 0.0, %v2424
    %v2426 = vpop.f32.mrb[0].mxu0
    %v2427 = vadd.f32 0.0, %v2426
    %v2428 = vpop.f32.mrb[0].mxu0
    %v2429 = vpop.f32.mrb[0].mxu0
    %2430 = vdwg.mxu0
    %v2431 = vadd.f32 %v2224, %v2425
    %v2432 = vadd.f32 %v2226, %v2427
    %v2433 = vmul.f32 %v2431, 10.0
    %v2434 = vmul.f32 %v2432, 10.0
    %v2435 = vmin.f32 %v2433, 20.0
    %v2436 = vmin.f32 %v2434, 20.0
    %vm2437 = vcmp.gt.f32.partialorder %v2433, 20.0
    %vm2438 = vcmp.gt.f32.partialorder %v2434, 20.0
    %v2439 = vmul.f32 %v2435, 1.442695
    %v2440 = vpow.pop %v2439
    %v2441 = vmul.f32 %v2436, 1.442695
    %v2442 = vpow.pop %v2441
    %v2443 = vadd.f32 %v2440, 1.0
    %v2444 = vlog2.pop %v2443
    %v2445 = vmul.f32 %v2444, 0.6931472
    %v2446 = vmul.f32 -0.5, %v2440
    %v2447 = vadd.f32 %v2446, 1.0
    %v2448 = vmul.f32 %v2447, %v2440
    %v2449 = vand.u32 2147483647, %v2440
    %vm2450 = vcmp.lt.f32.partialorder %v2449, 0.0004427343
    %v2451 = vsel %vm2450, %v2448, %v2445
    %v2452 = vadd.f32 %v2442, 1.0
    %v2453 = vlog2.pop %v2452
    %v2454 = vmul.f32 %v2453, 0.6931472
    %v2455 = vmul.f32 -0.5, %v2442
    %v2456 = vadd.f32 %v2455, 1.0
    %v2457 = vmul.f32 %v2456, %v2442
    %v2458 = vand.u32 2147483647, %v2442
    %vm2459 = vcmp.lt.f32.partialorder %v2458, 0.0004427343
    %v2460 = vsel %vm2459, %v2457, %v2454
    %v2461 = vmul.f32 %v2451, 0.1
    %v2462 = vmul.f32 %v2460, 0.1
    %v2463 = vsel %vm2437, %v2431, %v2461
    %v2464 = vsel %vm2438, %v2432, %v2462
    %2465 = vst [vmem:[#allocation18] sm:$0xff] %v2463
    %vm2466 = vcmask 15360
    %2467 = vst.msk [vmem:[#allocation18 + $0x8] sm:$0xff] %vm2466, %v2464
    %v2468 = vpack.c.bf16 %v2463, %v2463
    %v2469 = vpack.c.bf16 %v2464, %v2464
    %v2470 = vunpack.c.l.bf16 %v2468
    %v2471 = vunpack.c.l.bf16 %v2469
    %v2472 = vsub.f32 %v2463, %v2470
    %v2473 = vsub.f32 %v2464, %v2471
    %v2474 = vpack.c.bf16 %v2472, %v2472
    %v2475 = vpack.c.bf16 %v2473, %v2473
    %v2476 = vld [vmem:[%s5] sm:$0xf]
    %v2477 = vld [vmem:[%s5 + $0x4] sm:$0xf]
    %v2478 = vld [vmem:[%s5 + $0x8] sm:$0xf]
    %v2479 = vld [vmem:[%s5 + $0xc] sm:$0xf]
    %v2480 = vld [vmem:[%s5 + $0x10] sm:$0xf]
    %v2481 = vld [vmem:[%s5 + $0x14] sm:$0xf]
    %v2482 = vld [vmem:[%s5 + $0x18] sm:$0xf]
    %v2483 = vld [vmem:[%s5 + $0x1c] sm:$0xf]
    %v2484 = vld [vmem:[%s5 + $0x20] sm:$0xf]
    %v2485 = vld [vmem:[%s5 + $0x24] sm:$0xf]
    %v2486 = vld [vmem:[%s5 + $0x28] sm:$0xf]
    %v2487 = vld [vmem:[%s5 + $0x2c] sm:$0xf]
    %v2488 = vld [vmem:[%s5 + $0x30] sm:$0xf]
    %v2489 = vld [vmem:[%s5 + $0x34] sm:$0xf]
    %v2490 = vld [vmem:[%s5 + $0x38] sm:$0xf]
    %v2491 = vld [vmem:[%s5 + $0x3c] sm:$0xf]
    %v2492 = vld [vmem:[%s5 + $0x40] sm:$0xf]
    %v2493 = vld [vmem:[%s5 + $0x44] sm:$0xf]
    %v2494 = vld [vmem:[%s5 + $0x48] sm:$0xf]
    %v2495 = vld [vmem:[%s5 + $0x4c] sm:$0xf]
    %v2496 = vld [vmem:[%s5 + $0x50] sm:$0xf]
    %v2497 = vld [vmem:[%s5 + $0x54] sm:$0xf]
    %v2498 = vld [vmem:[%s5 + $0x58] sm:$0xf]
    %v2499 = vld [vmem:[%s5 + $0x5c] sm:$0xf]
    %v2500 = vld [vmem:[%s5 + $0x60] sm:$0xf]
    %v2501 = vld [vmem:[%s5 + $0x64] sm:$0xf]
    %v2502 = vld [vmem:[%s5 + $0x68] sm:$0xf]
    %v2503 = vld [vmem:[%s5 + $0x6c] sm:$0xf]
    %v2504 = vld [vmem:[%s5 + $0x70] sm:$0xf]
    %v2505 = vld [vmem:[%s5 + $0x74] sm:$0xf]
    %v2506 = vld [vmem:[%s5 + $0x78] sm:$0xf]
    %v2507 = vld [vmem:[%s5 + $0x7c] sm:$0xf]
    %v2508 = vld [vmem:[#allocation10] sm:$0xf]
    %v2509 = vld [vmem:[#allocation10 + $0x4] sm:$0xf]
    %v2510 = vld [vmem:[#allocation10 + $0x8] sm:$0xf]
    %v2511 = vld [vmem:[#allocation10 + $0xc] sm:$0xf]
    %v2512 = vld [vmem:[#allocation10 + $0x10] sm:$0xf]
    %v2513 = vld [vmem:[#allocation10 + $0x14] sm:$0xf]
    %v2514 = vld [vmem:[#allocation10 + $0x18] sm:$0xf]
    %v2515 = vld [vmem:[#allocation10 + $0x1c] sm:$0xf]
    %v2516 = vld [vmem:[#allocation10 + $0x20] sm:$0xf]
    %v2517 = vld [vmem:[#allocation10 + $0x24] sm:$0xf]
    %v2518 = vld [vmem:[#allocation10 + $0x28] sm:$0xf]
    %v2519 = vld [vmem:[#allocation10 + $0x2c] sm:$0xf]
    %v2520 = vld [vmem:[#allocation10 + $0x30] sm:$0xf]
    %v2521 = vld [vmem:[#allocation10 + $0x34] sm:$0xf]
    %v2522 = vld [vmem:[#allocation10 + $0x38] sm:$0xf]
    %v2523 = vld [vmem:[#allocation10 + $0x3c] sm:$0xf]
    %v2524 = vld [vmem:[#allocation10 + $0x40] sm:$0xf]
    %v2525 = vld [vmem:[#allocation10 + $0x44] sm:$0xf]
    %v2526 = vld [vmem:[#allocation10 + $0x48] sm:$0xf]
    %v2527 = vld [vmem:[#allocation10 + $0x4c] sm:$0xf]
    %v2528 = vld [vmem:[#allocation10 + $0x50] sm:$0xf]
    %v2529 = vld [vmem:[#allocation10 + $0x54] sm:$0xf]
    %v2530 = vld [vmem:[#allocation10 + $0x58] sm:$0xf]
    %v2531 = vld [vmem:[#allocation10 + $0x5c] sm:$0xf]
    %v2532 = vld [vmem:[#allocation10 + $0x60] sm:$0xf]
    %v2533 = vld [vmem:[#allocation10 + $0x64] sm:$0xf]
    %v2534 = vld [vmem:[#allocation10 + $0x68] sm:$0xf]
    %v2535 = vld [vmem:[#allocation10 + $0x6c] sm:$0xf]
    %v2536 = vld [vmem:[#allocation10 + $0x70] sm:$0xf]
    %v2537 = vld [vmem:[#allocation10 + $0x74] sm:$0xf]
    %v2538 = vld [vmem:[#allocation10 + $0x78] sm:$0xf]
    %v2539 = vld [vmem:[#allocation10 + $0x7c] sm:$0xf]
    %v2572 = vunpack.c.l.b16 %v2476
    %v2573 = vunpack.c.l.b16 %v2477
    %v2574 = vunpack.c.l.b16 %v2478
    %v2575 = vunpack.c.l.b16 %v2479
    %v2576 = vunpack.c.l.b16 %v2480
    %v2577 = vunpack.c.l.b16 %v2481
    %v2578 = vunpack.c.l.b16 %v2482
    %v2579 = vunpack.c.l.b16 %v2483
    %v2580 = vunpack.c.l.b16 %v2484
    %v2581 = vunpack.c.l.b16 %v2485
    %v2582 = vunpack.c.l.b16 %v2486
    %v2583 = vunpack.c.l.b16 %v2487
    %v2584 = vunpack.c.l.b16 %v2488
    %v2585 = vunpack.c.l.b16 %v2489
    %v2586 = vunpack.c.l.b16 %v2490
    %v2587 = vunpack.c.l.b16 %v2491
    %v2588 = vunpack.c.l.b16 %v2492
    %v2589 = vunpack.c.l.b16 %v2493
    %v2590 = vunpack.c.l.b16 %v2494
    %v2591 = vunpack.c.l.b16 %v2495
    %v2592 = vunpack.c.l.b16 %v2496
    %v2593 = vunpack.c.l.b16 %v2497
    %v2594 = vunpack.c.l.b16 %v2498
    %v2595 = vunpack.c.l.b16 %v2499
    %v2596 = vunpack.c.l.b16 %v2500
    %v2597 = vunpack.c.l.b16 %v2501
    %v2598 = vunpack.c.l.b16 %v2502
    %v2599 = vunpack.c.l.b16 %v2503
    %v2600 = vunpack.c.l.b16 %v2504
    %v2601 = vunpack.c.l.b16 %v2505
    %v2602 = vunpack.c.l.b16 %v2506
    %v2603 = vunpack.c.l.b16 %v2507
    %v2604 = vpack.c.b16 %v2573, %v2572
    %v2605 = vpack.c.b16 %v2575, %v2574
    %v2606 = vpack.c.b16 %v2577, %v2576
    %v2607 = vpack.c.b16 %v2579, %v2578
    %v2608 = vpack.c.b16 %v2581, %v2580
    %v2609 = vpack.c.b16 %v2583, %v2582
    %v2610 = vpack.c.b16 %v2585, %v2584
    %v2611 = vpack.c.b16 %v2587, %v2586
    %v2612 = vpack.c.b16 %v2589, %v2588
    %v2613 = vpack.c.b16 %v2591, %v2590
    %v2614 = vpack.c.b16 %v2593, %v2592
    %v2615 = vpack.c.b16 %v2595, %v2594
    %v2616 = vpack.c.b16 %v2597, %v2596
    %v2617 = vpack.c.b16 %v2599, %v2598
    %v2618 = vpack.c.b16 %v2601, %v2600
    %v2619 = vpack.c.b16 %v2603, %v2602
    %2636 = vmatprep.subr.bf16.mxu0 0
    %2637 = vmatpush1.bf16.msra.mxu0 %v2604
    %2638 = vmatprep.subr.bf16.mxu0 0
    %2639 = vmatpush1.bf16.msra.mxu0 %v2605
    %2640 = vmatprep.subr.bf16.mxu0 0
    %2641 = vmatpush1.bf16.msra.mxu0 %v2606
    %2642 = vmatprep.subr.bf16.mxu0 0
    %2643 = vmatpush1.bf16.msra.mxu0 %v2607
    %2644 = vmatprep.subr.bf16.mxu0 0
    %2645 = vmatpush1.bf16.msra.mxu0 %v2608
    %2646 = vmatprep.subr.bf16.mxu0 0
    %2647 = vmatpush1.bf16.msra.mxu0 %v2609
    %2648 = vmatprep.subr.bf16.mxu0 0
    %2649 = vmatpush1.bf16.msra.mxu0 %v2610
    %2650 = vmatprep.subr.bf16.mxu0 0
    %2651 = vmatpush1.bf16.msra.mxu0 %v2611
    %2652 = vmatprep.subr.bf16.mxu0 0
    %2653 = vmatpush1.bf16.msra.mxu0 %v2612
    %2654 = vmatprep.subr.bf16.mxu0 0
    %2655 = vmatpush1.bf16.msra.mxu0 %v2613
    %2656 = vmatprep.subr.bf16.mxu0 0
    %2657 = vmatpush1.bf16.msra.mxu0 %v2614
    %2658 = vmatprep.subr.bf16.mxu0 0
    %2659 = vmatpush1.bf16.msra.mxu0 %v2615
    %2660 = vmatprep.subr.bf16.mxu0 0
    %2661 = vmatpush1.bf16.msra.mxu0 %v2616
    %2662 = vmatprep.subr.bf16.mxu0 0
    %2663 = vmatpush1.bf16.msra.mxu0 %v2617
    %2664 = vmatprep.subr.bf16.mxu0 0
    %2665 = vmatpush1.bf16.msra.mxu0 %v2618
    %2666 = vmatprep.subr.bf16.mxu0 0
    %2667 = vmatpush1.bf16.msra.mxu0 %v2619
    %2668 = vmatprep.mubr.bf16.mxu0 %v2475
    %2669 = vmatmul.mubr.bf16.gmra.mrb[0].mxu0 %v2474
    %v2670 = vpop.f32.mrb[0].mxu0
    %v2671 = vadd.f32 0.0, %v2670
    %v2672 = vpop.f32.mrb[0].mxu0
    %v2673 = vpop.f32.mrb[0].mxu0
    %v2674 = vpop.f32.mrb[0].mxu0
    %2675 = vdwg.mxu0
    %2676 = vmatprep.subr.bf16.mxu0 0
    %2677 = vmatpush1.bf16.msra.mxu0 %v2604
    %2678 = vmatprep.subr.bf16.mxu0 0
    %2679 = vmatpush1.bf16.msra.mxu0 %v2605
    %2680 = vmatprep.subr.bf16.mxu0 0
    %2681 = vmatpush1.bf16.msra.mxu0 %v2606
    %2682 = vmatprep.subr.bf16.mxu0 0
    %2683 = vmatpush1.bf16.msra.mxu0 %v2607
    %2684 = vmatprep.subr.bf16.mxu0 0
    %2685 = vmatpush1.bf16.msra.mxu0 %v2608
    %2686 = vmatprep.subr.bf16.mxu0 0
    %2687 = vmatpush1.bf16.msra.mxu0 %v2609
    %2688 = vmatprep.subr.bf16.mxu0 0
    %2689 = vmatpush1.bf16.msra.mxu0 %v2610
    %2690 = vmatprep.subr.bf16.mxu0 0
    %2691 = vmatpush1.bf16.msra.mxu0 %v2611
    %2692 = vmatprep.subr.bf16.mxu0 0
    %2693 = vmatpush1.bf16.msra.mxu0 %v2612
    %2694 = vmatprep.subr.bf16.mxu0 0
    %2695 = vmatpush1.bf16.msra.mxu0 %v2613
    %2696 = vmatprep.subr.bf16.mxu0 0
    %2697 = vmatpush1.bf16.msra.mxu0 %v2614
    %2698 = vmatprep.subr.bf16.mxu0 0
    %2699 = vmatpush1.bf16.msra.mxu0 %v2615
    %2700 = vmatprep.subr.bf16.mxu0 0
    %2701 = vmatpush1.bf16.msra.mxu0 %v2616
    %2702 = vmatprep.subr.bf16.mxu0 0
    %2703 = vmatpush1.bf16.msra.mxu0 %v2617
    %2704 = vmatprep.subr.bf16.mxu0 0
    %2705 = vmatpush1.bf16.msra.mxu0 %v2618
    %2706 = vmatprep.subr.bf16.mxu0 0
    %2707 = vmatpush1.bf16.msra.mxu0 %v2619
    %2708 = vmatprep.mubr.bf16.mxu0 %v2469
    %2709 = vmatmul.mubr.bf16.gmra.mrb[0].mxu0 %v2468
    %v2710 = vpop.f32.mrb[0].mxu0
    %v2711 = vadd.f32 %v2671, %v2710
    %v2712 = vpop.f32.mrb[0].mxu0
    %v2713 = vpop.f32.mrb[0].mxu0
    %v2714 = vpop.f32.mrb[0].mxu0
    %2715 = vdwg.mxu0
    %v2748 = vunpack.c.l.b16 %v2508
    %v2749 = vunpack.c.l.b16 %v2509
    %v2750 = vunpack.c.l.b16 %v2510
    %v2751 = vunpack.c.l.b16 %v2511
    %v2752 = vunpack.c.l.b16 %v2512
    %v2753 = vunpack.c.l.b16 %v2513
    %v2754 = vunpack.c.l.b16 %v2514
    %v2755 = vunpack.c.l.b16 %v2515
    %v2756 = vunpack.c.l.b16 %v2516
    %v2757 = vunpack.c.l.b16 %v2517
    %v2758 = vunpack.c.l.b16 %v2518
    %v2759 = vunpack.c.l.b16 %v2519
    %v2760 = vunpack.c.l.b16 %v2520
    %v2761 = vunpack.c.l.b16 %v2521
    %v2762 = vunpack.c.l.b16 %v2522
    %v2763 = vunpack.c.l.b16 %v2523
    %v2764 = vunpack.c.l.b16 %v2524
    %v2765 = vunpack.c.l.b16 %v2525
    %v2766 = vunpack.c.l.b16 %v2526
    %v2767 = vunpack.c.l.b16 %v2527
    %v2768 = vunpack.c.l.b16 %v2528
    %v2769 = vunpack.c.l.b16 %v2529
    %v2770 = vunpack.c.l.b16 %v2530
    %v2771 = vunpack.c.l.b16 %v2531
    %v2772 = vunpack.c.l.b16 %v2532
    %v2773 = vunpack.c.l.b16 %v2533
    %v2774 = vunpack.c.l.b16 %v2534
    %v2775 = vunpack.c.l.b16 %v2535
    %v2776 = vunpack.c.l.b16 %v2536
    %v2777 = vunpack.c.l.b16 %v2537
    %v2778 = vunpack.c.l.b16 %v2538
    %v2779 = vunpack.c.l.b16 %v2539
    %v2780 = vpack.c.b16 %v2749, %v2748
    %v2781 = vpack.c.b16 %v2751, %v2750
    %v2782 = vpack.c.b16 %v2753, %v2752
    %v2783 = vpack.c.b16 %v2755, %v2754
    %v2784 = vpack.c.b16 %v2757, %v2756
    %v2785 = vpack.c.b16 %v2759, %v2758
    %v2786 = vpack.c.b16 %v2761, %v2760
    %v2787 = vpack.c.b16 %v2763, %v2762
    %v2788 = vpack.c.b16 %v2765, %v2764
    %v2789 = vpack.c.b16 %v2767, %v2766
    %v2790 = vpack.c.b16 %v2769, %v2768
    %v2791 = vpack.c.b16 %v2771, %v2770
    %v2792 = vpack.c.b16 %v2773, %v2772
    %v2793 = vpack.c.b16 %v2775, %v2774
    %v2794 = vpack.c.b16 %v2777, %v2776
    %v2795 = vpack.c.b16 %v2779, %v2778
    %2812 = vmatprep.subr.bf16.mxu0 0
    %2813 = vmatpush1.bf16.msra.mxu0 %v2780
    %2814 = vmatprep.subr.bf16.mxu0 0
    %2815 = vmatpush1.bf16.msra.mxu0 %v2781
    %2816 = vmatprep.subr.bf16.mxu0 0
    %2817 = vmatpush1.bf16.msra.mxu0 %v2782
    %2818 = vmatprep.subr.bf16.mxu0 0
    %2819 = vmatpush1.bf16.msra.mxu0 %v2783
    %2820 = vmatprep.subr.bf16.mxu0 0
    %2821 = vmatpush1.bf16.msra.mxu0 %v2784
    %2822 = vmatprep.subr.bf16.mxu0 0
    %2823 = vmatpush1.bf16.msra.mxu0 %v2785
    %2824 = vmatprep.subr.bf16.mxu0 0
    %2825 = vmatpush1.bf16.msra.mxu0 %v2786
    %2826 = vmatprep.subr.bf16.mxu0 0
    %2827 = vmatpush1.bf16.msra.mxu0 %v2787
    %2828 = vmatprep.subr.bf16.mxu0 0
    %2829 = vmatpush1.bf16.msra.mxu0 %v2788
    %2830 = vmatprep.subr.bf16.mxu0 0
    %2831 = vmatpush1.bf16.msra.mxu0 %v2789
    %2832 = vmatprep.subr.bf16.mxu0 0
    %2833 = vmatpush1.bf16.msra.mxu0 %v2790
    %2834 = vmatprep.subr.bf16.mxu0 0
    %2835 = vmatpush1.bf16.msra.mxu0 %v2791
    %2836 = vmatprep.subr.bf16.mxu0 0
    %2837 = vmatpush1.bf16.msra.mxu0 %v2792
    %2838 = vmatprep.subr.bf16.mxu0 0
    %2839 = vmatpush1.bf16.msra.mxu0 %v2793
    %2840 = vmatprep.subr.bf16.mxu0 0
    %2841 = vmatpush1.bf16.msra.mxu0 %v2794
    %2842 = vmatprep.subr.bf16.mxu0 0
    %2843 = vmatpush1.bf16.msra.mxu0 %v2795
    %2844 = vmatprep.mubr.bf16.mxu0 %v2469
    %2845 = vmatmul.mubr.bf16.gmra.mrb[0].mxu0 %v2468
    %v2846 = vpop.f32.mrb[0].mxu0
    %v2847 = vadd.f32 0.0, %v2846
    %v2848 = vpop.f32.mrb[0].mxu0
    %v2849 = vpop.f32.mrb[0].mxu0
    %v2850 = vpop.f32.mrb[0].mxu0
    %2851 = vdwg.mxu0
    %v2852 = vadd.f32 %v2711, %v2847
    %v2853 = vmul.f32 %v2852, 10.0
    %v2854 = vmin.f32 %v2853, 20.0
    %vm2855 = vcmp.gt.f32.partialorder %v2853, 20.0
    %v2856 = vmul.f32 %v2854, 1.442695
    %v2857 = vpow.pop %v2856
    %v2858 = vadd.f32 %v2857, 1.0
    %v2859 = vlog2.pop %v2858
    %v2860 = vmul.f32 %v2859, 0.6931472
    %v2861 = vmul.f32 -0.5, %v2857
    %v2862 = vadd.f32 %v2861, 1.0
    %v2863 = vmul.f32 %v2862, %v2857
    %v2864 = vand.u32 2147483647, %v2857
    %vm2865 = vcmp.lt.f32.partialorder %v2864, 0.0004427343
    %v2866 = vsel %vm2865, %v2863, %v2860
    %v2867 = vmul.f32 %v2866, 0.1
    %v2868 = vsel %vm2855, %v2852, %v2867
    %vm2869 = vcmask 818176
    %2870 = vst.msk [vmem:[#allocation20] sm:$0xff] %vm2869, %v2868
    %v2871 = vpack.c.bf16 %v2868, %v2868
    %v2872 = vunpack.c.l.bf16 %v2871
    %v2873 = vsub.f32 %v2868, %v2872
    %v2874 = vpack.c.bf16 %v2873, %v2873
    %v2875 = vld [vmem:[#allocation11] sm:$0xf]
    %v2876 = vld [vmem:[#allocation11 + $0x4] sm:$0xf]
    %v2877 = vld [vmem:[#allocation11 + $0x8] sm:$0xf]
    %v2878 = vld [vmem:[#allocation11 + $0xc] sm:$0xf]
    %v2879 = vld [vmem:[#allocation11 + $0x10] sm:$0xf]
    %v2880 = vld [vmem:[#allocation11 + $0x14] sm:$0xf]
    %v2881 = vld [vmem:[#allocation11 + $0x18] sm:$0xf]
    %v2882 = vld [vmem:[#allocation11 + $0x1c] sm:$0xf]
    %v2883 = vld [vmem:[#allocation11 + $0x20] sm:$0xf]
    %v2884 = vld [vmem:[#allocation11 + $0x24] sm:$0xf]
    %v2885 = vld [vmem:[#allocation11 + $0x28] sm:$0xf]
    %v2886 = vld [vmem:[#allocation11 + $0x2c] sm:$0xf]
    %v2887 = vld [vmem:[#allocation11 + $0x30] sm:$0xf]
    %v2888 = vld [vmem:[#allocation11 + $0x34] sm:$0xf]
    %v2889 = vld [vmem:[#allocation11 + $0x38] sm:$0xf]
    %v2890 = vld [vmem:[#allocation11 + $0x3c] sm:$0xf]
    %v2891 = vld [vmem:[#allocation13] sm:$0xf]
    %v2892 = vld [vmem:[#allocation13 + $0x4] sm:$0xf]
    %v2893 = vld [vmem:[#allocation13 + $0x8] sm:$0xf]
    %v2894 = vld [vmem:[#allocation13 + $0xc] sm:$0xf]
    %v2895 = vld [vmem:[#allocation13 + $0x10] sm:$0xf]
    %v2896 = vld [vmem:[#allocation13 + $0x14] sm:$0xf]
    %v2897 = vld [vmem:[#allocation13 + $0x18] sm:$0xf]
    %v2898 = vld [vmem:[#allocation13 + $0x1c] sm:$0xf]
    %v2899 = vld [vmem:[#allocation13 + $0x20] sm:$0xf]
    %v2900 = vld [vmem:[#allocation13 + $0x24] sm:$0xf]
    %v2901 = vld [vmem:[#allocation13 + $0x28] sm:$0xf]
    %v2902 = vld [vmem:[#allocation13 + $0x2c] sm:$0xf]
    %v2903 = vld [vmem:[#allocation13 + $0x30] sm:$0xf]
    %v2904 = vld [vmem:[#allocation13 + $0x34] sm:$0xf]
    %v2905 = vld [vmem:[#allocation13 + $0x38] sm:$0xf]
    %v2906 = vld [vmem:[#allocation13 + $0x3c] sm:$0xf]
    %v2923 = vunpack.c.l.b16 %v2875
    %v2924 = vunpack.c.l.b16 %v2876
    %v2925 = vunpack.c.l.b16 %v2877
    %v2926 = vunpack.c.l.b16 %v2878
    %v2927 = vunpack.c.l.b16 %v2879
    %v2928 = vunpack.c.l.b16 %v2880
    %v2929 = vunpack.c.l.b16 %v2881
    %v2930 = vunpack.c.l.b16 %v2882
    %v2931 = vunpack.c.l.b16 %v2883
    %v2932 = vunpack.c.l.b16 %v2884
    %v2933 = vunpack.c.l.b16 %v2885
    %v2934 = vunpack.c.l.b16 %v2886
    %v2935 = vunpack.c.l.b16 %v2887
    %v2936 = vunpack.c.l.b16 %v2888
    %v2937 = vunpack.c.l.b16 %v2889
    %v2938 = vunpack.c.l.b16 %v2890
    %v2939 = vpack.c.b16 %v2924, %v2923
    %v2940 = vpack.c.b16 %v2926, %v2925
    %v2941 = vpack.c.b16 %v2928, %v2927
    %v2942 = vpack.c.b16 %v2930, %v2929
    %v2943 = vpack.c.b16 %v2932, %v2931
    %v2944 = vpack.c.b16 %v2934, %v2933
    %v2945 = vpack.c.b16 %v2936, %v2935
    %v2946 = vpack.c.b16 %v2938, %v2937
    %2955 = vmatprep.subr.bf16.mxu0 0
    %2956 = vmatpush1.bf16.msra.mxu0 %v2939
    %2957 = vmatprep.subr.bf16.mxu0 0
    %2958 = vmatpush1.bf16.msra.mxu0 %v2940
    %2959 = vmatprep.subr.bf16.mxu0 0
    %2960 = vmatpush1.bf16.msra.mxu0 %v2941
    %2961 = vmatprep.subr.bf16.mxu0 0
    %2962 = vmatpush1.bf16.msra.mxu0 %v2942
    %2963 = vmatprep.subr.bf16.mxu0 0
    %2964 = vmatpush1.bf16.msra.mxu0 %v2943
    %2965 = vmatprep.subr.bf16.mxu0 0
    %2966 = vmatpush1.bf16.msra.mxu0 %v2944
    %2967 = vmatprep.subr.bf16.mxu0 0
    %2968 = vmatpush1.bf16.msra.mxu0 %v2945
    %2969 = vmatprep.subr.bf16.mxu0 0
    %2970 = vmatpush1.bf16.msra.mxu0 %v2946
    %2971 = vmatprep.subr.bf16.mxu0 0
    %2972 = vmatpush1.bf16.msra.mxu0 0
    %2973 = vmatprep.subr.bf16.mxu0 0
    %2974 = vmatpush1.bf16.msra.mxu0 0
    %2975 = vmatprep.subr.bf16.mxu0 0
    %2976 = vmatpush1.bf16.msra.mxu0 0
    %2977 = vmatprep.subr.bf16.mxu0 0
    %2978 = vmatpush1.bf16.msra.mxu0 0
    %2979 = vmatprep.subr.bf16.mxu0 0
    %2980 = vmatpush1.bf16.msra.mxu0 0
    %2981 = vmatprep.subr.bf16.mxu0 0
    %2982 = vmatpush1.bf16.msra.mxu0 0
    %2983 = vmatprep.subr.bf16.mxu0 0
    %2984 = vmatpush1.bf16.msra.mxu0 0
    %2985 = vmatprep.subr.bf16.mxu0 0
    %2986 = vmatpush1.bf16.msra.mxu0 0
    %2987 = vmatprep.mubr.bf16.mxu0 0
    %2988 = vmatmul.mubr.bf16.gmra.mrb[0].mxu0 %v2874
    %v2989 = vpop.f32.mrb[0].mxu0
    %v2990 = vadd.f32 0.0, %v2989
    %v2991 = vpop.f32.mrb[0].mxu0
    %v2992 = vpop.f32.mrb[0].mxu0
    %v2993 = vpop.f32.mrb[0].mxu0
    %2994 = vdwg.mxu0
    %2995 = vmatprep.subr.bf16.mxu0 0
    %2996 = vmatpush1.bf16.msra.mxu0 %v2939
    %2997 = vmatprep.subr.bf16.mxu0 0
    %2998 = vmatpush1.bf16.msra.mxu0 %v2940
    %2999 = vmatprep.subr.bf16.mxu0 0
    %3000 = vmatpush1.bf16.msra.mxu0 %v2941
    %3001 = vmatprep.subr.bf16.mxu0 0
    %3002 = vmatpush1.bf16.msra.mxu0 %v2942
    %3003 = vmatprep.subr.bf16.mxu0 0
    %3004 = vmatpush1.bf16.msra.mxu0 %v2943
    %3005 = vmatprep.subr.bf16.mxu0 0
    %3006 = vmatpush1.bf16.msra.mxu0 %v2944
    %3007 = vmatprep.subr.bf16.mxu0 0
    %3008 = vmatpush1.bf16.msra.mxu0 %v2945
    %3009 = vmatprep.subr.bf16.mxu0 0
    %3010 = vmatpush1.bf16.msra.mxu0 %v2946
    %3011 = vmatprep.subr.bf16.mxu0 0
    %3012 = vmatpush1.bf16.msra.mxu0 0
    %3013 = vmatprep.subr.bf16.mxu0 0
    %3014 = vmatpush1.bf16.msra.mxu0 0
    %3015 = vmatprep.subr.bf16.mxu0 0
    %3016 = vmatpush1.bf16.msra.mxu0 0
    %3017 = vmatprep.subr.bf16.mxu0 0
    %3018 = vmatpush1.bf16.msra.mxu0 0
    %3019 = vmatprep.subr.bf16.mxu0 0
    %3020 = vmatpush1.bf16.msra.mxu0 0
    %3021 = vmatprep.subr.bf16.mxu0 0
    %3022 = vmatpush1.bf16.msra.mxu0 0
    %3023 = vmatprep.subr.bf16.mxu0 0
    %3024 = vmatpush1.bf16.msra.mxu0 0
    %3025 = vmatprep.subr.bf16.mxu0 0
    %3026 = vmatpush1.bf16.msra.mxu0 0
    %3027 = vmatprep.mubr.bf16.mxu0 0
    %3028 = vmatmul.mubr.bf16.gmra.mrb[0].mxu0 %v2871
    %v3029 = vpop.f32.mrb[0].mxu0
    %v3030 = vadd.f32 %v2990, %v3029
    %v3031 = vpop.f32.mrb[0].mxu0
    %v3032 = vpop.f32.mrb[0].mxu0
    %v3033 = vpop.f32.mrb[0].mxu0
    %3034 = vdwg.mxu0
    %v3051 = vunpack.c.l.b16 %v2891
    %v3052 = vunpack.c.l.b16 %v2892
    %v3053 = vunpack.c.l.b16 %v2893
    %v3054 = vunpack.c.l.b16 %v2894
    %v3055 = vunpack.c.l.b16 %v2895
    %v3056 = vunpack.c.l.b16 %v2896
    %v3057 = vunpack.c.l.b16 %v2897
    %v3058 = vunpack.c.l.b16 %v2898
    %v3059 = vunpack.c.l.b16 %v2899
    %v3060 = vunpack.c.l.b16 %v2900
    %v3061 = vunpack.c.l.b16 %v2901
    %v3062 = vunpack.c.l.b16 %v2902
    %v3063 = vunpack.c.l.b16 %v2903
    %v3064 = vunpack.c.l.b16 %v2904
    %v3065 = vunpack.c.l.b16 %v2905
    %v3066 = vunpack.c.l.b16 %v2906
    %v3067 = vpack.c.b16 %v3052, %v3051
    %v3068 = vpack.c.b16 %v3054, %v3053
    %v3069 = vpack.c.b16 %v3056, %v3055
    %v3070 = vpack.c.b16 %v3058, %v3057
    %v3071 = vpack.c.b16 %v3060, %v3059
    %v3072 = vpack.c.b16 %v3062, %v3061
    %v3073 = vpack.c.b16 %v3064, %v3063
    %v3074 = vpack.c.b16 %v3066, %v3065
    %3083 = vmatprep.subr.bf16.mxu0 0
    %3084 = vmatpush1.bf16.msra.mxu0 %v3067
    %3085 = vmatprep.subr.bf16.mxu0 0
    %3086 = vmatpush1.bf16.msra.mxu0 %v3068
    %3087 = vmatprep.subr.bf16.mxu0 0
    %3088 = vmatpush1.bf16.msra.mxu0 %v3069
    %3089 = vmatprep.subr.bf16.mxu0 0
    %3090 = vmatpush1.bf16.msra.mxu0 %v3070
    %3091 = vmatprep.subr.bf16.mxu0 0
    %3092 = vmatpush1.bf16.msra.mxu0 %v3071
    %3093 = vmatprep.subr.bf16.mxu0 0
    %3094 = vmatpush1.bf16.msra.mxu0 %v3072
    %3095 = vmatprep.subr.bf16.mxu0 0
    %3096 = vmatpush1.bf16.msra.mxu0 %v3073
    %3097 = vmatprep.subr.bf16.mxu0 0
    %3098 = vmatpush1.bf16.msra.mxu0 %v3074
    %3099 = vmatprep.subr.bf16.mxu0 0
    %3100 = vmatpush1.bf16.msra.mxu0 0
    %3101 = vmatprep.subr.bf16.mxu0 0
    %3102 = vmatpush1.bf16.msra.mxu0 0
    %3103 = vmatprep.subr.bf16.mxu0 0
    %3104 = vmatpush1.bf16.msra.mxu0 0
    %3105 = vmatprep.subr.bf16.mxu0 0
    %3106 = vmatpush1.bf16.msra.mxu0 0
    %3107 = vmatprep.subr.bf16.mxu0 0
    %3108 = vmatpush1.bf16.msra.mxu0 0
    %3109 = vmatprep.subr.bf16.mxu0 0
    %3110 = vmatpush1.bf16.msra.mxu0 0
    %3111 = vmatprep.subr.bf16.mxu0 0
    %3112 = vmatpush1.bf16.msra.mxu0 0
    %3113 = vmatprep.subr.bf16.mxu0 0
    %3114 = vmatpush1.bf16.msra.mxu0 0
    %3115 = vmatprep.mubr.bf16.mxu0 0
    %3116 = vmatmul.mubr.bf16.gmra.mrb[0].mxu0 %v2871
    %v3117 = vpop.f32.mrb[0].mxu0
    %v3118 = vadd.f32 0.0, %v3117
    %v3119 = vpop.f32.mrb[0].mxu0
    %v3120 = vpop.f32.mrb[0].mxu0
    %v3121 = vpop.f32.mrb[0].mxu0
    %3122 = vdwg.mxu0
    %v3123 = vadd.f32 %v3030, %v3118
    %v3124 = vmul.f32 %v3123, 10.0
    %v3125 = vmin.f32 %v3124, 20.0
    %vm3126 = vcmp.gt.f32.partialorder %v3124, 20.0
    %v3127 = vmul.f32 %v3125, 1.442695
    %v3128 = vpow.pop %v3127
    %v3129 = vadd.f32 %v3128, 1.0
    %v3130 = vlog2.pop %v3129
    %v3131 = vmul.f32 %v3130, 0.6931472
    %v3132 = vmul.f32 -0.5, %v3128
    %v3133 = vadd.f32 %v3132, 1.0
    %v3134 = vmul.f32 %v3133, %v3128
    %v3135 = vand.u32 2147483647, %v3128
    %vm3136 = vcmp.lt.f32.partialorder %v3135, 0.0004427343
    %v3137 = vsel %vm3136, %v3134, %v3131
    %v3138 = vmul.f32 %v3137, 0.1
    %v3139 = vsel %vm3126, %v3123, %v3138
    %vm3140 = vcmask 572416
    %3141 = vst.msk [vmem:[#allocation21] sm:$0xff] %vm3140, %v3139
    %v3142 = vpack.c.bf16 %v3139, %v3139
    %v3143 = vunpack.c.l.bf16 %v3142
    %v3144 = vsub.f32 %v3139, %v3143
    %v3145 = vpack.c.bf16 %v3144, %v3144
    %v3146 = vld [vmem:[#allocation14] sm:$0xf]
    %v3147 = vld [vmem:[#allocation14 + $0x4] sm:$0xf]
    %v3148 = vld [vmem:[#allocation14 + $0x8] sm:$0xf]
    %v3149 = vld [vmem:[#allocation14 + $0xc] sm:$0xf]
    %v3150 = vld [vmem:[#allocation14 + $0x10] sm:$0xf]
    %v3151 = vld [vmem:[#allocation14 + $0x14] sm:$0xf]
    %v3152 = vld [vmem:[#allocation14 + $0x18] sm:$0xf]
    %v3153 = vld [vmem:[#allocation14 + $0x1c] sm:$0xf]
    %v3154 = vld [vmem:[#allocation14 + $0x20] sm:$0xf]
    %v3155 = vld [vmem:[#allocation14 + $0x24] sm:$0xf]
    %v3156 = vld [vmem:[#allocation14 + $0x28] sm:$0xf]
    %v3157 = vld [vmem:[#allocation14 + $0x2c] sm:$0xf]
    %v3158 = vld [vmem:[#allocation14 + $0x30] sm:$0xf]
    %v3159 = vld [vmem:[#allocation14 + $0x34] sm:$0xf]
    %v3160 = vld [vmem:[#allocation14 + $0x38] sm:$0xf]
    %v3161 = vld [vmem:[#allocation14 + $0x3c] sm:$0xf]
    %v3162 = vld [vmem:[#allocation16] sm:$0xf]
    %v3163 = vld [vmem:[#allocation16 + $0x4] sm:$0xf]
    %v3164 = vld [vmem:[#allocation16 + $0x8] sm:$0xf]
    %v3165 = vld [vmem:[#allocation16 + $0xc] sm:$0xf]
    %v3166 = vld [vmem:[#allocation16 + $0x10] sm:$0xf]
    %v3167 = vld [vmem:[#allocation16 + $0x14] sm:$0xf]
    %v3168 = vld [vmem:[#allocation16 + $0x18] sm:$0xf]
    %v3169 = vld [vmem:[#allocation16 + $0x1c] sm:$0xf]
    %v3170 = vld [vmem:[#allocation16 + $0x20] sm:$0xf]
    %v3171 = vld [vmem:[#allocation16 + $0x24] sm:$0xf]
    %v3172 = vld [vmem:[#allocation16 + $0x28] sm:$0xf]
    %v3173 = vld [vmem:[#allocation16 + $0x2c] sm:$0xf]
    %v3174 = vld [vmem:[#allocation16 + $0x30] sm:$0xf]
    %v3175 = vld [vmem:[#allocation16 + $0x34] sm:$0xf]
    %v3176 = vld [vmem:[#allocation16 + $0x38] sm:$0xf]
    %v3177 = vld [vmem:[#allocation16 + $0x3c] sm:$0xf]
    %v3194 = vunpack.c.l.b16 %v3146
    %v3195 = vunpack.c.l.b16 %v3147
    %v3196 = vunpack.c.l.b16 %v3148
    %v3197 = vunpack.c.l.b16 %v3149
    %v3198 = vunpack.c.l.b16 %v3150
    %v3199 = vunpack.c.l.b16 %v3151
    %v3200 = vunpack.c.l.b16 %v3152
    %v3201 = vunpack.c.l.b16 %v3153
    %v3202 = vunpack.c.l.b16 %v3154
    %v3203 = vunpack.c.l.b16 %v3155
    %v3204 = vunpack.c.l.b16 %v3156
    %v3205 = vunpack.c.l.b16 %v3157
    %v3206 = vunpack.c.l.b16 %v3158
    %v3207 = vunpack.c.l.b16 %v3159
    %v3208 = vunpack.c.l.b16 %v3160
    %v3209 = vunpack.c.l.b16 %v3161
    %v3210 = vpack.c.b16 %v3195, %v3194
    %v3211 = vpack.c.b16 %v3197, %v3196
    %v3212 = vpack.c.b16 %v3199, %v3198
    %v3213 = vpack.c.b16 %v3201, %v3200
    %v3214 = vpack.c.b16 %v3203, %v3202
    %v3215 = vpack.c.b16 %v3205, %v3204
    %v3216 = vpack.c.b16 %v3207, %v3206
    %v3217 = vpack.c.b16 %v3209, %v3208
    %3226 = vmatprep.subr.bf16.mxu0 0
    %3227 = vmatpush1.bf16.msra.mxu0 %v3210
    %3228 = vmatprep.subr.bf16.mxu0 0
    %3229 = vmatpush1.bf16.msra.mxu0 %v3211
    %3230 = vmatprep.subr.bf16.mxu0 0
    %3231 = vmatpush1.bf16.msra.mxu0 %v3212
    %3232 = vmatprep.subr.bf16.mxu0 0
    %3233 = vmatpush1.bf16.msra.mxu0 %v3213
    %3234 = vmatprep.subr.bf16.mxu0 0
    %3235 = vmatpush1.bf16.msra.mxu0 %v3214
    %3236 = vmatprep.subr.bf16.mxu0 0
    %3237 = vmatpush1.bf16.msra.mxu0 %v3215
    %3238 = vmatprep.subr.bf16.mxu0 0
    %3239 = vmatpush1.bf16.msra.mxu0 %v3216
    %3240 = vmatprep.subr.bf16.mxu0 0
    %3241 = vmatpush1.bf16.msra.mxu0 %v3217
    %3242 = vmatprep.subr.bf16.mxu0 0
    %3243 = vmatpush1.bf16.msra.mxu0 0
    %3244 = vmatprep.subr.bf16.mxu0 0
    %3245 = vmatpush1.bf16.msra.mxu0 0
    %3246 = vmatprep.subr.bf16.mxu0 0
    %3247 = vmatpush1.bf16.msra.mxu0 0
    %3248 = vmatprep.subr.bf16.mxu0 0
    %3249 = vmatpush1.bf16.msra.mxu0 0
    %3250 = vmatprep.subr.bf16.mxu0 0
    %3251 = vmatpush1.bf16.msra.mxu0 0
    %3252 = vmatprep.subr.bf16.mxu0 0
    %3253 = vmatpush1.bf16.msra.mxu0 0
    %3254 = vmatprep.subr.bf16.mxu0 0
    %3255 = vmatpush1.bf16.msra.mxu0 0
    %3256 = vmatprep.subr.bf16.mxu0 0
    %3257 = vmatpush1.bf16.msra.mxu0 0
    %3258 = vmatprep.mubr.bf16.mxu0 0
    %3259 = vmatmul.mubr.bf16.gmra.mrb[0].mxu0 %v3145
    %v3260 = vpop.f32.mrb[0].mxu0
    %v3261 = vadd.f32 0.0, %v3260
    %v3262 = vpop.f32.mrb[0].mxu0
    %v3263 = vpop.f32.mrb[0].mxu0
    %v3264 = vpop.f32.mrb[0].mxu0
    %3265 = vdwg.mxu0
    %3266 = vmatprep.subr.bf16.mxu0 0
    %3267 = vmatpush1.bf16.msra.mxu0 %v3210
    %3268 = vmatprep.subr.bf16.mxu0 0
    %3269 = vmatpush1.bf16.msra.mxu0 %v3211
    %3270 = vmatprep.subr.bf16.mxu0 0
    %3271 = vmatpush1.bf16.msra.mxu0 %v3212
    %3272 = vmatprep.subr.bf16.mxu0 0
    %3273 = vmatpush1.bf16.msra.mxu0 %v3213
    %3274 = vmatprep.subr.bf16.mxu0 0
    %3275 = vmatpush1.bf16.msra.mxu0 %v3214
    %3276 = vmatprep.subr.bf16.mxu0 0
    %3277 = vmatpush1.bf16.msra.mxu0 %v3215
    %3278 = vmatprep.subr.bf16.mxu0 0
    %3279 = vmatpush1.bf16.msra.mxu0 %v3216
    %3280 = vmatprep.subr.bf16.mxu0 0
    %3281 = vmatpush1.bf16.msra.mxu0 %v3217
    %3282 = vmatprep.subr.bf16.mxu0 0
    %3283 = vmatpush1.bf16.msra.mxu0 0
    %3284 = vmatprep.subr.bf16.mxu0 0
    %3285 = vmatpush1.bf16.msra.mxu0 0
    %3286 = vmatprep.subr.bf16.mxu0 0
    %3287 = vmatpush1.bf16.msra.mxu0 0
    %3288 = vmatprep.subr.bf16.mxu0 0
    %3289 = vmatpush1.bf16.msra.mxu0 0
    %3290 = vmatprep.subr.bf16.mxu0 0
    %3291 = vmatpush1.bf16.msra.mxu0 0
    %3292 = vmatprep.subr.bf16.mxu0 0
    %3293 = vmatpush1.bf16.msra.mxu0 0
    %3294 = vmatprep.subr.bf16.mxu0 0
    %3295 = vmatpush1.bf16.msra.mxu0 0
    %3296 = vmatprep.subr.bf16.mxu0 0
    %3297 = vmatpush1.bf16.msra.mxu0 0
    %3298 = vmatprep.mubr.bf16.mxu0 0
    %3299 = vmatmul.mubr.bf16.gmra.mrb[0].mxu0 %v3142
    %v3300 = vpop.f32.mrb[0].mxu0
    %v3301 = vadd.f32 %v3261, %v3300
    %v3302 = vpop.f32.mrb[0].mxu0
    %v3303 = vpop.f32.mrb[0].mxu0
    %v3304 = vpop.f32.mrb[0].mxu0
    %3305 = vdwg.mxu0
    %v3322 = vunpack.c.l.b16 %v3162
    %v3323 = vunpack.c.l.b16 %v3163
    %v3324 = vunpack.c.l.b16 %v3164
    %v3325 = vunpack.c.l.b16 %v3165
    %v3326 = vunpack.c.l.b16 %v3166
    %v3327 = vunpack.c.l.b16 %v3167
    %v3328 = vunpack.c.l.b16 %v3168
    %v3329 = vunpack.c.l.b16 %v3169
    %v3330 = vunpack.c.l.b16 %v3170
    %v3331 = vunpack.c.l.b16 %v3171
    %v3332 = vunpack.c.l.b16 %v3172
    %v3333 = vunpack.c.l.b16 %v3173
    %v3334 = vunpack.c.l.b16 %v3174
    %v3335 = vunpack.c.l.b16 %v3175
    %v3336 = vunpack.c.l.b16 %v3176
    %v3337 = vunpack.c.l.b16 %v3177
    %v3338 = vpack.c.b16 %v3323, %v3322
    %v3339 = vpack.c.b16 %v3325, %v3324
    %v3340 = vpack.c.b16 %v3327, %v3326
    %v3341 = vpack.c.b16 %v3329, %v3328
    %v3342 = vpack.c.b16 %v3331, %v3330
    %v3343 = vpack.c.b16 %v3333, %v3332
    %v3344 = vpack.c.b16 %v3335, %v3334
    %v3345 = vpack.c.b16 %v3337, %v3336
    %3354 = vmatprep.subr.bf16.mxu0 0
    %3355 = vmatpush1.bf16.msra.mxu0 %v3338
    %3356 = vmatprep.subr.bf16.mxu0 0
    %3357 = vmatpush1.bf16.msra.mxu0 %v3339
    %3358 = vmatprep.subr.bf16.mxu0 0
    %3359 = vmatpush1.bf16.msra.mxu0 %v3340
    %3360 = vmatprep.subr.bf16.mxu0 0
    %3361 = vmatpush1.bf16.msra.mxu0 %v3341
    %3362 = vmatprep.subr.bf16.mxu0 0
    %3363 = vmatpush1.bf16.msra.mxu0 %v3342
    %3364 = vmatprep.subr.bf16.mxu0 0
    %3365 = vmatpush1.bf16.msra.mxu0 %v3343
    %3366 = vmatprep.subr.bf16.mxu0 0
    %3367 = vmatpush1.bf16.msra.mxu0 %v3344
    %3368 = vmatprep.subr.bf16.mxu0 0
    %3369 = vmatpush1.bf16.msra.mxu0 %v3345
    %3370 = vmatprep.subr.bf16.mxu0 0
    %3371 = vmatpush1.bf16.msra.mxu0 0
    %3372 = vmatprep.subr.bf16.mxu0 0
    %3373 = vmatpush1.bf16.msra.mxu0 0
    %3374 = vmatprep.subr.bf16.mxu0 0
    %3375 = vmatpush1.bf16.msra.mxu0 0
    %3376 = vmatprep.subr.bf16.mxu0 0
    %3377 = vmatpush1.bf16.msra.mxu0 0
    %3378 = vmatprep.subr.bf16.mxu0 0
    %3379 = vmatpush1.bf16.msra.mxu0 0
    %3380 = vmatprep.subr.bf16.mxu0 0
    %3381 = vmatpush1.bf16.msra.mxu0 0
    %3382 = vmatprep.subr.bf16.mxu0 0
    %3383 = vmatpush1.bf16.msra.mxu0 0
    %3384 = vmatprep.subr.bf16.mxu0 0
    %3385 = vmatpush1.bf16.msra.mxu0 0
    %3386 = vmatprep.mubr.bf16.mxu0 0
    %3387 = vmatmul.mubr.bf16.gmra.mrb[0].mxu0 %v3142
    %v3388 = vpop.f32.mrb[0].mxu0
    %v3389 = vadd.f32 0.0, %v3388
    %v3390 = vpop.f32.mrb[0].mxu0
    %v3391 = vpop.f32.mrb[0].mxu0
    %v3392 = vpop.f32.mrb[0].mxu0
    %3393 = vdwg.mxu0
    %v3394 = vadd.f32 %v3301, %v3389
    %vm3395 = vcmask 384000
    %3396 = vst.msk [vmem:[#allocation23] sm:$0xff] %vm3395, %v3394
    // Predicated region
    $region82: #{rosenbaum_forward.1} parent=1 // pred_check
      _
    $region83: #{rosenbaum_forward.1} parent=1 // pred_check_branch
      %3398 = sbr.rel (0) target = $region85
    $region84: #{rosenbaum_forward.1} parent=1 // pred_region
      %s3400 = ssub.s32 256, 256
      %3401 = vsyncadd [#allocation4], %s3400
      %s3403 = sshll.u32 [#allocation17], 4
      %s3404 = int_to_ptr.vmem [resolvable:$true] %s3403
      %3406 = dma.vmem_to_hbm [thread:$0]  %s3404, 256, %s11, [#allocation4]
    $region85: #{rosenbaum_forward.1} parent=1 // pred_fallthru
      _
    // Predicated region
    $region86: #{rosenbaum_forward.1} parent=1 // pred_check
      _
    $region87: #{rosenbaum_forward.1} parent=1 // pred_check_branch
      %3408 = sbr.rel (0) target = $region89
    $region88: #{rosenbaum_forward.1} parent=1 // pred_region
      %s3410 = ssub.s32 256, 256
      %3411 = vsyncadd [#allocation19], %s3410
      %s3413 = sshll.u32 [#allocation18], 4
      %s3414 = int_to_ptr.vmem [resolvable:$true] %s3413
      %3416 = dma.vmem_to_hbm [thread:$0]  %s3414, 256, %s12, [#allocation19]
    $region89: #{rosenbaum_forward.1} parent=1 // pred_fallthru
      _
    // Predicated region
    $region90: #{rosenbaum_forward.1} parent=1 // pred_check
      _
    $region91: #{rosenbaum_forward.1} parent=1 // pred_check_branch
      %3418 = sbr.rel (0) target = $region93
    $region92: #{rosenbaum_forward.1} parent=1 // pred_region
      %s3420 = ssub.s32 128, 128
      %3421 = vsyncadd [#allocation19], %s3420
      %s3423 = sshll.u32 [#allocation20], 4
      %s3424 = int_to_ptr.vmem [resolvable:$true] %s3423
      %3426 = dma.vmem_to_hbm [thread:$0]  %s3424, 128, %s13, [#allocation19]
    $region93: #{rosenbaum_forward.1} parent=1 // pred_fallthru
      _
    // Predicated region
    $region94: #{rosenbaum_forward.1} parent=1 // pred_check
      _
    $region95: #{rosenbaum_forward.1} parent=1 // pred_check_branch
      %3428 = sbr.rel (0) target = $region97
    $region96: #{rosenbaum_forward.1} parent=1 // pred_region
      %s3430 = ssub.s32 128, 128
      %3431 = vsyncadd [#allocation22], %s3430
      %s3433 = sshll.u32 [#allocation21], 4
      %s3434 = int_to_ptr.vmem [resolvable:$true] %s3433
      %3436 = dma.vmem_to_hbm [thread:$0]  %s3434, 128, %s14, [#allocation22]
    $region97: #{rosenbaum_forward.1} parent=1 // pred_fallthru
      _
    // Predicated region
    $region98: #{rosenbaum_forward.1} parent=1 // pred_check
      _
    $region99: #{rosenbaum_forward.1} parent=1 // pred_check_branch
      %3438 = sbr.rel (0) target = $region101
    $region100: #{rosenbaum_forward.1} parent=1 // pred_region
      %s3440 = ssub.s32 128, 128
      %3441 = vsyncadd [#allocation22], %s3440
      %s3443 = sshll.u32 [#allocation23], 4
      %s3444 = int_to_ptr.vmem [resolvable:$true] %s3443
      %3446 = dma.vmem_to_hbm [thread:$0]  %s3444, 128, %s15, [#allocation22]
    $region101: #{rosenbaum_forward.1} parent=1 // pred_fallthru
      _
    // Predicated region
    $region102: #{rosenbaum_forward.1} parent=1 // pred_check
      _
    $region103: #{rosenbaum_forward.1} parent=1 // pred_check_branch
      %3448 = sbr.rel (0) target = $region105
    $region104: #{rosenbaum_forward.1} parent=1 // pred_region
      %3449 = dma.done [#allocation4], 256
    $region105: #{rosenbaum_forward.1} parent=1 // pred_fallthru
      _
    // Predicated region
    $region106: #{rosenbaum_forward.1} parent=1 // pred_check
      _
    $region107: #{rosenbaum_forward.1} parent=1 // pred_check_branch
      %3451 = sbr.rel (0) target = $region109
    $region108: #{rosenbaum_forward.1} parent=1 // pred_region
      %3452 = dma.done [#allocation19], 256
    $region109: #{rosenbaum_forward.1} parent=1 // pred_fallthru
      _
    // Predicated region
    $region110: #{rosenbaum_forward.1} parent=1 // pred_check
      _
    $region111: #{rosenbaum_forward.1} parent=1 // pred_check_branch
      %3454 = sbr.rel (0) target = $region113
    $region112: #{rosenbaum_forward.1} parent=1 // pred_region
      %3455 = dma.done [#allocation19], 128
    $region113: #{rosenbaum_forward.1} parent=1 // pred_fallthru
      _
    // Predicated region
    $region114: #{rosenbaum_forward.1} parent=1 // pred_check
      _
    $region115: #{rosenbaum_forward.1} parent=1 // pred_check_branch
      %3457 = sbr.rel (0) target = $region117
    $region116: #{rosenbaum_forward.1} parent=1 // pred_region
      %3458 = dma.done [#allocation22], 128
    $region117: #{rosenbaum_forward.1} parent=1 // pred_fallthru
      _
    // Predicated region
    $region118: #{rosenbaum_forward.1} parent=1 // pred_check
      _
    $region119: #{rosenbaum_forward.1} parent=1 // pred_check_branch
      %3460 = sbr.rel (0) target = $region121
    $region120: #{rosenbaum_forward.1} parent=1 // pred_region
      %3461 = dma.done [#allocation22], 128
    $region121: #{rosenbaum_forward.1} parent=1 // pred_fallthru
      _
    %3462 = vsyncpa [#allocation3], 1
    %3463 = vsyncpa [#allocation6], 1
    %3464 = vsyncpa [#allocation9], 1
    %3465 = vsyncpa [#allocation12], 1
    %3466 = vsyncpa [#allocation15], 1
    %3467 = vsyncpa [#allocation4], 1
    %3468 = vsyncpa [#allocation19], 1
    %3469 = vsyncpa [#allocation22], 1

</llo_original>
